<compile_context>
chip_gen: v7x
topology: tpu7x:2x2x1
jax: 0.10.0
libtpu: 0.0.40
codegen_flags: <defaults>
</compile_context>

<pallas_src>
import functools

import jax
import jax.numpy as jnp
from jax import lax
from jax.experimental import pallas as pl
from jax.experimental.pallas import tpu as pltpu


# ----------------------------------------------------------------------------
# Tiling helpers.
# ----------------------------------------------------------------------------
def _pick_divisor(n, candidates):
    for t in candidates:
        if n % t == 0:
            return t
    return n  # fall back to the full dimension (always a legal block)


def _pick_tile_m(m):
    # Prefer >= 2 M blocks (megacore / v7x) with bf16-friendly multiples of 16.
    for t in (512, 256, 128, 64, 32, 16):
        if m % t == 0 and m // t >= 2:
            return t
    for t in (512, 256, 128, 64, 32, 16):
        if m % t == 0:
            return t
    return m  # tiny M: use the full dimension as one block


def _cparams(*sems):
    return pltpu.CompilerParams(dimension_semantics=sems,
                                vmem_limit_bytes=32 * 1024 * 1024)


# ----------------------------------------------------------------------------
# Fused GEMM: Y = act(X @ W + b), bf16 operands, f32 accumulation.
# nk == 1  -> single-shot (no scratch, no zero-init).
# nk  > 1  -> f32 VMEM scratch accumulator, '=' at k==0, '+=' afterwards.
# Output is written once, in the consumer's dtype (bf16 for conv layers).
# ----------------------------------------------------------------------------
def _mm_kernel(x_ref, w_ref, b_ref, o_ref, *acc, nk, act, alpha):
    part = jnp.dot(x_ref[...], w_ref[...], preferred_element_type=jnp.float32)
    if nk == 1:
        y = part + b_ref[...]
        if act == "leaky":
            y = jnp.where(y > 0, y, alpha * y)
        o_ref[...] = y.astype(o_ref.dtype)
        return

    acc_ref, = acc
    k = pl.program_id(2)

    @pl.when(k == 0)
    def _():
        acc_ref[...] = part

    @pl.when(k > 0)
    def _():
        acc_ref[...] += part

    @pl.when(k == nk - 1)
    def _():
        y = acc_ref[...] + b_ref[...]
        if act == "leaky":
            y = jnp.where(y > 0, y, alpha * y)
        o_ref[...] = y.astype(o_ref.dtype)


def matmul_bias_act(x, w, bias_row, *, act="leaky", alpha=0.2,
                    out_dtype=jnp.bfloat16):
    """x: (M, K) bf16, w: (K, N) bf16, bias_row: (1, N) f32 -> (M, N)."""
    M, K = x.shape
    K2, N = w.shape
    assert K == K2
    tm = _pick_tile_m(M)
    tk = _pick_divisor(K, (1024, 512, 256, 128))
    tn = _pick_divisor(N, (512, 256, 128))
    nm, nn, nk = M // tm, N // tn, K // tk
    scratch = [] if nk == 1 else [pltpu.VMEM((tm, tn), jnp.float32)]

    return pl.pallas_call(
        functools.partial(_mm_kernel, nk=nk, act=act, alpha=alpha),
        out_shape=jax.ShapeDtypeStruct((M, N), out_dtype),
        grid_spec=pltpu.PrefetchScalarGridSpec(
            num_scalar_prefetch=0,
            grid=(nm, nn, nk),
            in_specs=[
                pl.BlockSpec((tm, tk), lambda i, j, k: (i, k)),   # X tile
                pl.BlockSpec((tk, tn), lambda i, j, k: (k, j)),   # W tile
                pl.BlockSpec((1, tn), lambda i, j, k: (0, j)),    # bias row
            ],
            out_specs=pl.BlockSpec((tm, tn), lambda i, j, k: (i, j)),
            scratch_shapes=scratch,
        ),
        compiler_params=_cparams("parallel", "parallel", "arbitrary"),
    )(x.astype(jnp.bfloat16), w, bias_row)


# ----------------------------------------------------------------------------
# conv3 GEMM with fused BatchNorm statistics: emits bf16 Y plus per-channel
# sum / sum-of-squares accumulated across M tiles in the epilogue.
# (Single N block: Cout == 128, so the stat blocks stay resident all along.)
# ----------------------------------------------------------------------------
def _mm_stats_kernel(x_ref, w_ref, b_ref, o_ref, sum_ref, sq_ref, *acc, nk):
    i = pl.program_id(0)
    k = pl.program_id(1)
    part = jnp.dot(x_ref[...], w_ref[...], preferred_element_type=jnp.float32)
    if nk > 1:
        acc_ref, = acc

        @pl.when(k == 0)
        def _():
            acc_ref[...] = part

        @pl.when(k > 0)
        def _():
            acc_ref[...] += part

    @pl.when(k == nk - 1)
    def _():
        y = (acc[0][...] if nk > 1 else part) + b_ref[...]
        o_ref[...] = y.astype(o_ref.dtype)
        s = jnp.sum(y, axis=0, keepdims=True)
        q = jnp.sum(y * y, axis=0, keepdims=True)

        @pl.when(i == 0)
        def _():
            sum_ref[...] = s
            sq_ref[...] = q

        @pl.when(i > 0)
        def _():
            sum_ref[...] = sum_ref[...] + s
            sq_ref[...] = sq_ref[...] + q


def conv_gemm_bn_stats(x, w, bias_row):
    M, K = x.shape
    Cout = w.shape[1]
    assert Cout == 128  # discriminator conv3
    tm = _pick_tile_m(M)
    tk = _pick_divisor(K, (1024, 512, 256, 128))
    nm, nk = M // tm, K // tk
    scratch = [] if nk == 1 else [pltpu.VMEM((tm, Cout), jnp.float32)]

    return pl.pallas_call(
        functools.partial(_mm_stats_kernel, nk=nk),
        out_shape=(jax.ShapeDtypeStruct((M, Cout), jnp.bfloat16),
                   jax.ShapeDtypeStruct((1, Cout), jnp.float32),
                   jax.ShapeDtypeStruct((1, Cout), jnp.float32)),
        grid_spec=pltpu.PrefetchScalarGridSpec(
            num_scalar_prefetch=0,
            grid=(nm, nk),
            in_specs=[
                pl.BlockSpec((tm, tk), lambda i, k: (i, k)),
                pl.BlockSpec((tk, Cout), lambda i, k: (k, 0)),
                pl.BlockSpec((1, Cout), lambda i, k: (0, 0)),
            ],
            out_specs=(pl.BlockSpec((tm, Cout), lambda i, k: (i, 0)),
                       pl.BlockSpec((1, Cout), lambda i, k: (0, 0)),
                       pl.BlockSpec((1, Cout), lambda i, k: (0, 0))),
            scratch_shapes=scratch,
        ),
        # i must be "arbitrary": stat blocks are accumulated across M tiles.
        compiler_params=_cparams("arbitrary", "arbitrary"),
    )(x, w, bias_row)


# ----------------------------------------------------------------------------
# Fused BatchNorm normalize (training-mode batch stats) + LeakyReLU(0.2).
# Scale/shift are derived in-kernel from the fused sums (per-tile, trivial).
# ----------------------------------------------------------------------------
def _bn_affine_kernel(y_ref, sum_ref, sq_ref, g_ref, be_ref, o_ref,
                      *, count, eps, alpha):
    inv_n = 1.0 / count
    mean = sum_ref[...] * inv_n
    var = sq_ref[...] * inv_n - mean * mean          # biased, like PyTorch norm
    scale = g_ref[...] * lax.rsqrt(var + eps)
    shift = be_ref[...] - mean * scale
    z = y_ref[...].astype(jnp.float32) * scale + shift
    o_ref[...] = jnp.where(z > 0, z, alpha * z).astype(o_ref.dtype)


def bn_affine_leaky(y, ssum, ssq, gamma_row, beta_row, *, eps=1e-5, alpha=0.2):
    M, C = y.shape
    tm = _pick_tile_m(M)
    row_spec = lambda: pl.BlockSpec((1, C), lambda i: (0, 0))
    return pl.pallas_call(
        functools.partial(_bn_affine_kernel, count=M, eps=eps, alpha=alpha),
        out_shape=jax.ShapeDtypeStruct((M, C), jnp.bfloat16),
        grid_spec=pltpu.PrefetchScalarGridSpec(
            num_scalar_prefetch=0,
            grid=(M // tm,),
            in_specs=[pl.BlockSpec((tm, C), lambda i: (i, 0)),
                      row_spec(), row_spec(), row_spec(), row_spec()],
            out_specs=pl.BlockSpec((tm, C), lambda i: (i, 0)),
        ),
        compiler_params=_cparams("parallel"),
    )(y, ssum, ssq, gamma_row, beta_row)


# ----------------------------------------------------------------------------
# Fused FC head: fc1(Kfc->1024, K-tiled into a resident f32 accumulator)
# -> LeakyReLU -> Linear(1024->c_d1)=b -> LeakyReLU -> Linear(c_d1->c_d2)=c
# -> LeakyReLU -> Linear(c_d2->1) -> sigmoid = a.   All in ONE pallas_call.
# Small weights are lane-padded to 128 offline.
# ----------------------------------------------------------------------------
def _head_kernel(x_ref, w1_ref, b1_ref, w2_ref, b2_ref, w3_ref, b3_ref,
                 w4_ref, b4_ref, b_out, c_out, a_out, *acc, nk, alpha):
    k = pl.program_id(0)
    part = jnp.dot(x_ref[...], w1_ref[...], preferred_element_type=jnp.float32)
    if nk > 1:
        acc_ref, = acc

        @pl.when(k == 0)
        def _():
            acc_ref[...] = part

        @pl.when(k > 0)
        def _():
            acc_ref[...] += part

    @pl.when(k == nk - 1)
    def _():
        h1 = (acc[0][...] if nk > 1 else part) + b1_ref[...]
        h1 = jnp.where(h1 > 0, h1, alpha * h1).astype(jnp.bfloat16)
        b = jnp.dot(h1, w2_ref[...], preferred_element_type=jnp.float32) + b2_ref[...]
        b_out[...] = b
        bl = jnp.where(b > 0, b, alpha * b).astype(jnp.bfloat16)
        c = jnp.dot(bl, w3_ref[...], preferred_element_type=jnp.float32) + b3_ref[...]
        c_out[...] = c
        cl = jnp.where(c > 0, c, alpha * c).astype(jnp.bfloat16)
        a = jnp.dot(cl, w4_ref[...], preferred_element_type=jnp.float32) + b4_ref[...]
        a_out[...] = jax.nn.sigmoid(a)          # EUP-friendly


def head_fc(flat, wf1, bf1, wf2, bf2, wfc2, bfc2, wfc3, bfc3, *, alpha=0.2):
    B, Kfc = flat.shape
    H1 = wf1.shape[1]        # 1024
    P = wf2.shape[1]         # 128 (lane-padded c_d1/c_d2/1)
    tk = _pick_divisor(Kfc, (512, 256, 128))
    nk = Kfc // tk
    scratch = [] if nk == 1 else [pltpu.VMEM((B, H1), jnp.float32)]
    full = lambda r, c: pl.BlockSpec((r, c), lambda k: (0, 0))

    b_p, c_p, a_p = pl.pallas_call(
        functools.partial(_head_kernel, nk=nk, alpha=alpha),
        out_shape=(jax.ShapeDtypeStruct((B, P), jnp.float32),
                   jax.ShapeDtypeStruct((B, P), jnp.float32),
                   jax.ShapeDtypeStruct((B, P), jnp.float32)),
        grid_spec=pltpu.PrefetchScalarGridSpec(
            num_scalar_prefetch=0,
            grid=(nk,),
            in_specs=[
                pl.BlockSpec((B, tk), lambda k: (0, k)),      # flat activations
                pl.BlockSpec((tk, H1), lambda k: (k, 0)),     # fc1 weight (streamed)
                full(1, H1),                                  # fc1 bias
                full(H1, P), full(1, P),                      # fc2 (b)
                full(P, P), full(1, P),                       # fc2 head (c)
                full(P, P), full(1, P),                       # fc3 (a)
            ],
            out_specs=(full(B, P), full(B, P), full(B, P)),
            scratch_shapes=scratch,
        ),
        compiler_params=_cparams("arbitrary"),
    )(flat, wf1, bf1, wf2, bf2, wfc2, bfc2, wfc3, bfc3)
    return a_p, b_p, c_p


# ----------------------------------------------------------------------------
# Conv2d(Cin, Cout, kernel=4, stride=2, padding=1) on NHWC via im2col + GEMM.
# Weights are already pre-transformed to (16*Cin, Cout) bf16.
# ----------------------------------------------------------------------------
def _im2col_s2k4p1(x_nhwc):
    N, H, W_, C = x_nhwc.shape
    OH, OW = H // 2, W_ // 2
    xp = jnp.pad(x_nhwc, ((0, 0), (1, 1), (1, 1), (0, 0)))
    cols = [xp[:, ky:ky + 2 * OH:2, kx:kx + 2 * OW:2, :]
            for ky in range(4) for kx in range(4)]
    patches = jnp.stack(cols, axis=3).reshape(N * OH * OW, 16 * C)
    return patches, N, OH, OW


def conv4s2p1(x_nhwc, wm, bias_row, *, act="leaky"):
    patches, N, OH, OW = _im2col_s2k4p1(x_nhwc)
    Cout = wm.shape[1]
    y = matmul_bias_act(patches, wm, bias_row, act=act)
    return y.reshape(N, OH, OW, Cout)


def conv4s2p1_bn_stats(x_nhwc, wm, bias_row):
    patches, _, _, _ = _im2col_s2k4p1(x_nhwc)
    return conv_gemm_bn_stats(patches, wm, bias_row)   # (M,128) bf16, (1,128)x2


# ----------------------------------------------------------------------------
# Raw parameters (synthetic GAN init: N(0, 0.02) weights, zero biases, unit BN
# gamma) in PyTorch-equivalent layouts, and a one-time prep step that does all
# casts / reshapes / permutations / lane padding OUTSIDE the jitted forward.
# ----------------------------------------------------------------------------
def init_params(key, input_channel, input_size, c_d1, c_d2):
    s8 = input_size // 8
    Kfc = 128 * s8 * s8
    keys = jax.random.split(key, 7)
    nrm = lambda k, shape: 0.02 * jax.random.normal(k, shape, jnp.float32)
    return dict(
        Wc1=nrm(keys[0], (32, input_channel, 4, 4)), bc1=jnp.zeros((32,), jnp.float32),
        Wc2=nrm(keys[1], (64, 32, 4, 4)),            bc2=jnp.zeros((64,), jnp.float32),
        Wc3=nrm(keys[2], (128, 64, 4, 4)),           bc3=jnp.zeros((128,), jnp.float32),
        g3=jnp.ones((128,), jnp.float32),            be3=jnp.zeros((128,), jnp.float32),
        # FC weights stored pre-transposed as (in, out); Wf1 rows are in
        # PyTorch NCHW-flatten order (c*s8*s8 + h*s8 + w).
        Wf1=nrm(keys[3], (Kfc, 1024)),               bf1=jnp.zeros((1024,), jnp.float32),
        Wf2=nrm(keys[4], (1024, c_d1)),              bf2=jnp.zeros((c_d1,), jnp.float32),
        Wfc2=nrm(keys[5], (c_d1, c_d2)),             bfc2=jnp.zeros((c_d2,), jnp.float32),
        Wfc3=nrm(keys[6], (c_d2, 1)),                bfc3=jnp.zeros((1,), jnp.float32),
    )


def prepare_params(params, *, input_size):
    s8 = input_size // 8
    Kfc = 128 * s8 * s8
    P = 128

    def conv_w(w):      # (Cout, Cin, 4, 4) -> (16*Cin, Cout) bf16
        cout = w.shape[0]
        return jnp.transpose(w, (2, 3, 1, 0)).reshape(-1, cout).astype(jnp.bfloat16)

    def row(b, n=None):
        b = b.astype(jnp.float32)
        if n is not None and b.shape[0] < n:
            b = jnp.zeros((n,), jnp.float32).at[:b.shape[0]].set(b)
        return b.reshape(1, -1)

    c_d1 = params["Wf2"].shape[1]
    c_d2 = params["Wfc2"].shape[1]

    # Permute fc1 rows from NCHW-flatten order (c,h,w) to NHWC-flatten (h,w,c)
    # so the forward never has to transpose the conv activations.
    wf1 = (params["Wf1"].reshape(128, s8, s8, 1024)
           .transpose(1, 2, 0, 3).reshape(Kfc, 1024).astype(jnp.bfloat16))

    wf2 = jnp.zeros((1024, P), jnp.bfloat16).at[:, :c_d1].set(
        params["Wf2"].astype(jnp.bfloat16))
    wfc2 = jnp.zeros((P, P), jnp.bfloat16).at[:c_d1, :c_d2].set(
        params["Wfc2"].astype(jnp.bfloat16))
    wfc3 = jnp.zeros((P, P), jnp.bfloat16).at[:c_d2, :1].set(
        params["Wfc3"].astype(jnp.bfloat16))

    return dict(
        wc1=conv_w(params["Wc1"]), bc1=row(params["bc1"]),
        wc2=conv_w(params["Wc2"]), bc2=row(params["bc2"]),
        wc3=conv_w(params["Wc3"]), bc3=row(params["bc3"]),
        g3=row(params["g3"]), be3=row(params["be3"]),
        wf1=wf1, bf1=row(params["bf1"]),
        wf2=wf2, bf2=row(params["bf2"], P),
        wfc2=wfc2, bfc2=row(params["bfc2"], P),
        wfc3=wfc3, bfc3=row(params["bfc3"], P),
    )


# ----------------------------------------------------------------------------
# Forward pass (mirrors discriminator_mwm3.forward; NCHW input like PyTorch).
# Returns (a, b, c): a = sigmoid(fc3(...)).squeeze(1), b = fc(x), c = fc2(b).
# ----------------------------------------------------------------------------
def discriminator_forward(prep, x_nchw, *, input_size, c_d1, c_d2):
    B = x_nchw.shape[0]
    s8 = input_size // 8

    x = jnp.transpose(x_nchw, (0, 2, 3, 1)).astype(jnp.bfloat16)   # NCHW -> NHWC

    # conv: Conv->LeakyReLU, Conv->LeakyReLU, Conv(+BN stats), BN-affine->LeakyReLU
    h = conv4s2p1(x, prep["wc1"], prep["bc1"], act="leaky")
    h = conv4s2p1(h, prep["wc2"], prep["bc2"], act="leaky")
    y, ssum, ssq = conv4s2p1_bn_stats(h, prep["wc3"], prep["bc3"])
    hn = bn_affine_leaky(y, ssum, ssq, prep["g3"], prep["be3"])    # (B*s8*s8, 128) bf16

    # NHWC flatten is a free reshape (wf1 rows were pre-permuted to match).
    flat = hn.reshape(B, 128 * s8 * s8)

    # Fused head: fc1 -> LeakyReLU -> fc2(b) -> LeakyReLU -> fc2' (c)
    #                -> LeakyReLU -> fc3 -> sigmoid (a)
    a_p, b_p, c_p = head_fc(flat, prep["wf1"], prep["bf1"],
                            prep["wf2"], prep["bf2"],
                            prep["wfc2"], prep["bfc2"],
                            prep["wfc3"], prep["bfc3"])
    return a_p[:, 0], b_p[:, :c_d1], c_p[:, :c_d2]


if __name__ == "__main__":
    B = 2
    INPUT_CHANNEL = 1
    INPUT_SIZE = 16
    C_D1, C_D2 = 10, 20

    key = jax.random.PRNGKey(0)
    kp, kx = jax.random.split(key, 2)

    raw = init_params(kp, INPUT_CHANNEL, INPUT_SIZE, C_D1, C_D2)
    prep = prepare_params(raw, input_size=INPUT_SIZE)   # one-time weight prep
    x = jax.random.normal(kx, (B, INPUT_CHANNEL, INPUT_SIZE, INPUT_SIZE),
                          jnp.float32)

    fwd = jax.jit(functools.partial(discriminator_forward,
                                    input_size=INPUT_SIZE,
                                    c_d1=C_D1, c_d2=C_D2))
    a, b, c = jax.block_until_ready(fwd(prep, x))

    assert a.shape == (B,), a.shape
    assert b.shape == (B, C_D1), b.shape
    assert c.shape == (B, C_D2), c.shape
    assert bool(jnp.all(jnp.isfinite(a)))
    assert bool(jnp.all(jnp.isfinite(b)))
    assert bool(jnp.all(jnp.isfinite(c)))
    assert bool(jnp.all((a >= 0.0) & (a <= 1.0)))   # sigmoid range
    print("KERNEL_OK")
</pallas_src>

<mosaic_0001>
module attributes {stable_mosaic.version = 11 : i64} {
  func.func @_mm_kernel(%arg0: i32, %arg1: i32, %arg2: i32, %arg3: memref<64x16xbf16, #tpu.memory_space<vmem>>, %arg4: memref<16x32xbf16, #tpu.memory_space<vmem>>, %arg5: memref<1x32xf32, #tpu.memory_space<vmem>>, %arg6: memref<64x32xbf16, #tpu.memory_space<vmem>>) attributes {dimension_semantics = [#tpu.dimension_semantics<parallel>, #tpu.dimension_semantics<parallel>, #tpu.dimension_semantics<arbitrary>], iteration_bounds = array<i64: 2, 1, 1>, scalar_prefetch = 0 : i64, scratch_operands = 0 : i64, tpu.core_type = #tpu.core_type<tc>, window_params = [{transform_indices = @transform_0, window_bounds = array<i64: 64, 16>}, {transform_indices = @transform_1, window_bounds = array<i64: 16, 32>}, {transform_indices = @transform_2, window_bounds = array<i64: 1, 32>}, {transform_indices = @transform_3, window_bounds = array<i64: 64, 32>}]} {
    %c0 = arith.constant 0 : index
    %c0_0 = arith.constant 0 : index
    %0 = vector.load %arg3[%c0, %c0_0] : memref<64x16xbf16, #tpu.memory_space<vmem>>, vector<64x16xbf16>
    %c0_1 = arith.constant 0 : index
    %c0_2 = arith.constant 0 : index
    %1 = vector.load %arg4[%c0_1, %c0_2] : memref<16x32xbf16, #tpu.memory_space<vmem>>, vector<16x32xbf16>
    %cst = arith.constant dense<0.000000e+00> : vector<64x32xf32>
    %2 = tpu.matmul %0, %1, %cst {dimension_numbers = #tpu.dot_dimension_numbers<[1], [0], [0], [1], [0, 0, 1, 1], [], []>} : vector<64x16xbf16>, vector<16x32xbf16>, vector<64x32xf32> -> vector<64x32xf32>
    %c0_3 = arith.constant 0 : index
    %c0_4 = arith.constant 0 : index
    %3 = vector.load %arg5[%c0_3, %c0_4] : memref<1x32xf32, #tpu.memory_space<vmem>>, vector<1x32xf32>
    %4 = vector.broadcast %3 : vector<1x32xf32> to vector<64x32xf32>
    %5 = arith.addf %2, %4 : vector<64x32xf32>
    %cst_5 = arith.constant 0.000000e+00 : f32
    %6 = vector.broadcast %cst_5 : f32 to vector<64x32xf32>
    %7 = arith.cmpf ogt, %5, %6 : vector<64x32xf32>
    %cst_6 = arith.constant 2.000000e-01 : f32
    %8 = vector.broadcast %cst_6 : f32 to vector<64x32xf32>
    %9 = arith.mulf %8, %5 : vector<64x32xf32>
    %10 = arith.select %7, %5, %9 : vector<64x32xi1>, vector<64x32xf32>
    %11 = arith.truncf %10 : vector<64x32xf32> to vector<64x32xbf16>
    %c0_7 = arith.constant 0 : index
    %c0_8 = arith.constant 0 : index
    %12 = vector.load %arg6[%c0_7, %c0_8] : memref<64x32xbf16, #tpu.memory_space<vmem>>, vector<64x32xbf16>
    tpu.vector_store %arg6[%c0_7, %c0_8], %11 {strides = array<i32>} : memref<64x32xbf16, #tpu.memory_space<vmem>>, vector<64x32xbf16>,
    return
  }
  func.func @transform_0(%arg0: i32, %arg1: i32, %arg2: i32) -> (i32, i32) {
    %c0_i32 = arith.constant 0 : i32
    return %arg0, %arg2 : i32, i32
  }
  func.func @transform_1(%arg0: i32, %arg1: i32, %arg2: i32) -> (i32, i32) {
    %c0_i32 = arith.constant 0 : i32
    return %arg2, %arg1 : i32, i32
  }
  func.func @transform_2(%arg0: i32, %arg1: i32, %arg2: i32) -> (i32, i32) {
    %c0_i32 = arith.constant 0 : i32
    %c0_i32_0 = arith.constant 0 : i32
    return %c0_i32, %arg1 : i32, i32
  }
  func.func @transform_3(%arg0: i32, %arg1: i32, %arg2: i32) -> (i32, i32) {
    %c0_i32 = arith.constant 0 : i32
    return %arg0, %arg1 : i32, i32
  }
}

module attributes {stable_mosaic.version = 11 : i64} {
  func.func @_mm_kernel(%arg0: i32, %arg1: i32, %arg2: i32, %arg3: memref<16x512xbf16, #tpu.memory_space<vmem>>, %arg4: memref<512x64xbf16, #tpu.memory_space<vmem>>, %arg5: memref<1x64xf32, #tpu.memory_space<vmem>>, %arg6: memref<16x64xbf16, #tpu.memory_space<vmem>>) attributes {dimension_semantics = [#tpu.dimension_semantics<parallel>, #tpu.dimension_semantics<parallel>, #tpu.dimension_semantics<arbitrary>], iteration_bounds = array<i64: 2, 1, 1>, scalar_prefetch = 0 : i64, scratch_operands = 0 : i64, tpu.core_type = #tpu.core_type<tc>, window_params = [{transform_indices = @transform_0, window_bounds = array<i64: 16, 512>}, {transform_indices = @transform_1, window_bounds = array<i64: 512, 64>}, {transform_indices = @transform_2, window_bounds = array<i64: 1, 64>}, {transform_indices = @transform_3, window_bounds = array<i64: 16, 64>}]} {
    %c0 = arith.constant 0 : index
    %c0_0 = arith.constant 0 : index
    %0 = vector.load %arg3[%c0, %c0_0] : memref<16x512xbf16, #tpu.memory_space<vmem>>, vector<16x512xbf16>
    %c0_1 = arith.constant 0 : index
    %c0_2 = arith.constant 0 : index
    %1 = vector.load %arg4[%c0_1, %c0_2] : memref<512x64xbf16, #tpu.memory_space<vmem>>, vector<512x64xbf16>
    %cst = arith.constant dense<0.000000e+00> : vector<16x64xf32>
    %2 = tpu.matmul %0, %1, %cst {dimension_numbers = #tpu.dot_dimension_numbers<[1], [0], [0], [1], [0, 0, 1, 1], [], []>} : vector<16x512xbf16>, vector<512x64xbf16>, vector<16x64xf32> -> vector<16x64xf32>
    %c0_3 = arith.constant 0 : index
    %c0_4 = arith.constant 0 : index
    %3 = vector.load %arg5[%c0_3, %c0_4] : memref<1x64xf32, #tpu.memory_space<vmem>>, vector<1x64xf32>
    %4 = vector.broadcast %3 : vector<1x64xf32> to vector<16x64xf32>
    %5 = arith.addf %2, %4 : vector<16x64xf32>
    %cst_5 = arith.constant 0.000000e+00 : f32
    %6 = vector.broadcast %cst_5 : f32 to vector<16x64xf32>
    %7 = arith.cmpf ogt, %5, %6 : vector<16x64xf32>
    %cst_6 = arith.constant 2.000000e-01 : f32
    %8 = vector.broadcast %cst_6 : f32 to vector<16x64xf32>
    %9 = arith.mulf %8, %5 : vector<16x64xf32>
    %10 = arith.select %7, %5, %9 : vector<16x64xi1>, vector<16x64xf32>
    %11 = arith.truncf %10 : vector<16x64xf32> to vector<16x64xbf16>
    %c0_7 = arith.constant 0 : index
    %c0_8 = arith.constant 0 : index
    %12 = vector.load %arg6[%c0_7, %c0_8] : memref<16x64xbf16, #tpu.memory_space<vmem>>, vector<16x64xbf16>
    tpu.vector_store %arg6[%c0_7, %c0_8], %11 {strides = array<i32>} : memref<16x64xbf16, #tpu.memory_space<vmem>>, vector<16x64xbf16>,
    return
  }
  func.func @transform_0(%arg0: i32, %arg1: i32, %arg2: i32) -> (i32, i32) {
    %c0_i32 = arith.constant 0 : i32
    return %arg0, %arg2 : i32, i32
  }
  func.func @transform_1(%arg0: i32, %arg1: i32, %arg2: i32) -> (i32, i32) {
    %c0_i32 = arith.constant 0 : i32
    return %arg2, %arg1 : i32, i32
  }
  func.func @transform_2(%arg0: i32, %arg1: i32, %arg2: i32) -> (i32, i32) {
    %c0_i32 = arith.constant 0 : i32
    %c0_i32_0 = arith.constant 0 : i32
    return %c0_i32, %arg1 : i32, i32
  }
  func.func @transform_3(%arg0: i32, %arg1: i32, %arg2: i32) -> (i32, i32) {
    %c0_i32 = arith.constant 0 : i32
    return %arg0, %arg1 : i32, i32
  }
}

module attributes {stable_mosaic.version = 11 : i64} {
  func.func @_mm_stats_kernel(%arg0: i32, %arg1: i32, %arg2: memref<8x1024xbf16, #tpu.memory_space<vmem>>, %arg3: memref<1024x128xbf16, #tpu.memory_space<vmem>>, %arg4: memref<1x128xf32, #tpu.memory_space<vmem>>, %arg5: memref<8x128xbf16, #tpu.memory_space<vmem>>, %arg6: memref<1x128xf32, #tpu.memory_space<vmem>>, %arg7: memref<1x128xf32, #tpu.memory_space<vmem>>) attributes {dimension_semantics = [#tpu.dimension_semantics<arbitrary>, #tpu.dimension_semantics<arbitrary>], iteration_bounds = array<i64: 1, 1>, scalar_prefetch = 0 : i64, scratch_operands = 0 : i64, tpu.core_type = #tpu.core_type<tc>, window_params = [{transform_indices = @transform_0, window_bounds = array<i64: 8, 1024>}, {transform_indices = @transform_1, window_bounds = array<i64: 1024, 128>}, {pipeline_mode = #tpu.pipeline_mode<synchronous>, transform_indices = @transform_2, window_bounds = array<i64: 1, 128>}, {transform_indices = @transform_3, window_bounds = array<i64: 8, 128>}, {pipeline_mode = #tpu.pipeline_mode<synchronous>, transform_indices = @transform_4, window_bounds = array<i64: 1, 128>}, {pipeline_mode = #tpu.pipeline_mode<synchronous>, transform_indices = @transform_5, window_bounds = array<i64: 1, 128>}]} {
    %c0 = arith.constant 0 : index
    %c0_0 = arith.constant 0 : index
    %0 = vector.load %arg2[%c0, %c0_0] : memref<8x1024xbf16, #tpu.memory_space<vmem>>, vector<8x1024xbf16>
    %c0_1 = arith.constant 0 : index
    %c0_2 = arith.constant 0 : index
    %1 = vector.load %arg3[%c0_1, %c0_2] : memref<1024x128xbf16, #tpu.memory_space<vmem>>, vector<1024x128xbf16>
    %cst = arith.constant dense<0.000000e+00> : vector<8x128xf32>
    %2 = tpu.matmul %0, %1, %cst {dimension_numbers = #tpu.dot_dimension_numbers<[1], [0], [0], [1], [0, 0, 1, 1], [], []>} : vector<8x1024xbf16>, vector<1024x128xbf16>, vector<8x128xf32> -> vector<8x128xf32>
    %c0_i32 = arith.constant 0 : i32
    %3 = arith.cmpi eq, %arg1, %c0_i32 : i32
    %4 = arith.extui %3 : i1 to i32
    %c0_i32_3 = arith.constant 0 : i32
    %5 = arith.cmpi ne, %4, %c0_i32_3 : i32
    scf.if %5 {
      %c0_4 = arith.constant 0 : index
      %c0_5 = arith.constant 0 : index
      %6 = vector.load %arg4[%c0_4, %c0_5] : memref<1x128xf32, #tpu.memory_space<vmem>>, vector<1x128xf32>
      %7 = vector.broadcast %6 : vector<1x128xf32> to vector<8x128xf32>
      %8 = arith.addf %2, %7 : vector<8x128xf32>
      %9 = arith.truncf %8 : vector<8x128xf32> to vector<8x128xbf16>
      %c0_6 = arith.constant 0 : index
      %c0_7 = arith.constant 0 : index
      %10 = vector.load %arg5[%c0_6, %c0_7] : memref<8x128xbf16, #tpu.memory_space<vmem>>, vector<8x128xbf16>
      tpu.vector_store %arg5[%c0_6, %c0_7], %9 {strides = array<i32>} : memref<8x128xbf16, #tpu.memory_space<vmem>>, vector<8x128xbf16>,
      %cst_8 = arith.constant dense<0.000000e+00> : vector<128xf32>
      %11 = vector.multi_reduction <add>, %8, %cst_8 [0] : vector<8x128xf32> to vector<128xf32>
      %12 = vector.shape_cast %11 : vector<128xf32> to vector<1x128xf32>
      %13 = arith.mulf %8, %8 : vector<8x128xf32>
      %cst_9 = arith.constant dense<0.000000e+00> : vector<128xf32>
      %14 = vector.multi_reduction <add>, %13, %cst_9 [0] : vector<8x128xf32> to vector<128xf32>
      %15 = vector.shape_cast %14 : vector<128xf32> to vector<1x128xf32>
      %c0_i32_10 = arith.constant 0 : i32
      %16 = arith.cmpi eq, %arg0, %c0_i32_10 : i32
      %17 = arith.extui %16 : i1 to i32
      %c0_i32_11 = arith.constant 0 : i32
      %18 = arith.cmpi ne, %17, %c0_i32_11 : i32
      scf.if %18 {
        %c0_14 = arith.constant 0 : index
        %c0_15 = arith.constant 0 : index
        %22 = vector.load %arg6[%c0_14, %c0_15] : memref<1x128xf32, #tpu.memory_space<vmem>>, vector<1x128xf32>
        tpu.vector_store %arg6[%c0_14, %c0_15], %12 {strides = array<i32>} : memref<1x128xf32, #tpu.memory_space<vmem>>, vector<1x128xf32>,
        %c0_16 = arith.constant 0 : index
        %c0_17 = arith.constant 0 : index
        %23 = vector.load %arg7[%c0_16, %c0_17] : memref<1x128xf32, #tpu.memory_space<vmem>>, vector<1x128xf32>
        tpu.vector_store %arg7[%c0_16, %c0_17], %15 {strides = array<i32>} : memref<1x128xf32, #tpu.memory_space<vmem>>, vector<1x128xf32>,
      } else {
      }
      %c0_i32_12 = arith.constant 0 : i32
      %19 = arith.cmpi sgt, %arg0, %c0_i32_12 : i32
      %20 = arith.extui %19 : i1 to i32
      %c0_i32_13 = arith.constant 0 : i32
      %21 = arith.cmpi ne, %20, %c0_i32_13 : i32
      scf.if %21 {
        %c0_14 = arith.constant 0 : index
        %c0_15 = arith.constant 0 : index
        %22 = vector.load %arg6[%c0_14, %c0_15] : memref<1x128xf32, #tpu.memory_space<vmem>>, vector<1x128xf32>
        %23 = arith.addf %22, %12 : vector<1x128xf32>
        %c0_16 = arith.constant 0 : index
        %c0_17 = arith.constant 0 : index
        %24 = vector.load %arg6[%c0_16, %c0_17] : memref<1x128xf32, #tpu.memory_space<vmem>>, vector<1x128xf32>
        tpu.vector_store %arg6[%c0_16, %c0_17], %23 {strides = array<i32>} : memref<1x128xf32, #tpu.memory_space<vmem>>, vector<1x128xf32>,
        %c0_18 = arith.constant 0 : index
        %c0_19 = arith.constant 0 : index
        %25 = vector.load %arg7[%c0_18, %c0_19] : memref<1x128xf32, #tpu.memory_space<vmem>>, vector<1x128xf32>
        %26 = arith.addf %25, %15 : vector<1x128xf32>
        %c0_20 = arith.constant 0 : index
        %c0_21 = arith.constant 0 : index
        %27 = vector.load %arg7[%c0_20, %c0_21] : memref<1x128xf32, #tpu.memory_space<vmem>>, vector<1x128xf32>
        tpu.vector_store %arg7[%c0_20, %c0_21], %26 {strides = array<i32>} : memref<1x128xf32, #tpu.memory_space<vmem>>, vector<1x128xf32>,
      } else {
      }
    } else {
    }
    return
  }
  func.func @transform_0(%arg0: i32, %arg1: i32) -> (i32, i32) {
    %c0_i32 = arith.constant 0 : i32
    return %arg0, %arg1 : i32, i32
  }
  func.func @transform_1(%arg0: i32, %arg1: i32) -> (i32, i32) {
    %c0_i32 = arith.constant 0 : i32
    %c0_i32_0 = arith.constant 0 : i32
    return %arg1, %c0_i32 : i32, i32
  }
  func.func @transform_2(%arg0: i32, %arg1: i32) -> (i32, i32) {
    %c0_i32 = arith.constant 0 : i32
    %c0_i32_0 = arith.constant 0 : i32
    %c0_i32_1 = arith.constant 0 : i32
    return %c0_i32, %c0_i32_0 : i32, i32
  }
  func.func @transform_3(%arg0: i32, %arg1: i32) -> (i32, i32) {
    %c0_i32 = arith.constant 0 : i32
    %c0_i32_0 = arith.constant 0 : i32
    return %arg0, %c0_i32 : i32, i32
  }
  func.func @transform_4(%arg0: i32, %arg1: i32) -> (i32, i32) {
    %c0_i32 = arith.constant 0 : i32
    %c0_i32_0 = arith.constant 0 : i32
    %c0_i32_1 = arith.constant 0 : i32
    return %c0_i32, %c0_i32_0 : i32, i32
  }
  func.func @transform_5(%arg0: i32, %arg1: i32) -> (i32, i32) {
    %c0_i32 = arith.constant 0 : i32
    %c0_i32_0 = arith.constant 0 : i32
    %c0_i32_1 = arith.constant 0 : i32
    return %c0_i32, %c0_i32_0 : i32, i32
  }
}

module attributes {stable_mosaic.version = 11 : i64} {
  func.func @_bn_affine_kernel(%arg0: i32, %arg1: memref<8x128xbf16, #tpu.memory_space<vmem>>, %arg2: memref<1x128xf32, #tpu.memory_space<vmem>>, %arg3: memref<1x128xf32, #tpu.memory_space<vmem>>, %arg4: memref<1x128xf32, #tpu.memory_space<vmem>>, %arg5: memref<1x128xf32, #tpu.memory_space<vmem>>, %arg6: memref<8x128xbf16, #tpu.memory_space<vmem>>) attributes {dimension_semantics = [#tpu.dimension_semantics<parallel>], iteration_bounds = array<i64: 1>, scalar_prefetch = 0 : i64, scratch_operands = 0 : i64, tpu.core_type = #tpu.core_type<tc>, window_params = [{transform_indices = @transform_0, window_bounds = array<i64: 8, 128>}, {pipeline_mode = #tpu.pipeline_mode<synchronous>, transform_indices = @transform_1, window_bounds = array<i64: 1, 128>}, {pipeline_mode = #tpu.pipeline_mode<synchronous>, transform_indices = @transform_2, window_bounds = array<i64: 1, 128>}, {pipeline_mode = #tpu.pipeline_mode<synchronous>, transform_indices = @transform_3, window_bounds = array<i64: 1, 128>}, {pipeline_mode = #tpu.pipeline_mode<synchronous>, transform_indices = @transform_4, window_bounds = array<i64: 1, 128>}, {transform_indices = @transform_5, window_bounds = array<i64: 8, 128>}]} {
    %c0 = arith.constant 0 : index
    %c0_0 = arith.constant 0 : index
    %0 = vector.load %arg2[%c0, %c0_0] : memref<1x128xf32, #tpu.memory_space<vmem>>, vector<1x128xf32>
    %cst = arith.constant 1.250000e-01 : f32
    %1 = vector.broadcast %cst : f32 to vector<1x128xf32>
    %2 = arith.mulf %0, %1 : vector<1x128xf32>
    %c0_1 = arith.constant 0 : index
    %c0_2 = arith.constant 0 : index
    %3 = vector.load %arg3[%c0_1, %c0_2] : memref<1x128xf32, #tpu.memory_space<vmem>>, vector<1x128xf32>
    %cst_3 = arith.constant 1.250000e-01 : f32
    %4 = vector.broadcast %cst_3 : f32 to vector<1x128xf32>
    %5 = arith.mulf %3, %4 : vector<1x128xf32>
    %6 = arith.mulf %2, %2 : vector<1x128xf32>
    %7 = arith.subf %5, %6 : vector<1x128xf32>
    %c0_4 = arith.constant 0 : index
    %c0_5 = arith.constant 0 : index
    %8 = vector.load %arg4[%c0_4, %c0_5] : memref<1x128xf32, #tpu.memory_space<vmem>>, vector<1x128xf32>
    %cst_6 = arith.constant 9.99999974E-6 : f32
    %9 = vector.broadcast %cst_6 : f32 to vector<1x128xf32>
    %10 = arith.addf %7, %9 : vector<1x128xf32>
    %11 = math.rsqrt %10 : vector<1x128xf32>
    %12 = arith.mulf %8, %11 : vector<1x128xf32>
    %c0_7 = arith.constant 0 : index
    %c0_8 = arith.constant 0 : index
    %13 = vector.load %arg5[%c0_7, %c0_8] : memref<1x128xf32, #tpu.memory_space<vmem>>, vector<1x128xf32>
    %14 = arith.mulf %2, %12 : vector<1x128xf32>
    %15 = arith.subf %13, %14 : vector<1x128xf32>
    %c0_9 = arith.constant 0 : index
    %c0_10 = arith.constant 0 : index
    %16 = vector.load %arg1[%c0_9, %c0_10] : memref<8x128xbf16, #tpu.memory_space<vmem>>, vector<8x128xbf16>
    %17 = arith.extf %16 : vector<8x128xbf16> to vector<8x128xf32>
    %18 = vector.broadcast %12 : vector<1x128xf32> to vector<8x128xf32>
    %19 = arith.mulf %17, %18 : vector<8x128xf32>
    %20 = vector.broadcast %15 : vector<1x128xf32> to vector<8x128xf32>
    %21 = arith.addf %19, %20 : vector<8x128xf32>
    %cst_11 = arith.constant 0.000000e+00 : f32
    %22 = vector.broadcast %cst_11 : f32 to vector<8x128xf32>
    %23 = arith.cmpf ogt, %21, %22 : vector<8x128xf32>
    %cst_12 = arith.constant 2.000000e-01 : f32
    %24 = vector.broadcast %cst_12 : f32 to vector<8x128xf32>
    %25 = arith.mulf %24, %21 : vector<8x128xf32>
    %26 = arith.select %23, %21, %25 : vector<8x128xi1>, vector<8x128xf32>
    %27 = arith.truncf %26 : vector<8x128xf32> to vector<8x128xbf16>
    %c0_13 = arith.constant 0 : index
    %c0_14 = arith.constant 0 : index
    %28 = vector.load %arg6[%c0_13, %c0_14] : memref<8x128xbf16, #tpu.memory_space<vmem>>, vector<8x128xbf16>
    tpu.vector_store %arg6[%c0_13, %c0_14], %27 {strides = array<i32>} : memref<8x128xbf16, #tpu.memory_space<vmem>>, vector<8x128xbf16>,
    return
  }
  func.func @transform_0(%arg0: i32) -> (i32, i32) {
    %c0_i32 = arith.constant 0 : i32
    %c0_i32_0 = arith.constant 0 : i32
    return %arg0, %c0_i32 : i32, i32
  }
  func.func @transform_1(%arg0: i32) -> (i32, i32) {
    %c0_i32 = arith.constant 0 : i32
    %c0_i32_0 = arith.constant 0 : i32
    %c0_i32_1 = arith.constant 0 : i32
    return %c0_i32, %c0_i32_0 : i32, i32
  }
  func.func @transform_2(%arg0: i32) -> (i32, i32) {
    %c0_i32 = arith.constant 0 : i32
    %c0_i32_0 = arith.constant 0 : i32
    %c0_i32_1 = arith.constant 0 : i32
    return %c0_i32, %c0_i32_0 : i32, i32
  }
  func.func @transform_3(%arg0: i32) -> (i32, i32) {
    %c0_i32 = arith.constant 0 : i32
    %c0_i32_0 = arith.constant 0 : i32
    %c0_i32_1 = arith.constant 0 : i32
    return %c0_i32, %c0_i32_0 : i32, i32
  }
  func.func @transform_4(%arg0: i32) -> (i32, i32) {
    %c0_i32 = arith.constant 0 : i32
    %c0_i32_0 = arith.constant 0 : i32
    %c0_i32_1 = arith.constant 0 : i32
    return %c0_i32, %c0_i32_0 : i32, i32
  }
  func.func @transform_5(%arg0: i32) -> (i32, i32) {
    %c0_i32 = arith.constant 0 : i32
    %c0_i32_0 = arith.constant 0 : i32
    return %arg0, %c0_i32 : i32, i32
  }
}

module attributes {stable_mosaic.version = 11 : i64} {
  func.func @_head_kernel(%arg0: i32, %arg1: memref<2x512xbf16, #tpu.memory_space<vmem>>, %arg2: memref<512x1024xbf16, #tpu.memory_space<vmem>>, %arg3: memref<1x1024xf32, #tpu.memory_space<vmem>>, %arg4: memref<1024x128xbf16, #tpu.memory_space<vmem>>, %arg5: memref<1x128xf32, #tpu.memory_space<vmem>>, %arg6: memref<128x128xbf16, #tpu.memory_space<vmem>>, %arg7: memref<1x128xf32, #tpu.memory_space<vmem>>, %arg8: memref<128x128xbf16, #tpu.memory_space<vmem>>, %arg9: memref<1x128xf32, #tpu.memory_space<vmem>>, %arg10: memref<2x128xf32, #tpu.memory_space<vmem>>, %arg11: memref<2x128xf32, #tpu.memory_space<vmem>>, %arg12: memref<2x128xf32, #tpu.memory_space<vmem>>) attributes {dimension_semantics = [#tpu.dimension_semantics<arbitrary>], iteration_bounds = array<i64: 1>, scalar_prefetch = 0 : i64, scratch_operands = 0 : i64, tpu.core_type = #tpu.core_type<tc>, window_params = [{transform_indices = @transform_0, window_bounds = array<i64: 2, 512>}, {transform_indices = @transform_1, window_bounds = array<i64: 512, 1024>}, {pipeline_mode = #tpu.pipeline_mode<synchronous>, transform_indices = @transform_2, window_bounds = array<i64: 1, 1024>}, {pipeline_mode = #tpu.pipeline_mode<synchronous>, transform_indices = @transform_3, window_bounds = array<i64: 1024, 128>}, {pipeline_mode = #tpu.pipeline_mode<synchronous>, transform_indices = @transform_4, window_bounds = array<i64: 1, 128>}, {pipeline_mode = #tpu.pipeline_mode<synchronous>, transform_indices = @transform_5, window_bounds = array<i64: 128, 128>}, {pipeline_mode = #tpu.pipeline_mode<synchronous>, transform_indices = @transform_6, window_bounds = array<i64: 1, 128>}, {pipeline_mode = #tpu.pipeline_mode<synchronous>, transform_indices = @transform_7, window_bounds = array<i64: 128, 128>}, {pipeline_mode = #tpu.pipeline_mode<synchronous>, transform_indices = @transform_8, window_bounds = array<i64: 1, 128>}, {pipeline_mode = #tpu.pipeline_mode<synchronous>, transform_indices = @transform_9, window_bounds = array<i64: 2, 128>}, {pipeline_mode = #tpu.pipeline_mode<synchronous>, transform_indices = @transform_10, window_bounds = array<i64: 2, 128>}, {pipeline_mode = #tpu.pipeline_mode<synchronous>, transform_indices = @transform_11, window_bounds = array<i64: 2, 128>}]} {
    %c0 = arith.constant 0 : index
    %c0_0 = arith.constant 0 : index
    %0 = vector.load %arg1[%c0, %c0_0] : memref<2x512xbf16, #tpu.memory_space<vmem>>, vector<2x512xbf16>
    %c0_1 = arith.constant 0 : index
    %c0_2 = arith.constant 0 : index
    %1 = vector.load %arg2[%c0_1, %c0_2] : memref<512x1024xbf16, #tpu.memory_space<vmem>>, vector<512x1024xbf16>
    %cst = arith.constant dense<0.000000e+00> : vector<2x1024xf32>
    %2 = tpu.matmul %0, %1, %cst {dimension_numbers = #tpu.dot_dimension_numbers<[1], [0], [0], [1], [0, 0, 1, 1], [], []>} : vector<2x512xbf16>, vector<512x1024xbf16>, vector<2x1024xf32> -> vector<2x1024xf32>
    %c0_i32 = arith.constant 0 : i32
    %3 = arith.cmpi eq, %arg0, %c0_i32 : i32
    %4 = arith.extui %3 : i1 to i32
    %c0_i32_3 = arith.constant 0 : i32
    %5 = arith.cmpi ne, %4, %c0_i32_3 : i32
    scf.if %5 {
      %c0_4 = arith.constant 0 : index
      %c0_5 = arith.constant 0 : index
      %6 = vector.load %arg3[%c0_4, %c0_5] : memref<1x1024xf32, #tpu.memory_space<vmem>>, vector<1x1024xf32>
      %7 = vector.broadcast %6 : vector<1x1024xf32> to vector<2x1024xf32>
      %8 = arith.addf %2, %7 : vector<2x1024xf32>
      %cst_6 = arith.constant 0.000000e+00 : f32
      %9 = vector.broadcast %cst_6 : f32 to vector<2x1024xf32>
      %10 = arith.cmpf ogt, %8, %9 : vector<2x1024xf32>
      %cst_7 = arith.constant 2.000000e-01 : f32
      %11 = vector.broadcast %cst_7 : f32 to vector<2x1024xf32>
      %12 = arith.mulf %11, %8 : vector<2x1024xf32>
      %13 = arith.select %10, %8, %12 : vector<2x1024xi1>, vector<2x1024xf32>
      %14 = arith.truncf %13 : vector<2x1024xf32> to vector<2x1024xbf16>
      %c0_8 = arith.constant 0 : index
      %c0_9 = arith.constant 0 : index
      %15 = vector.load %arg4[%c0_8, %c0_9] : memref<1024x128xbf16, #tpu.memory_space<vmem>>, vector<1024x128xbf16>
      %cst_10 = arith.constant dense<0.000000e+00> : vector<2x128xf32>
      %16 = tpu.matmul %14, %15, %cst_10 {dimension_numbers = #tpu.dot_dimension_numbers<[1], [0], [0], [1], [0, 0, 1, 1], [], []>} : vector<2x1024xbf16>, vector<1024x128xbf16>, vector<2x128xf32> -> vector<2x128xf32>
      %c0_11 = arith.constant 0 : index
      %c0_12 = arith.constant 0 : index
      %17 = vector.load %arg5[%c0_11, %c0_12] : memref<1x128xf32, #tpu.memory_space<vmem>>, vector<1x128xf32>
      %18 = vector.broadcast %17 : vector<1x128xf32> to vector<2x128xf32>
      %19 = arith.addf %16, %18 : vector<2x128xf32>
      %c0_13 = arith.constant 0 : index
      %c0_14 = arith.constant 0 : index
      %20 = vector.load %arg10[%c0_13, %c0_14] : memref<2x128xf32, #tpu.memory_space<vmem>>, vector<2x128xf32>
      tpu.vector_store %arg10[%c0_13, %c0_14], %19 {strides = array<i32>} : memref<2x128xf32, #tpu.memory_space<vmem>>, vector<2x128xf32>,
      %cst_15 = arith.constant 0.000000e+00 : f32
      %21 = vector.broadcast %cst_15 : f32 to vector<2x128xf32>
      %22 = arith.cmpf ogt, %19, %21 : vector<2x128xf32>
      %cst_16 = arith.constant 2.000000e-01 : f32
      %23 = vector.broadcast %cst_16 : f32 to vector<2x128xf32>
      %24 = arith.mulf %23, %19 : vector<2x128xf32>
      %25 = arith.select %22, %19, %24 : vector<2x128xi1>, vector<2x128xf32>
      %26 = arith.truncf %25 : vector<2x128xf32> to vector<2x128xbf16>
      %c0_17 = arith.constant 0 : index
      %c0_18 = arith.constant 0 : index
      %27 = vector.load %arg6[%c0_17, %c0_18] : memref<128x128xbf16, #tpu.memory_space<vmem>>, vector<128x128xbf16>
      %cst_19 = arith.constant dense<0.000000e+00> : vector<2x128xf32>
      %28 = tpu.matmul %26, %27, %cst_19 {dimension_numbers = #tpu.dot_dimension_numbers<[1], [0], [0], [1], [0, 0, 1, 1], [], []>} : vector<2x128xbf16>, vector<128x128xbf16>, vector<2x128xf32> -> vector<2x128xf32>
      %c0_20 = arith.constant 0 : index
      %c0_21 = arith.constant 0 : index
      %29 = vector.load %arg7[%c0_20, %c0_21] : memref<1x128xf32, #tpu.memory_space<vmem>>, vector<1x128xf32>
      %30 = vector.broadcast %29 : vector<1x128xf32> to vector<2x128xf32>
      %31 = arith.addf %28, %30 : vector<2x128xf32>
      %c0_22 = arith.constant 0 : index
      %c0_23 = arith.constant 0 : index
      %32 = vector.load %arg11[%c0_22, %c0_23] : memref<2x128xf32, #tpu.memory_space<vmem>>, vector<2x128xf32>
      tpu.vector_store %arg11[%c0_22, %c0_23], %31 {strides = array<i32>} : memref<2x128xf32, #tpu.memory_space<vmem>>, vector<2x128xf32>,
      %cst_24 = arith.constant 0.000000e+00 : f32
      %33 = vector.broadcast %cst_24 : f32 to vector<2x128xf32>
      %34 = arith.cmpf ogt, %31, %33 : vector<2x128xf32>
      %cst_25 = arith.constant 2.000000e-01 : f32
      %35 = vector.broadcast %cst_25 : f32 to vector<2x128xf32>
      %36 = arith.mulf %35, %31 : vector<2x128xf32>
      %37 = arith.select %34, %31, %36 : vector<2x128xi1>, vector<2x128xf32>
      %38 = arith.truncf %37 : vector<2x128xf32> to vector<2x128xbf16>
      %c0_26 = arith.constant 0 : index
      %c0_27 = arith.constant 0 : index
      %39 = vector.load %arg8[%c0_26, %c0_27] : memref<128x128xbf16, #tpu.memory_space<vmem>>, vector<128x128xbf16>
      %cst_28 = arith.constant dense<0.000000e+00> : vector<2x128xf32>
      %40 = tpu.matmul %38, %39, %cst_28 {dimension_numbers = #tpu.dot_dimension_numbers<[1], [0], [0], [1], [0, 0, 1, 1], [], []>} : vector<2x128xbf16>, vector<128x128xbf16>, vector<2x128xf32> -> vector<2x128xf32>
      %c0_29 = arith.constant 0 : index
      %c0_30 = arith.constant 0 : index
      %41 = vector.load %arg9[%c0_29, %c0_30] : memref<1x128xf32, #tpu.memory_space<vmem>>, vector<1x128xf32>
      %42 = vector.broadcast %41 : vector<1x128xf32> to vector<2x128xf32>
      %43 = arith.addf %40, %42 : vector<2x128xf32>
      %44 = arith.negf %43 : vector<2x128xf32>
      %45 = math.exp %44 : vector<2x128xf32>
      %cst_31 = arith.constant 1.000000e+00 : f32
      %46 = vector.broadcast %cst_31 : f32 to vector<2x128xf32>
      %47 = arith.addf %46, %45 : vector<2x128xf32>
      %48 = arith.divf %46, %47 : vector<2x128xf32>
      %c0_32 = arith.constant 0 : index
      %c0_33 = arith.constant 0 : index
      %49 = vector.load %arg12[%c0_32, %c0_33] : memref<2x128xf32, #tpu.memory_space<vmem>>, vector<2x128xf32>
      tpu.vector_store %arg12[%c0_32, %c0_33], %48 {strides = array<i32>} : memref<2x128xf32, #tpu.memory_space<vmem>>, vector<2x128xf32>,
    } else {
    }
    return
  }
  func.func @transform_0(%arg0: i32) -> (i32, i32) {
    %c0_i32 = arith.constant 0 : i32
    %c0_i32_0 = arith.constant 0 : i32
    return %c0_i32, %arg0 : i32, i32
  }
  func.func @transform_1(%arg0: i32) -> (i32, i32) {
    %c0_i32 = arith.constant 0 : i32
    %c0_i32_0 = arith.constant 0 : i32
    return %arg0, %c0_i32 : i32, i32
  }
  func.func @transform_2(%arg0: i32) -> (i32, i32) {
    %c0_i32 = arith.constant 0 : i32
    %c0_i32_0 = arith.constant 0 : i32
    %c0_i32_1 = arith.constant 0 : i32
    return %c0_i32, %c0_i32_0 : i32, i32
  }
  func.func @transform_3(%arg0: i32) -> (i32, i32) {
    %c0_i32 = arith.constant 0 : i32
    %c0_i32_0 = arith.constant 0 : i32
    %c0_i32_1 = arith.constant 0 : i32
    return %c0_i32, %c0_i32_0 : i32, i32
  }
  func.func @transform_4(%arg0: i32) -> (i32, i32) {
    %c0_i32 = arith.constant 0 : i32
    %c0_i32_0 = arith.constant 0 : i32
    %c0_i32_1 = arith.constant 0 : i32
    return %c0_i32, %c0_i32_0 : i32, i32
  }
  func.func @transform_5(%arg0: i32) -> (i32, i32) {
    %c0_i32 = arith.constant 0 : i32
    %c0_i32_0 = arith.constant 0 : i32
    %c0_i32_1 = arith.constant 0 : i32
    return %c0_i32, %c0_i32_0 : i32, i32
  }
  func.func @transform_6(%arg0: i32) -> (i32, i32) {
    %c0_i32 = arith.constant 0 : i32
    %c0_i32_0 = arith.constant 0 : i32
    %c0_i32_1 = arith.constant 0 : i32
    return %c0_i32, %c0_i32_0 : i32, i32
  }
  func.func @transform_7(%arg0: i32) -> (i32, i32) {
    %c0_i32 = arith.constant 0 : i32
    %c0_i32_0 = arith.constant 0 : i32
    %c0_i32_1 = arith.constant 0 : i32
    return %c0_i32, %c0_i32_0 : i32, i32
  }
  func.func @transform_8(%arg0: i32) -> (i32, i32) {
    %c0_i32 = arith.constant 0 : i32
    %c0_i32_0 = arith.constant 0 : i32
    %c0_i32_1 = arith.constant 0 : i32
    return %c0_i32, %c0_i32_0 : i32, i32
  }
  func.func @transform_9(%arg0: i32) -> (i32, i32) {
    %c0_i32 = arith.constant 0 : i32
    %c0_i32_0 = arith.constant 0 : i32
    %c0_i32_1 = arith.constant 0 : i32
    return %c0_i32, %c0_i32_0 : i32, i32
  }
  func.func @transform_10(%arg0: i32) -> (i32, i32) {
    %c0_i32 = arith.constant 0 : i32
    %c0_i32_0 = arith.constant 0 : i32
    %c0_i32_1 = arith.constant 0 : i32
    return %c0_i32, %c0_i32_0 : i32, i32
  }
  func.func @transform_11(%arg0: i32) -> (i32, i32) {
    %c0_i32 = arith.constant 0 : i32
    %c0_i32_0 = arith.constant 0 : i32
    %c0_i32_1 = arith.constant 0 : i32
    return %c0_i32, %c0_i32_0 : i32, i32
  }
}

</mosaic_0001>

<llo_original>
// kernel: discriminator_forward.5
$region0: #{discriminator_forward.5}
  #allocation0 [shape = 'u32[]', space=smem, size = 0x4, offset = 0x4, fixed_abs, tag = 'smem constant byte address 0x4 - core index']
  #allocation1 [shape = 'u32[144,128]{1,0:T(1,128)}', space=vmem, size = 0x12000, scoped, tag = 'internal scratch']
  %s0 = inlined_call_operand.vmem [shape: bf16[128,16], index: 0, kind: input, shape index: {}]
  %s1 = inlined_call_operand.vmem [shape: bf16[16,32], index: 1, kind: input, shape index: {}]
  %s2 = inlined_call_operand.vmem [shape: f32[1,32], index: 2, kind: input, shape index: {}]
  %s3 = inlined_call_operand.vmem [shape: bf16[128,32], index: 3, kind: output, shape index: {}]
  %s4 = sld [smem:[#allocation0]]
  $region45: #{discriminator_forward.5} parent=0
    _
  %s6 = ssub.s32 1, %s4
  %s7 = scalar_select 0, %s6, %s4
  loop: start=0, step=1, limit=4
  $region2: #{discriminator_forward.5} parent=0 // loop_pre_header
    _
  $region3: #{discriminator_forward.5} parent=0 // loop_header
    %s9 = sphi 0, %s13
    %p10 = scmp.ge.s32.totalorder %s9, 4
    %s16 = sphi 0, %s35
    %s17 = sphi 0, %s31
    %s18 = sphi 0, %s27
    %s19 = sphi 0, %s16
    %s20 = sphi 0, %s17
    %s21 = sphi 0, %s18
    %s22 = sphi 0, %s19
    %s23 = sphi 0, %s20
    %s24 = sphi 0, %s21
    %s40 = sphi 0, %s42
    %s43 = sphi 0, %s40
    %s44 = sphi 0, %s43
    %s60 = sphi 0, %s44
    %s68 = sphi 0, %s70
    %s71 = sphi 0, %s68
    %s72 = sphi 0, %s71
    %s88 = sphi 0, %s72
    %s94 = sphi 0, %s96
    %s97 = sphi 0, %s94
    %s98 = sphi 0, %s97
    %s114 = sphi 0, %s98
    %s122 = sphi 0, %s124
    %s125 = sphi 0, %s122
    %s126 = sphi 0, %s125
    %s142 = sphi 0, %s126
  $region4: #{discriminator_forward.5} parent=0 // loop_header_branch
    %12 = sbr.rel (%p10) target = $region8
  $region5: #{discriminator_forward.5} parent=0 // loop_body
    %s14 = ssub.s32 %s9, 1
    %s15 = ssub.s32 %s9, 2
    %s25 = sadd.s32 1, %s18
    %p26 = scmp.ge.s32.totalorder %s25, 1
    %s27 = scalar_select %p26, 0, %s25
    %s28 = sadd.s32 1, %s17
    %s29 = scalar_select %p26, %s28, %s17
    %p30 = scmp.ge.s32.totalorder %s29, 1
    %s31 = scalar_select %p30, 0, %s29
    %s32 = sadd.s32 1, %s16
    %s33 = scalar_select %p30, %s32, %s16
    %p34 = scmp.ge.s32.totalorder %s33, 2
    %s35 = scalar_select %p34, 0, %s33
    %s36 = ssub.s32 %s16, %s35
    %s37 = ssub.s32 %s18, %s27
    %s38 = sor.u32 %s36, %s37
    %p39 = scmp.eq.s32.totalorder %s38, 0
    %s41 = sadd.s32 %s40, 1
    %s42 = scalar_select %p39, %s40, %s41
    %p45 = pneg %p39
    %p46 = scmp.eq.s32.totalorder %s9, 1
    %p47 = por %p45, %p46
    %p48 = scmp.ne.s32.totalorder %s40, %s43
    %p49 = scmp.eq.s32.totalorder %s9, 0
    %p50 = por %p48, %p49
    %p51 = scmp.ne.s32.totalorder %s40, %s43
    %p52 = scmp.eq.s32.totalorder %s14, 1
    %p53 = por %p51, %p52
    %p54 = scmp.ne.s32.totalorder %s43, %s44
    %p55 = scmp.eq.s32.totalorder %s14, 0
    %p56 = por %p54, %p55
    %p57 = scmp.ne.s32.totalorder %s43, %s44
    %p58 = scmp.eq.s32.totalorder %s15, 1
    %p59 = por %p57, %p58
    %p61 = scmp.ne.s32.totalorder %s44, %s60
    %p62 = scmp.eq.s32.totalorder %s15, 0
    %p63 = por %p61, %p62
    %s64 = ssub.s32 %s18, %s27
    %s65 = ssub.s32 %s17, %s31
    %s66 = sor.u32 %s64, %s65
    %p67 = scmp.eq.s32.totalorder %s66, 0
    %s69 = sadd.s32 %s68, 1
    %s70 = scalar_select %p67, %s68, %s69
    %p73 = pneg %p67
    %p74 = scmp.eq.s32.totalorder %s9, 1
    %p75 = por %p73, %p74
    %p76 = scmp.ne.s32.totalorder %s68, %s71
    %p77 = scmp.eq.s32.totalorder %s9, 0
    %p78 = por %p76, %p77
    %p79 = scmp.ne.s32.totalorder %s68, %s71
    %p80 = scmp.eq.s32.totalorder %s14, 1
    %p81 = por %p79, %p80
    %p82 = scmp.ne.s32.totalorder %s71, %s72
    %p83 = scmp.eq.s32.totalorder %s14, 0
    %p84 = por %p82, %p83
    %p85 = scmp.ne.s32.totalorder %s71, %s72
    %p86 = scmp.eq.s32.totalorder %s15, 1
    %p87 = por %p85, %p86
    %p89 = scmp.ne.s32.totalorder %s72, %s88
    %p90 = scmp.eq.s32.totalorder %s15, 0
    %p91 = por %p89, %p90
    %s92 = ssub.s32 %s17, %s31
    %p93 = scmp.eq.s32.totalorder %s92, 0
    %s95 = sadd.s32 %s94, 1
    %s96 = scalar_select %p93, %s94, %s95
    %p99 = pneg %p93
    %p100 = scmp.eq.s32.totalorder %s9, 1
    %p101 = por %p99, %p100
    %p102 = scmp.ne.s32.totalorder %s94, %s97
    %p103 = scmp.eq.s32.totalorder %s9, 0
    %p104 = por %p102, %p103
    %p105 = scmp.ne.s32.totalorder %s94, %s97
    %p106 = scmp.eq.s32.totalorder %s14, 1
    %p107 = por %p105, %p106
    %p108 = scmp.ne.s32.totalorder %s97, %s98
    %p109 = scmp.eq.s32.totalorder %s14, 0
    %p110 = por %p108, %p109
    %p111 = scmp.ne.s32.totalorder %s97, %s98
    %p112 = scmp.eq.s32.totalorder %s15, 1
    %p113 = por %p111, %p112
    %p115 = scmp.ne.s32.totalorder %s98, %s114
    %p116 = scmp.eq.s32.totalorder %s15, 0
    %p117 = por %p115, %p116
    %s118 = ssub.s32 %s16, %s35
    %s119 = ssub.s32 %s17, %s31
    %s120 = sor.u32 %s118, %s119
    %p121 = scmp.eq.s32.totalorder %s120, 0
    %s123 = sadd.s32 %s122, 1
    %s124 = scalar_select %p121, %s122, %s123
    %p127 = pneg %p121
    %p128 = scmp.eq.s32.totalorder %s9, 1
    %p129 = por %p127, %p128
    %p130 = scmp.ne.s32.totalorder %s122, %s125
    %p131 = scmp.eq.s32.totalorder %s9, 0
    %p132 = por %p130, %p131
    %p133 = scmp.ne.s32.totalorder %s122, %s125
    %p134 = scmp.eq.s32.totalorder %s14, 1
    %p135 = por %p133, %p134
    %p136 = scmp.ne.s32.totalorder %s125, %s126
    %p137 = scmp.eq.s32.totalorder %s14, 0
    %p138 = por %p136, %p137
    %p139 = scmp.ne.s32.totalorder %s125, %s126
    %p140 = scmp.eq.s32.totalorder %s15, 1
    %p141 = por %p139, %p140
    %p143 = scmp.ne.s32.totalorder %s126, %s142
    %p144 = scmp.eq.s32.totalorder %s15, 0
    %p145 = por %p143, %p144
    %p146 = scmp.le.s32.totalorder 1, %s9
    %p147 = scmp.lt.s32.totalorder %s9, 3
    %p148 = pnand %p146, %p147
    %p149 = pneg %p148
    // Predicated region
    $region9: #{discriminator_forward.5} parent=5 // pred_check
      _
    $region10: #{discriminator_forward.5} parent=5 // pred_check_branch
      %151 = sbr.rel (%p148) target = $region12
    $region11: #{discriminator_forward.5} parent=5 // pred_region
      %s152 = ssub.s32 %s9, 1
      // Predicated region
      $region13: #{discriminator_forward.5} parent=11 // pred_check
        %p153 = pneg %p84
      $region14: #{discriminator_forward.5} parent=11 // pred_check_branch
        %155 = sbr.rel (%p153) target = $region16
      $region15: #{discriminator_forward.5} parent=11 // pred_region
        %s156 = smul.u32 2, %s21
        %p157 = scmp.lt.s32.totalorder %s156, 1
        %s158 = scalar_select %p157, %s156, 1
        %p159 = scmp.lt.s32.totalorder %s20, 0
        %s160 = scalar_select %p159, %s20, 0
        %s161 = sadd.s32 %s160, %s158
        %s162 = smul.addr %s161, 4
        %s163 = scalar_lea.vmem %s1, %s162
        %s164 = smul.u32 2, %s21
      $region16: #{discriminator_forward.5} parent=11 // pred_fallthru
        _
      // Predicated region
      $region17: #{discriminator_forward.5} parent=11 // pred_check
        %p165 = pneg %p110
      $region18: #{discriminator_forward.5} parent=11 // pred_check_branch
        %167 = sbr.rel (%p165) target = $region20
      $region19: #{discriminator_forward.5} parent=11 // pred_region
        %p168 = scmp.lt.s32.totalorder %s20, 0
        %s169 = scalar_select %p168, %s20, 0
        %s170 = scalar_lea.vmem %s2, %s169
      $region20: #{discriminator_forward.5} parent=11 // pred_fallthru
        _
    $region12: #{discriminator_forward.5} parent=5 // pred_fallthru
      _
    %p171 = scmp.lt.s32.totalorder %s9, 2
    // Predicated region
    $region21: #{discriminator_forward.5} parent=5 // pred_check
      %p172 = pneg %p171
    $region22: #{discriminator_forward.5} parent=5 // pred_check_branch
      %174 = sbr.rel (%p172) target = $region24
    $region23: #{discriminator_forward.5} parent=5 // pred_region
      // Predicated region
      $region25: #{discriminator_forward.5} parent=23 // pred_check
        %p175 = pneg %p50
      $region26: #{discriminator_forward.5} parent=23 // pred_check_branch
        %177 = sbr.rel (%p175) target = $region28
      $region27: #{discriminator_forward.5} parent=23 // pred_region
        %s178 = smul.u32 8, %s16
        %p179 = scmp.lt.s32.totalorder %s178, 15
        %s180 = scalar_select %p179, %s178, 15
        %p181 = scmp.lt.s32.totalorder %s18, 0
        %s182 = scalar_select %p181, %s18, 0
        %s183 = sadd.s32 %s182, %s180
        %s184 = smul.addr %s183, 4
        %s185 = scalar_lea.vmem %s0, %s184
        %s186 = smul.u32 8, %s16
      $region28: #{discriminator_forward.5} parent=23 // pred_fallthru
        _
    $region24: #{discriminator_forward.5} parent=5 // pred_fallthru
      _
    %p187 = scmp.le.s32.totalorder 1, %s9
    %p188 = scmp.lt.s32.totalorder %s9, 3
    %p189 = pnand %p187, %p188
    %p190 = pneg %p189
    // Predicated region
    $region29: #{discriminator_forward.5} parent=5 // pred_check
      _
    $region30: #{discriminator_forward.5} parent=5 // pred_check_branch
      %192 = sbr.rel (%p189) target = $region32
    $region31: #{discriminator_forward.5} parent=5 // pred_region
      %s193 = ssub.s32 %s9, 1
      %s194 = smul.u32 8, %s19
      %p195 = scmp.lt.s32.totalorder %s194, 15
      %s196 = scalar_select %p195, %s194, 15
      %p197 = scmp.lt.s32.totalorder %s21, 0
      %s198 = scalar_select %p197, %s21, 0
      %s199 = sadd.s32 %s198, %s196
      %s200 = smul.addr %s199, 4
      %s201 = scalar_lea.vmem %s0, %s200
      %p202 = pneg %p56
      %p203 = pneg %p53
      %s204 = smul.u32 2, %s21
      %p205 = scmp.lt.s32.totalorder %s204, 1
      %s206 = scalar_select %p205, %s204, 1
      %p207 = scmp.lt.s32.totalorder %s20, 0
      %s208 = scalar_select %p207, %s20, 0
      %s209 = sadd.s32 %s208, %s206
      %s210 = smul.addr %s209, 4
      %s211 = scalar_lea.vmem %s1, %s210
      %p212 = pneg %p84
      %p213 = pneg %p81
      %p214 = scmp.lt.s32.totalorder %s20, 0
      %s215 = scalar_select %p214, %s20, 0
      %s216 = scalar_lea.vmem %s2, %s215
      %p217 = pneg %p110
      %p218 = pneg %p107
      %p219 = pneg %p138
      %p220 = pneg %p135
      %s221 = smul.u32 8, %s19
      %p222 = scmp.lt.s32.totalorder %s221, 15
      %s223 = scalar_select %p222, %s221, 15
      %p224 = scmp.lt.s32.totalorder %s20, 0
      %s225 = scalar_select %p224, %s20, 0
      %s226 = sadd.s32 %s225, %s223
      %s227 = smul.addr %s226, 4
      %s228 = scalar_lea.vmem %s3, %s227
      %s229 = smul.u32 8, %s19
      %p230 = scmp.lt.s32.totalorder %s229, 15
      %s231 = scalar_select %p230, %s229, 15
      %p232 = scmp.lt.s32.totalorder %s21, 0
      %s233 = scalar_select %p232, %s21, 0
      %s234 = sadd.s32 %s233, %s231
      %s235 = smul.addr %s234, 4
      %s236 = scalar_lea.vmem %s0, %s235
      %s237 = smul.u32 8, %s19
      %s238 = smul.u32 2, %s21
      %p239 = scmp.lt.s32.totalorder %s238, 1
      %s240 = scalar_select %p239, %s238, 1
      %p241 = scmp.lt.s32.totalorder %s20, 0
      %s242 = scalar_select %p241, %s20, 0
      %s243 = sadd.s32 %s242, %s240
      %s244 = smul.addr %s243, 4
      %s245 = scalar_lea.vmem %s1, %s244
      %s246 = smul.u32 2, %s21
      %p247 = scmp.lt.s32.totalorder %s20, 0
      %s248 = scalar_select %p247, %s20, 0
      %s249 = scalar_lea.vmem %s2, %s248
      %s250 = smul.u32 8, %s19
      %p251 = scmp.lt.s32.totalorder %s250, 15
      %s252 = scalar_select %p251, %s250, 15
      %p253 = scmp.lt.s32.totalorder %s20, 0
      %s254 = scalar_select %p253, %s20, 0
      %s255 = sadd.s32 %s254, %s252
      %s256 = smul.addr %s255, 4
      %s257 = scalar_lea.vmem %s3, %s256
      %s258 = smul.u32 8, %s19
      %v260 = vld [vmem:[%s236] sm:$0xf]
      %v261 = vld [vmem:[%s236 + $0x4] sm:$0xf]
      %v262 = vld [vmem:[%s236 + $0x8] sm:$0xf]
      %v263 = vld [vmem:[%s236 + $0xc] sm:$0xf]
      %v264 = vld [vmem:[%s236 + $0x10] sm:$0xf]
      %v265 = vld [vmem:[%s236 + $0x14] sm:$0xf]
      %v266 = vld [vmem:[%s236 + $0x18] sm:$0xf]
      %v267 = vld [vmem:[%s236 + $0x1c] sm:$0xf]
      %v268 = vld [vmem:[%s245] sm:$0xf]
      %v269 = vld [vmem:[%s245 + $0x4] sm:$0xf]
      %v270 = vld [vmem:[%s249] sm:$0x1]
      %v272 = vlaneseq
      %v273 = vshrl.u32 %v272, 7
      %v274 = vsub.s32 0, %v273
      %v275 = vrot.slane %v270, %v274
      %v285 = vunpack.c.l.b16 %v260
      %v286 = vunpack.c.l.b16 %v261
      %v287 = vunpack.c.l.b16 %v262
      %v288 = vunpack.c.l.b16 %v263
      %v289 = vunpack.c.l.b16 %v264
      %v290 = vunpack.c.l.b16 %v265
      %v291 = vunpack.c.l.b16 %v266
      %v292 = vunpack.c.l.b16 %v267
      %v293 = vpack.c.b16 %v286, %v285
      %v294 = vpack.c.b16 %v288, %v287
      %v295 = vpack.c.b16 %v290, %v289
      %v296 = vpack.c.b16 %v292, %v291
      %v299 = vunpack.c.l.b16 %v268
      %v300 = vunpack.c.l.b16 %v269
      %v301 = vpack.c.b16 %v300, %v299
      %vm303 = vcmask 130048
      %v305 = vsel %vm303, %v293, 0
      %v308 = vsel %vm303, %v294, 0
      %v311 = vsel %vm303, %v295, 0
      %v314 = vsel %vm303, %v296, 0
      %316 = vmatprep.subr.bf16.mxu0 0
      %317 = vmatpush1.bf16.msra.mxu0 %v301
      %318 = vmatprep.subr.bf16.mxu0 0
      %319 = vmatpush1.bf16.msra.mxu0 0
      %320 = vmatprep.subr.bf16.mxu0 0
      %321 = vmatpush1.bf16.msra.mxu0 0
      %322 = vmatprep.subr.bf16.mxu0 0
      %323 = vmatpush1.bf16.msra.mxu0 0
      %324 = vmatprep.subr.bf16.mxu0 0
      %325 = vmatpush1.bf16.msra.mxu0 0
      %326 = vmatprep.subr.bf16.mxu0 0
      %327 = vmatpush1.bf16.msra.mxu0 0
      %328 = vmatprep.subr.bf16.mxu0 0
      %329 = vmatpush1.bf16.msra.mxu0 0
      %330 = vmatprep.subr.bf16.mxu0 0
      %331 = vmatpush1.bf16.msra.mxu0 0
      %332 = vmatprep.subr.bf16.mxu0 0
      %333 = vmatpush1.bf16.msra.mxu0 0
      %334 = vmatprep.subr.bf16.mxu0 0
      %335 = vmatpush1.bf16.msra.mxu0 0
      %336 = vmatprep.subr.bf16.mxu0 0
      %337 = vmatpush1.bf16.msra.mxu0 0
      %338 = vmatprep.subr.bf16.mxu0 0
      %339 = vmatpush1.bf16.msra.mxu0 0
      %340 = vmatprep.subr.bf16.mxu0 0
      %341 = vmatpush1.bf16.msra.mxu0 0
      %342 = vmatprep.subr.bf16.mxu0 0
      %343 = vmatpush1.bf16.msra.mxu0 0
      %344 = vmatprep.subr.bf16.mxu0 0
      %345 = vmatpush1.bf16.msra.mxu0 0
      %346 = vmatprep.subr.bf16.mxu0 0
      %347 = vmatpush1.bf16.msra.mxu0 0
      %348 = vmatprep.mubr.bf16.mxu0 0
      %349 = vmatmul.mubr.bf16.gmra.mrb[0].mxu0 %v305
      %v350 = vpop.f32.mrb[0].mxu0
      %v351 = vadd.f32 %v275, %v350
      %v352 = vpop.f32.mrb[0].mxu0
      %v353 = vpop.f32.mrb[0].mxu0
      %v354 = vadd.f32 %v275, %v353
      %v355 = vpop.f32.mrb[0].mxu0
      %356 = vmatprep.mubr.bf16.mxu0 0
      %357 = vmatmul.mubr.bf16.gmra.mrb[0].mxu0 %v308
      %v358 = vpop.f32.mrb[0].mxu0
      %v359 = vadd.f32 %v275, %v358
      %v360 = vpop.f32.mrb[0].mxu0
      %v361 = vpop.f32.mrb[0].mxu0
      %v362 = vadd.f32 %v275, %v361
      %v363 = vpop.f32.mrb[0].mxu0
      %364 = vmatprep.mubr.bf16.mxu0 0
      %365 = vmatmul.mubr.bf16.gmra.mrb[0].mxu0 %v311
      %v366 = vpop.f32.mrb[0].mxu0
      %v367 = vadd.f32 %v275, %v366
      %v368 = vpop.f32.mrb[0].mxu0
      %v369 = vpop.f32.mrb[0].mxu0
      %v370 = vadd.f32 %v275, %v369
      %v371 = vpop.f32.mrb[0].mxu0
      %372 = vmatprep.mubr.bf16.mxu0 0
      %373 = vmatmul.mubr.bf16.gmra.mrb[0].mxu0 %v314
      %v374 = vpop.f32.mrb[0].mxu0
      %v375 = vadd.f32 %v275, %v374
      %v376 = vpop.f32.mrb[0].mxu0
      %v377 = vpop.f32.mrb[0].mxu0
      %v378 = vadd.f32 %v275, %v377
      %v379 = vpop.f32.mrb[0].mxu0
      %380 = vdwg.mxu0
      %vm381 = vcmp.gt.f32.partialorder %v351, 0.0
      %vm382 = vcmp.gt.f32.partialorder %v354, 0.0
      %vm383 = vcmp.gt.f32.partialorder %v359, 0.0
      %vm384 = vcmp.gt.f32.partialorder %v362, 0.0
      %vm385 = vcmp.gt.f32.partialorder %v367, 0.0
      %vm386 = vcmp.gt.f32.partialorder %v370, 0.0
      %vm387 = vcmp.gt.f32.partialorder %v375, 0.0
      %vm388 = vcmp.gt.f32.partialorder %v378, 0.0
      %v389 = vmul.f32 %v351, 0.2
      %v390 = vmul.f32 %v354, 0.2
      %v391 = vmul.f32 %v359, 0.2
      %v392 = vmul.f32 %v362, 0.2
      %v393 = vmul.f32 %v367, 0.2
      %v394 = vmul.f32 %v370, 0.2
      %v395 = vmul.f32 %v375, 0.2
      %v396 = vmul.f32 %v378, 0.2
      %v397 = vsel %vm381, %v351, %v389
      %v398 = vsel %vm382, %v354, %v390
      %v399 = vsel %vm383, %v359, %v391
      %v400 = vsel %vm384, %v362, %v392
      %v401 = vsel %vm385, %v367, %v393
      %v402 = vsel %vm386, %v370, %v394
      %v403 = vsel %vm387, %v375, %v395
      %v404 = vsel %vm388, %v378, %v396
      %v405 = vpack.c.bf16 %v398, %v397
      %v406 = vpack.c.bf16 %v400, %v399
      %v407 = vpack.c.bf16 %v402, %v401
      %v408 = vpack.c.bf16 %v404, %v403
      %v413 = vunpack.c.l.b16 %v405
      %v414 = vunpack.c.h.b16 %v405
      %v415 = vunpack.c.l.b16 %v406
      %v416 = vunpack.c.h.b16 %v406
      %v417 = vunpack.c.l.b16 %v407
      %v418 = vunpack.c.h.b16 %v407
      %v419 = vunpack.c.l.b16 %v408
      %v420 = vunpack.c.h.b16 %v408
      %v421 = vpack.c.b16 %v413, %v413
      %v422 = vpack.c.b16 %v414, %v414
      %v423 = vpack.c.b16 %v415, %v415
      %v424 = vpack.c.b16 %v416, %v416
      %v425 = vpack.c.b16 %v417, %v417
      %v426 = vpack.c.b16 %v418, %v418
      %v427 = vpack.c.b16 %v419, %v419
      %v428 = vpack.c.b16 %v420, %v420
      %vm437 = vcmask 257024
      %438 = vst.msk [vmem:[%s257] sm:$0xf] %vm437, %v421
      %439 = vst.msk [vmem:[%s257 + $0x4] sm:$0xf] %vm437, %v422
      %440 = vst.msk [vmem:[%s257 + $0x8] sm:$0xf] %vm437, %v423
      %441 = vst.msk [vmem:[%s257 + $0xc] sm:$0xf] %vm437, %v424
      %442 = vst.msk [vmem:[%s257 + $0x10] sm:$0xf] %vm437, %v425
      %443 = vst.msk [vmem:[%s257 + $0x14] sm:$0xf] %vm437, %v426
      %444 = vst.msk [vmem:[%s257 + $0x18] sm:$0xf] %vm437, %v427
      %445 = vst.msk [vmem:[%s257 + $0x1c] sm:$0xf] %vm437, %v428
      %s446 = smul.u32 8, %s19
      %p447 = scmp.lt.s32.totalorder %s446, 15
      %s448 = scalar_select %p447, %s446, 15
      %p449 = scmp.lt.s32.totalorder %s20, 0
      %s450 = scalar_select %p449, %s20, 0
      %s451 = sadd.s32 %s450, %s448
      %s452 = smul.addr %s451, 4
      %s453 = scalar_lea.vmem %s3, %s452
      // Predicated region
      $region33: #{discriminator_forward.5} parent=31 // pred_check
        %p454 = pneg %p135
      $region34: #{discriminator_forward.5} parent=31 // pred_check_branch
        %456 = sbr.rel (%p454) target = $region36
      $region35: #{discriminator_forward.5} parent=31 // pred_region
        %s457 = smul.u32 8, %s19
      $region36: #{discriminator_forward.5} parent=31 // pred_fallthru
        _
    $region32: #{discriminator_forward.5} parent=5 // pred_fallthru
      _
    %p458 = scmp.le.s32.totalorder 2, %s9
    // Predicated region
    $region37: #{discriminator_forward.5} parent=5 // pred_check
      %p459 = pneg %p458
    $region38: #{discriminator_forward.5} parent=5 // pred_check_branch
      %461 = sbr.rel (%p459) target = $region40
    $region39: #{discriminator_forward.5} parent=5 // pred_region
      %s462 = ssub.s32 %s9, 2
      // Predicated region
      $region41: #{discriminator_forward.5} parent=39 // pred_check
        %p463 = pneg %p141
      $region42: #{discriminator_forward.5} parent=39 // pred_check_branch
        %465 = sbr.rel (%p463) target = $region44
      $region43: #{discriminator_forward.5} parent=39 // pred_region
        %s466 = smul.u32 8, %s22
        %p467 = scmp.lt.s32.totalorder %s466, 15
        %s468 = scalar_select %p467, %s466, 15
        %p469 = scmp.lt.s32.totalorder %s23, 0
        %s470 = scalar_select %p469, %s23, 0
        %s471 = sadd.s32 %s470, %s468
        %s472 = smul.addr %s471, 4
        %s473 = scalar_lea.vmem %s3, %s472
      $region44: #{discriminator_forward.5} parent=39 // pred_fallthru
        _
    $region40: #{discriminator_forward.5} parent=5 // pred_fallthru
      _
  $region6: #{discriminator_forward.5} parent=0 // loop_footer
    %s13 = sadd.s32 1, %s9
  $region7: #{discriminator_forward.5} parent=0 // loop_footer_branch
    %8 = sbr.rel target = $region3
  $region8: #{discriminator_forward.5} parent=0 // loop_exit
    _

// kernel: discriminator_forward.6
$region0: #{discriminator_forward.6}
  #allocation0 [shape = 'u32[]', space=smem, size = 0x4, offset = 0x4, fixed_abs, tag = 'smem constant byte address 0x4 - core index']
  #allocation1 [shape = 'u32[144,128]{1,0:T(1,128)}', space=vmem, size = 0x12000, scoped, tag = 'internal scratch']
  %s0 = inlined_call_operand.vmem [shape: bf16[32,512], index: 0, kind: input, shape index: {}]
  %s1 = inlined_call_operand.vmem [shape: bf16[512,64], index: 1, kind: input, shape index: {}]
  %s2 = inlined_call_operand.vmem [shape: f32[1,64], index: 2, kind: input, shape index: {}]
  %s3 = inlined_call_operand.vmem [shape: bf16[32,64], index: 3, kind: output, shape index: {}]
  %s4 = sld [smem:[#allocation0]]
  $region45: #{discriminator_forward.6} parent=0
    _
  %s6 = ssub.s32 1, %s4
  %s7 = scalar_select 0, %s6, %s4
  loop: start=0, step=1, limit=4
  $region2: #{discriminator_forward.6} parent=0 // loop_pre_header
    _
  $region3: #{discriminator_forward.6} parent=0 // loop_header
    %s9 = sphi 0, %s13
    %p10 = scmp.ge.s32.totalorder %s9, 4
    %s16 = sphi 0, %s35
    %s17 = sphi 0, %s31
    %s18 = sphi 0, %s27
    %s19 = sphi 0, %s16
    %s20 = sphi 0, %s17
    %s21 = sphi 0, %s18
    %s22 = sphi 0, %s19
    %s23 = sphi 0, %s20
    %s24 = sphi 0, %s21
    %s40 = sphi 0, %s42
    %s43 = sphi 0, %s40
    %s44 = sphi 0, %s43
    %s60 = sphi 0, %s44
    %s68 = sphi 0, %s70
    %s71 = sphi 0, %s68
    %s72 = sphi 0, %s71
    %s88 = sphi 0, %s72
    %s94 = sphi 0, %s96
    %s97 = sphi 0, %s94
    %s98 = sphi 0, %s97
    %s114 = sphi 0, %s98
    %s122 = sphi 0, %s124
    %s125 = sphi 0, %s122
    %s126 = sphi 0, %s125
    %s142 = sphi 0, %s126
  $region4: #{discriminator_forward.6} parent=0 // loop_header_branch
    %12 = sbr.rel (%p10) target = $region8
  $region5: #{discriminator_forward.6} parent=0 // loop_body
    %s14 = ssub.s32 %s9, 1
    %s15 = ssub.s32 %s9, 2
    %s25 = sadd.s32 1, %s18
    %p26 = scmp.ge.s32.totalorder %s25, 1
    %s27 = scalar_select %p26, 0, %s25
    %s28 = sadd.s32 1, %s17
    %s29 = scalar_select %p26, %s28, %s17
    %p30 = scmp.ge.s32.totalorder %s29, 1
    %s31 = scalar_select %p30, 0, %s29
    %s32 = sadd.s32 1, %s16
    %s33 = scalar_select %p30, %s32, %s16
    %p34 = scmp.ge.s32.totalorder %s33, 2
    %s35 = scalar_select %p34, 0, %s33
    %s36 = ssub.s32 %s16, %s35
    %s37 = ssub.s32 %s18, %s27
    %s38 = sor.u32 %s36, %s37
    %p39 = scmp.eq.s32.totalorder %s38, 0
    %s41 = sadd.s32 %s40, 1
    %s42 = scalar_select %p39, %s40, %s41
    %p45 = pneg %p39
    %p46 = scmp.eq.s32.totalorder %s9, 1
    %p47 = por %p45, %p46
    %p48 = scmp.ne.s32.totalorder %s40, %s43
    %p49 = scmp.eq.s32.totalorder %s9, 0
    %p50 = por %p48, %p49
    %p51 = scmp.ne.s32.totalorder %s40, %s43
    %p52 = scmp.eq.s32.totalorder %s14, 1
    %p53 = por %p51, %p52
    %p54 = scmp.ne.s32.totalorder %s43, %s44
    %p55 = scmp.eq.s32.totalorder %s14, 0
    %p56 = por %p54, %p55
    %p57 = scmp.ne.s32.totalorder %s43, %s44
    %p58 = scmp.eq.s32.totalorder %s15, 1
    %p59 = por %p57, %p58
    %p61 = scmp.ne.s32.totalorder %s44, %s60
    %p62 = scmp.eq.s32.totalorder %s15, 0
    %p63 = por %p61, %p62
    %s64 = ssub.s32 %s18, %s27
    %s65 = ssub.s32 %s17, %s31
    %s66 = sor.u32 %s64, %s65
    %p67 = scmp.eq.s32.totalorder %s66, 0
    %s69 = sadd.s32 %s68, 1
    %s70 = scalar_select %p67, %s68, %s69
    %p73 = pneg %p67
    %p74 = scmp.eq.s32.totalorder %s9, 1
    %p75 = por %p73, %p74
    %p76 = scmp.ne.s32.totalorder %s68, %s71
    %p77 = scmp.eq.s32.totalorder %s9, 0
    %p78 = por %p76, %p77
    %p79 = scmp.ne.s32.totalorder %s68, %s71
    %p80 = scmp.eq.s32.totalorder %s14, 1
    %p81 = por %p79, %p80
    %p82 = scmp.ne.s32.totalorder %s71, %s72
    %p83 = scmp.eq.s32.totalorder %s14, 0
    %p84 = por %p82, %p83
    %p85 = scmp.ne.s32.totalorder %s71, %s72
    %p86 = scmp.eq.s32.totalorder %s15, 1
    %p87 = por %p85, %p86
    %p89 = scmp.ne.s32.totalorder %s72, %s88
    %p90 = scmp.eq.s32.totalorder %s15, 0
    %p91 = por %p89, %p90
    %s92 = ssub.s32 %s17, %s31
    %p93 = scmp.eq.s32.totalorder %s92, 0
    %s95 = sadd.s32 %s94, 1
    %s96 = scalar_select %p93, %s94, %s95
    %p99 = pneg %p93
    %p100 = scmp.eq.s32.totalorder %s9, 1
    %p101 = por %p99, %p100
    %p102 = scmp.ne.s32.totalorder %s94, %s97
    %p103 = scmp.eq.s32.totalorder %s9, 0
    %p104 = por %p102, %p103
    %p105 = scmp.ne.s32.totalorder %s94, %s97
    %p106 = scmp.eq.s32.totalorder %s14, 1
    %p107 = por %p105, %p106
    %p108 = scmp.ne.s32.totalorder %s97, %s98
    %p109 = scmp.eq.s32.totalorder %s14, 0
    %p110 = por %p108, %p109
    %p111 = scmp.ne.s32.totalorder %s97, %s98
    %p112 = scmp.eq.s32.totalorder %s15, 1
    %p113 = por %p111, %p112
    %p115 = scmp.ne.s32.totalorder %s98, %s114
    %p116 = scmp.eq.s32.totalorder %s15, 0
    %p117 = por %p115, %p116
    %s118 = ssub.s32 %s16, %s35
    %s119 = ssub.s32 %s17, %s31
    %s120 = sor.u32 %s118, %s119
    %p121 = scmp.eq.s32.totalorder %s120, 0
    %s123 = sadd.s32 %s122, 1
    %s124 = scalar_select %p121, %s122, %s123
    %p127 = pneg %p121
    %p128 = scmp.eq.s32.totalorder %s9, 1
    %p129 = por %p127, %p128
    %p130 = scmp.ne.s32.totalorder %s122, %s125
    %p131 = scmp.eq.s32.totalorder %s9, 0
    %p132 = por %p130, %p131
    %p133 = scmp.ne.s32.totalorder %s122, %s125
    %p134 = scmp.eq.s32.totalorder %s14, 1
    %p135 = por %p133, %p134
    %p136 = scmp.ne.s32.totalorder %s125, %s126
    %p137 = scmp.eq.s32.totalorder %s14, 0
    %p138 = por %p136, %p137
    %p139 = scmp.ne.s32.totalorder %s125, %s126
    %p140 = scmp.eq.s32.totalorder %s15, 1
    %p141 = por %p139, %p140
    %p143 = scmp.ne.s32.totalorder %s126, %s142
    %p144 = scmp.eq.s32.totalorder %s15, 0
    %p145 = por %p143, %p144
    %p146 = scmp.le.s32.totalorder 1, %s9
    %p147 = scmp.lt.s32.totalorder %s9, 3
    %p148 = pnand %p146, %p147
    %p149 = pneg %p148
    // Predicated region
    $region9: #{discriminator_forward.6} parent=5 // pred_check
      _
    $region10: #{discriminator_forward.6} parent=5 // pred_check_branch
      %151 = sbr.rel (%p148) target = $region12
    $region11: #{discriminator_forward.6} parent=5 // pred_region
      %s152 = ssub.s32 %s9, 1
      // Predicated region
      $region13: #{discriminator_forward.6} parent=11 // pred_check
        %p153 = pneg %p84
      $region14: #{discriminator_forward.6} parent=11 // pred_check_branch
        %155 = sbr.rel (%p153) target = $region16
      $region15: #{discriminator_forward.6} parent=11 // pred_region
        %s156 = smul.u32 64, %s21
        %p157 = scmp.lt.s32.totalorder %s156, 63
        %s158 = scalar_select %p157, %s156, 63
        %p159 = scmp.lt.s32.totalorder %s20, 0
        %s160 = scalar_select %p159, %s20, 0
        %s161 = sadd.s32 %s160, %s158
        %s162 = smul.addr %s161, 4
        %s163 = scalar_lea.vmem %s1, %s162
        %s164 = smul.u32 64, %s21
      $region16: #{discriminator_forward.6} parent=11 // pred_fallthru
        _
      // Predicated region
      $region17: #{discriminator_forward.6} parent=11 // pred_check
        %p165 = pneg %p110
      $region18: #{discriminator_forward.6} parent=11 // pred_check_branch
        %167 = sbr.rel (%p165) target = $region20
      $region19: #{discriminator_forward.6} parent=11 // pred_region
        %p168 = scmp.lt.s32.totalorder %s20, 0
        %s169 = scalar_select %p168, %s20, 0
        %s170 = scalar_lea.vmem %s2, %s169
      $region20: #{discriminator_forward.6} parent=11 // pred_fallthru
        _
    $region12: #{discriminator_forward.6} parent=5 // pred_fallthru
      _
    %p171 = scmp.lt.s32.totalorder %s9, 2
    // Predicated region
    $region21: #{discriminator_forward.6} parent=5 // pred_check
      %p172 = pneg %p171
    $region22: #{discriminator_forward.6} parent=5 // pred_check_branch
      %174 = sbr.rel (%p172) target = $region24
    $region23: #{discriminator_forward.6} parent=5 // pred_region
      // Predicated region
      $region25: #{discriminator_forward.6} parent=23 // pred_check
        %p175 = pneg %p50
      $region26: #{discriminator_forward.6} parent=23 // pred_check_branch
        %177 = sbr.rel (%p175) target = $region28
      $region27: #{discriminator_forward.6} parent=23 // pred_region
        %s178 = smul.u32 2, %s16
        %s179 = smul.u32 4, %s18
        %p180 = scmp.lt.s32.totalorder %s178, 3
        %s181 = scalar_select %p180, %s178, 3
        %p182 = scmp.lt.s32.totalorder %s179, 3
        %s183 = scalar_select %p182, %s179, 3
        %s184 = smul.addr %s181, 4
        %s185 = sadd.s32 %s183, %s184
        %s186 = smul.addr %s185, 4
        %s187 = scalar_lea.vmem %s0, %s186
        %s188 = smul.u32 2, %s16
        %s189 = smul.u32 4, %s18
      $region28: #{discriminator_forward.6} parent=23 // pred_fallthru
        _
    $region24: #{discriminator_forward.6} parent=5 // pred_fallthru
      _
    %p190 = scmp.le.s32.totalorder 1, %s9
    %p191 = scmp.lt.s32.totalorder %s9, 3
    %p192 = pnand %p190, %p191
    %p193 = pneg %p192
    // Predicated region
    $region29: #{discriminator_forward.6} parent=5 // pred_check
      _
    $region30: #{discriminator_forward.6} parent=5 // pred_check_branch
      %195 = sbr.rel (%p192) target = $region32
    $region31: #{discriminator_forward.6} parent=5 // pred_region
      %s196 = ssub.s32 %s9, 1
      %s197 = smul.u32 2, %s19
      %s198 = smul.u32 4, %s21
      %p199 = scmp.lt.s32.totalorder %s197, 3
      %s200 = scalar_select %p199, %s197, 3
      %p201 = scmp.lt.s32.totalorder %s198, 3
      %s202 = scalar_select %p201, %s198, 3
      %s203 = smul.addr %s200, 4
      %s204 = sadd.s32 %s202, %s203
      %s205 = smul.addr %s204, 4
      %s206 = scalar_lea.vmem %s0, %s205
      %p207 = pneg %p56
      %p208 = pneg %p53
      %s209 = smul.u32 64, %s21
      %p210 = scmp.lt.s32.totalorder %s209, 63
      %s211 = scalar_select %p210, %s209, 63
      %p212 = scmp.lt.s32.totalorder %s20, 0
      %s213 = scalar_select %p212, %s20, 0
      %s214 = sadd.s32 %s213, %s211
      %s215 = smul.addr %s214, 4
      %s216 = scalar_lea.vmem %s1, %s215
      %p217 = pneg %p84
      %p218 = pneg %p81
      %p219 = scmp.lt.s32.totalorder %s20, 0
      %s220 = scalar_select %p219, %s20, 0
      %s221 = scalar_lea.vmem %s2, %s220
      %p222 = pneg %p110
      %p223 = pneg %p107
      %p224 = pneg %p138
      %p225 = pneg %p135
      %s226 = smul.u32 2, %s19
      %p227 = scmp.lt.s32.totalorder %s226, 3
      %s228 = scalar_select %p227, %s226, 3
      %p229 = scmp.lt.s32.totalorder %s20, 0
      %s230 = scalar_select %p229, %s20, 0
      %s231 = sadd.s32 %s230, %s228
      %s232 = smul.addr %s231, 4
      %s233 = scalar_lea.vmem %s3, %s232
      %s234 = smul.u32 2, %s19
      %s235 = smul.u32 4, %s21
      %p236 = scmp.lt.s32.totalorder %s234, 3
      %s237 = scalar_select %p236, %s234, 3
      %p238 = scmp.lt.s32.totalorder %s235, 3
      %s239 = scalar_select %p238, %s235, 3
      %s240 = smul.addr %s237, 4
      %s241 = sadd.s32 %s239, %s240
      %s242 = smul.addr %s241, 4
      %s243 = scalar_lea.vmem %s0, %s242
      %s244 = smul.u32 2, %s19
      %s245 = smul.u32 4, %s21
      %s246 = smul.u32 64, %s21
      %p247 = scmp.lt.s32.totalorder %s246, 63
      %s248 = scalar_select %p247, %s246, 63
      %p249 = scmp.lt.s32.totalorder %s20, 0
      %s250 = scalar_select %p249, %s20, 0
      %s251 = sadd.s32 %s250, %s248
      %s252 = smul.addr %s251, 4
      %s253 = scalar_lea.vmem %s1, %s252
      %s254 = smul.u32 64, %s21
      %p255 = scmp.lt.s32.totalorder %s20, 0
      %s256 = scalar_select %p255, %s20, 0
      %s257 = scalar_lea.vmem %s2, %s256
      %s258 = smul.u32 2, %s19
      %p259 = scmp.lt.s32.totalorder %s258, 3
      %s260 = scalar_select %p259, %s258, 3
      %p261 = scmp.lt.s32.totalorder %s20, 0
      %s262 = scalar_select %p261, %s20, 0
      %s263 = sadd.s32 %s262, %s260
      %s264 = smul.addr %s263, 4
      %s265 = scalar_lea.vmem %s3, %s264
      %s266 = smul.u32 2, %s19
      %v268 = vld [vmem:[%s243] sm:$0xff]
      %v269 = vld [vmem:[%s243 + $0x8] sm:$0xff]
      %v270 = vld [vmem:[%s243 + $0x10] sm:$0xff]
      %v271 = vld [vmem:[%s243 + $0x18] sm:$0xff]
      %v272 = vld [vmem:[%s253] sm:$0xf]
      %v273 = vld [vmem:[%s253 + $0x4] sm:$0xf]
      %v274 = vld [vmem:[%s253 + $0x8] sm:$0xf]
      %v275 = vld [vmem:[%s253 + $0xc] sm:$0xf]
      %v276 = vld [vmem:[%s253 + $0x10] sm:$0xf]
      %v277 = vld [vmem:[%s253 + $0x14] sm:$0xf]
      %v278 = vld [vmem:[%s253 + $0x18] sm:$0xf]
      %v279 = vld [vmem:[%s253 + $0x1c] sm:$0xf]
      %v280 = vld [vmem:[%s253 + $0x20] sm:$0xf]
      %v281 = vld [vmem:[%s253 + $0x24] sm:$0xf]
      %v282 = vld [vmem:[%s253 + $0x28] sm:$0xf]
      %v283 = vld [vmem:[%s253 + $0x2c] sm:$0xf]
      %v284 = vld [vmem:[%s253 + $0x30] sm:$0xf]
      %v285 = vld [vmem:[%s253 + $0x34] sm:$0xf]
      %v286 = vld [vmem:[%s253 + $0x38] sm:$0xf]
      %v287 = vld [vmem:[%s253 + $0x3c] sm:$0xf]
      %v288 = vld [vmem:[%s253 + $0x40] sm:$0xf]
      %v289 = vld [vmem:[%s253 + $0x44] sm:$0xf]
      %v290 = vld [vmem:[%s253 + $0x48] sm:$0xf]
      %v291 = vld [vmem:[%s253 + $0x4c] sm:$0xf]
      %v292 = vld [vmem:[%s253 + $0x50] sm:$0xf]
      %v293 = vld [vmem:[%s253 + $0x54] sm:$0xf]
      %v294 = vld [vmem:[%s253 + $0x58] sm:$0xf]
      %v295 = vld [vmem:[%s253 + $0x5c] sm:$0xf]
      %v296 = vld [vmem:[%s253 + $0x60] sm:$0xf]
      %v297 = vld [vmem:[%s253 + $0x64] sm:$0xf]
      %v298 = vld [vmem:[%s253 + $0x68] sm:$0xf]
      %v299 = vld [vmem:[%s253 + $0x6c] sm:$0xf]
      %v300 = vld [vmem:[%s253 + $0x70] sm:$0xf]
      %v301 = vld [vmem:[%s253 + $0x74] sm:$0xf]
      %v302 = vld [vmem:[%s253 + $0x78] sm:$0xf]
      %v303 = vld [vmem:[%s253 + $0x7c] sm:$0xf]
      %v304 = vld [vmem:[%s253 + $0x80] sm:$0xf]
      %v305 = vld [vmem:[%s253 + $0x84] sm:$0xf]
      %v306 = vld [vmem:[%s253 + $0x88] sm:$0xf]
      %v307 = vld [vmem:[%s253 + $0x8c] sm:$0xf]
      %v308 = vld [vmem:[%s253 + $0x90] sm:$0xf]
      %v309 = vld [vmem:[%s253 + $0x94] sm:$0xf]
      %v310 = vld [vmem:[%s253 + $0x98] sm:$0xf]
      %v311 = vld [vmem:[%s253 + $0x9c] sm:$0xf]
      %v312 = vld [vmem:[%s253 + $0xa0] sm:$0xf]
      %v313 = vld [vmem:[%s253 + $0xa4] sm:$0xf]
      %v314 = vld [vmem:[%s253 + $0xa8] sm:$0xf]
      %v315 = vld [vmem:[%s253 + $0xac] sm:$0xf]
      %v316 = vld [vmem:[%s253 + $0xb0] sm:$0xf]
      %v317 = vld [vmem:[%s253 + $0xb4] sm:$0xf]
      %v318 = vld [vmem:[%s253 + $0xb8] sm:$0xf]
      %v319 = vld [vmem:[%s253 + $0xbc] sm:$0xf]
      %v320 = vld [vmem:[%s253 + $0xc0] sm:$0xf]
      %v321 = vld [vmem:[%s253 + $0xc4] sm:$0xf]
      %v322 = vld [vmem:[%s253 + $0xc8] sm:$0xf]
      %v323 = vld [vmem:[%s253 + $0xcc] sm:$0xf]
      %v324 = vld [vmem:[%s253 + $0xd0] sm:$0xf]
      %v325 = vld [vmem:[%s253 + $0xd4] sm:$0xf]
      %v326 = vld [vmem:[%s253 + $0xd8] sm:$0xf]
      %v327 = vld [vmem:[%s253 + $0xdc] sm:$0xf]
      %v328 = vld [vmem:[%s253 + $0xe0] sm:$0xf]
      %v329 = vld [vmem:[%s253 + $0xe4] sm:$0xf]
      %v330 = vld [vmem:[%s253 + $0xe8] sm:$0xf]
      %v331 = vld [vmem:[%s253 + $0xec] sm:$0xf]
      %v332 = vld [vmem:[%s253 + $0xf0] sm:$0xf]
      %v333 = vld [vmem:[%s253 + $0xf4] sm:$0xf]
      %v334 = vld [vmem:[%s253 + $0xf8] sm:$0xf]
      %v335 = vld [vmem:[%s253 + $0xfc] sm:$0xf]
      %v336 = vld [vmem:[%s257] sm:$0x1]
      %v338 = vlaneseq
      %v339 = vshrl.u32 %v338, 7
      %v340 = vsub.s32 0, %v339
      %v341 = vrot.slane %v336, %v340
      %v347 = vunpack.c.l.b16 %v268
      %v348 = vunpack.c.h.b16 %v268
      %v349 = vunpack.c.l.b16 %v269
      %v350 = vunpack.c.h.b16 %v269
      %v351 = vunpack.c.l.b16 %v270
      %v352 = vunpack.c.h.b16 %v270
      %v353 = vunpack.c.l.b16 %v271
      %v354 = vunpack.c.h.b16 %v271
      %v355 = vpack.c.b16 %v351, %v347
      %v356 = vpack.c.b16 %v352, %v348
      %v357 = vpack.c.b16 %v353, %v349
      %v358 = vpack.c.b16 %v354, %v350
      %v427 = vunpack.c.l.b16 %v272
      %v428 = vunpack.c.l.b16 %v273
      %v429 = vunpack.c.l.b16 %v274
      %v430 = vunpack.c.l.b16 %v275
      %v431 = vunpack.c.l.b16 %v276
      %v432 = vunpack.c.l.b16 %v277
      %v433 = vunpack.c.l.b16 %v278
      %v434 = vunpack.c.l.b16 %v279
      %v435 = vunpack.c.l.b16 %v280
      %v436 = vunpack.c.l.b16 %v281
      %v437 = vunpack.c.l.b16 %v282
      %v438 = vunpack.c.l.b16 %v283
      %v439 = vunpack.c.l.b16 %v284
      %v440 = vunpack.c.l.b16 %v285
      %v441 = vunpack.c.l.b16 %v286
      %v442 = vunpack.c.l.b16 %v287
      %v443 = vunpack.c.l.b16 %v288
      %v444 = vunpack.c.l.b16 %v289
      %v445 = vunpack.c.l.b16 %v290
      %v446 = vunpack.c.l.b16 %v291
      %v447 = vunpack.c.l.b16 %v292
      %v448 = vunpack.c.l.b16 %v293
      %v449 = vunpack.c.l.b16 %v294
      %v450 = vunpack.c.l.b16 %v295
      %v451 = vunpack.c.l.b16 %v296
      %v452 = vunpack.c.l.b16 %v297
      %v453 = vunpack.c.l.b16 %v298
      %v454 = vunpack.c.l.b16 %v299
      %v455 = vunpack.c.l.b16 %v300
      %v456 = vunpack.c.l.b16 %v301
      %v457 = vunpack.c.l.b16 %v302
      %v458 = vunpack.c.l.b16 %v303
      %v459 = vunpack.c.l.b16 %v304
      %v460 = vunpack.c.l.b16 %v305
      %v461 = vunpack.c.l.b16 %v306
      %v462 = vunpack.c.l.b16 %v307
      %v463 = vunpack.c.l.b16 %v308
      %v464 = vunpack.c.l.b16 %v309
      %v465 = vunpack.c.l.b16 %v310
      %v466 = vunpack.c.l.b16 %v311
      %v467 = vunpack.c.l.b16 %v312
      %v468 = vunpack.c.l.b16 %v313
      %v469 = vunpack.c.l.b16 %v314
      %v470 = vunpack.c.l.b16 %v315
      %v471 = vunpack.c.l.b16 %v316
      %v472 = vunpack.c.l.b16 %v317
      %v473 = vunpack.c.l.b16 %v318
      %v474 = vunpack.c.l.b16 %v319
      %v475 = vunpack.c.l.b16 %v320
      %v476 = vunpack.c.l.b16 %v321
      %v477 = vunpack.c.l.b16 %v322
      %v478 = vunpack.c.l.b16 %v323
      %v479 = vunpack.c.l.b16 %v324
      %v480 = vunpack.c.l.b16 %v325
      %v481 = vunpack.c.l.b16 %v326
      %v482 = vunpack.c.l.b16 %v327
      %v483 = vunpack.c.l.b16 %v328
      %v484 = vunpack.c.l.b16 %v329
      %v485 = vunpack.c.l.b16 %v330
      %v486 = vunpack.c.l.b16 %v331
      %v487 = vunpack.c.l.b16 %v332
      %v488 = vunpack.c.l.b16 %v333
      %v489 = vunpack.c.l.b16 %v334
      %v490 = vunpack.c.l.b16 %v335
      %v491 = vpack.c.b16 %v428, %v427
      %v492 = vpack.c.b16 %v430, %v429
      %v493 = vpack.c.b16 %v432, %v431
      %v494 = vpack.c.b16 %v434, %v433
      %v495 = vpack.c.b16 %v436, %v435
      %v496 = vpack.c.b16 %v438, %v437
      %v497 = vpack.c.b16 %v440, %v439
      %v498 = vpack.c.b16 %v442, %v441
      %v499 = vpack.c.b16 %v444, %v443
      %v500 = vpack.c.b16 %v446, %v445
      %v501 = vpack.c.b16 %v448, %v447
      %v502 = vpack.c.b16 %v450, %v449
      %v503 = vpack.c.b16 %v452, %v451
      %v504 = vpack.c.b16 %v454, %v453
      %v505 = vpack.c.b16 %v456, %v455
      %v506 = vpack.c.b16 %v458, %v457
      %v507 = vpack.c.b16 %v460, %v459
      %v508 = vpack.c.b16 %v462, %v461
      %v509 = vpack.c.b16 %v464, %v463
      %v510 = vpack.c.b16 %v466, %v465
      %v511 = vpack.c.b16 %v468, %v467
      %v512 = vpack.c.b16 %v470, %v469
      %v513 = vpack.c.b16 %v472, %v471
      %v514 = vpack.c.b16 %v474, %v473
      %v515 = vpack.c.b16 %v476, %v475
      %v516 = vpack.c.b16 %v478, %v477
      %v517 = vpack.c.b16 %v480, %v479
      %v518 = vpack.c.b16 %v482, %v481
      %v519 = vpack.c.b16 %v484, %v483
      %v520 = vpack.c.b16 %v486, %v485
      %v521 = vpack.c.b16 %v488, %v487
      %v522 = vpack.c.b16 %v490, %v489
      %555 = vmatprep.subr.bf16.mxu0 0
      %556 = vmatpush1.bf16.msra.mxu0 %v491
      %557 = vmatprep.subr.bf16.mxu0 0
      %558 = vmatpush1.bf16.msra.mxu0 %v492
      %559 = vmatprep.subr.bf16.mxu0 0
      %560 = vmatpush1.bf16.msra.mxu0 %v493
      %561 = vmatprep.subr.bf16.mxu0 0
      %562 = vmatpush1.bf16.msra.mxu0 %v494
      %563 = vmatprep.subr.bf16.mxu0 0
      %564 = vmatpush1.bf16.msra.mxu0 %v495
      %565 = vmatprep.subr.bf16.mxu0 0
      %566 = vmatpush1.bf16.msra.mxu0 %v496
      %567 = vmatprep.subr.bf16.mxu0 0
      %568 = vmatpush1.bf16.msra.mxu0 %v497
      %569 = vmatprep.subr.bf16.mxu0 0
      %570 = vmatpush1.bf16.msra.mxu0 %v498
      %571 = vmatprep.subr.bf16.mxu0 0
      %572 = vmatpush1.bf16.msra.mxu0 %v499
      %573 = vmatprep.subr.bf16.mxu0 0
      %574 = vmatpush1.bf16.msra.mxu0 %v500
      %575 = vmatprep.subr.bf16.mxu0 0
      %576 = vmatpush1.bf16.msra.mxu0 %v501
      %577 = vmatprep.subr.bf16.mxu0 0
      %578 = vmatpush1.bf16.msra.mxu0 %v502
      %579 = vmatprep.subr.bf16.mxu0 0
      %580 = vmatpush1.bf16.msra.mxu0 %v503
      %581 = vmatprep.subr.bf16.mxu0 0
      %582 = vmatpush1.bf16.msra.mxu0 %v504
      %583 = vmatprep.subr.bf16.mxu0 0
      %584 = vmatpush1.bf16.msra.mxu0 %v505
      %585 = vmatprep.subr.bf16.mxu0 0
      %586 = vmatpush1.bf16.msra.mxu0 %v506
      %587 = vmatprep.mubr.bf16.mxu0 %v356
      %588 = vmatmul.mubr.bf16.gmra.mrb[0].mxu0 %v355
      %v589 = vpop.f32.mrb[0].mxu0
      %v590 = vadd.f32 %v341, %v589
      %v591 = vpop.f32.mrb[0].mxu0
      %v592 = vpop.f32.mrb[0].mxu0
      %v593 = vadd.f32 %v341, %v592
      %v594 = vpop.f32.mrb[0].mxu0
      %595 = vdwg.mxu0
      %596 = vmatprep.subr.bf16.mxu0 0
      %597 = vmatpush1.bf16.msra.mxu0 %v507
      %598 = vmatprep.subr.bf16.mxu0 0
      %599 = vmatpush1.bf16.msra.mxu0 %v508
      %600 = vmatprep.subr.bf16.mxu0 0
      %601 = vmatpush1.bf16.msra.mxu0 %v509
      %602 = vmatprep.subr.bf16.mxu0 0
      %603 = vmatpush1.bf16.msra.mxu0 %v510
      %604 = vmatprep.subr.bf16.mxu0 0
      %605 = vmatpush1.bf16.msra.mxu0 %v511
      %606 = vmatprep.subr.bf16.mxu0 0
      %607 = vmatpush1.bf16.msra.mxu0 %v512
      %608 = vmatprep.subr.bf16.mxu0 0
      %609 = vmatpush1.bf16.msra.mxu0 %v513
      %610 = vmatprep.subr.bf16.mxu0 0
      %611 = vmatpush1.bf16.msra.mxu0 %v514
      %612 = vmatprep.subr.bf16.mxu0 0
      %613 = vmatpush1.bf16.msra.mxu0 %v515
      %614 = vmatprep.subr.bf16.mxu0 0
      %615 = vmatpush1.bf16.msra.mxu0 %v516
      %616 = vmatprep.subr.bf16.mxu0 0
      %617 = vmatpush1.bf16.msra.mxu0 %v517
      %618 = vmatprep.subr.bf16.mxu0 0
      %619 = vmatpush1.bf16.msra.mxu0 %v518
      %620 = vmatprep.subr.bf16.mxu0 0
      %621 = vmatpush1.bf16.msra.mxu0 %v519
      %622 = vmatprep.subr.bf16.mxu0 0
      %623 = vmatpush1.bf16.msra.mxu0 %v520
      %624 = vmatprep.subr.bf16.mxu0 0
      %625 = vmatpush1.bf16.msra.mxu0 %v521
      %626 = vmatprep.subr.bf16.mxu0 0
      %627 = vmatpush1.bf16.msra.mxu0 %v522
      %628 = vmatprep.mubr.bf16.mxu0 %v358
      %629 = vmatmul.mubr.bf16.gmra.mrb[0].mxu0 %v357
      %v630 = vpop.f32.mrb[0].mxu0
      %v631 = vadd.f32 %v590, %v630
      %v632 = vpop.f32.mrb[0].mxu0
      %v633 = vpop.f32.mrb[0].mxu0
      %v634 = vadd.f32 %v593, %v633
      %v635 = vpop.f32.mrb[0].mxu0
      %636 = vdwg.mxu0
      %vm637 = vcmp.gt.f32.partialorder %v631, 0.0
      %vm638 = vcmp.gt.f32.partialorder %v634, 0.0
      %v639 = vmul.f32 %v631, 0.2
      %v640 = vmul.f32 %v634, 0.2
      %v641 = vsel %vm637, %v631, %v639
      %v642 = vsel %vm638, %v634, %v640
      %v643 = vpack.c.bf16 %v642, %v641
      %v645 = vunpack.c.l.b16 %v643
      %v646 = vunpack.c.h.b16 %v643
      %v647 = vpack.c.b16 %v645, %v645
      %v648 = vpack.c.b16 %v646, %v646
      %vm651 = vcmask 519168
      %652 = vst.msk [vmem:[%s265] sm:$0xf] %vm651, %v647
      %653 = vst.msk [vmem:[%s265 + $0x4] sm:$0xf] %vm651, %v648
      %s654 = smul.u32 2, %s19
      %p655 = scmp.lt.s32.totalorder %s654, 3
      %s656 = scalar_select %p655, %s654, 3
      %p657 = scmp.lt.s32.totalorder %s20, 0
      %s658 = scalar_select %p657, %s20, 0
      %s659 = sadd.s32 %s658, %s656
      %s660 = smul.addr %s659, 4
      %s661 = scalar_lea.vmem %s3, %s660
      // Predicated region
      $region33: #{discriminator_forward.6} parent=31 // pred_check
        %p662 = pneg %p135
      $region34: #{discriminator_forward.6} parent=31 // pred_check_branch
        %664 = sbr.rel (%p662) target = $region36
      $region35: #{discriminator_forward.6} parent=31 // pred_region
        %s665 = smul.u32 2, %s19
      $region36: #{discriminator_forward.6} parent=31 // pred_fallthru
        _
    $region32: #{discriminator_forward.6} parent=5 // pred_fallthru
      _
    %p666 = scmp.le.s32.totalorder 2, %s9
    // Predicated region
    $region37: #{discriminator_forward.6} parent=5 // pred_check
      %p667 = pneg %p666
    $region38: #{discriminator_forward.6} parent=5 // pred_check_branch
      %669 = sbr.rel (%p667) target = $region40
    $region39: #{discriminator_forward.6} parent=5 // pred_region
      %s670 = ssub.s32 %s9, 2
      // Predicated region
      $region41: #{discriminator_forward.6} parent=39 // pred_check
        %p671 = pneg %p141
      $region42: #{discriminator_forward.6} parent=39 // pred_check_branch
        %673 = sbr.rel (%p671) target = $region44
      $region43: #{discriminator_forward.6} parent=39 // pred_region
        %s674 = smul.u32 2, %s22
        %p675 = scmp.lt.s32.totalorder %s674, 3
        %s676 = scalar_select %p675, %s674, 3
        %p677 = scmp.lt.s32.totalorder %s23, 0
        %s678 = scalar_select %p677, %s23, 0
        %s679 = sadd.s32 %s678, %s676
        %s680 = smul.addr %s679, 4
        %s681 = scalar_lea.vmem %s3, %s680
      $region44: #{discriminator_forward.6} parent=39 // pred_fallthru
        _
    $region40: #{discriminator_forward.6} parent=5 // pred_fallthru
      _
  $region6: #{discriminator_forward.6} parent=0 // loop_footer
    %s13 = sadd.s32 1, %s9
  $region7: #{discriminator_forward.6} parent=0 // loop_footer_branch
    %8 = sbr.rel target = $region3
  $region8: #{discriminator_forward.6} parent=0 // loop_exit
    _

// kernel: discriminator_forward.8
$region0: #{discriminator_forward.8}
  #allocation0 [shape = 'u32[]', space=smem, size = 0x4, offset = 0x4, fixed_abs, tag = 'smem constant byte address 0x4 - core index']
  #allocation1 [shape = 'u32[144,128]{1,0:T(1,128)}', space=vmem, size = 0x12000, scoped, tag = 'internal scratch']
  %s0 = inlined_call_operand.vmem [shape: bf16[8,128], index: 0, kind: input, shape index: {}]
  %s1 = inlined_call_operand.vmem [shape: f32[1,128], index: 1, kind: input, shape index: {}]
  %s2 = inlined_call_operand.vmem [shape: f32[1,128], index: 2, kind: input, shape index: {}]
  %s3 = inlined_call_operand.vmem [shape: f32[1,128], index: 3, kind: input, shape index: {}]
  %s4 = inlined_call_operand.vmem [shape: f32[1,128], index: 4, kind: input, shape index: {}]
  %s5 = inlined_call_operand.vmem [shape: bf16[8,128], index: 5, kind: output, shape index: {}]
  %s6 = sld [smem:[#allocation0]]
  $region30: #{discriminator_forward.8} parent=0
    _
  %s8 = ssub.s32 1, %s6
  %s9 = scalar_select 0, %s8, %s6
  // Predicated region
  $region2: #{discriminator_forward.8} parent=0 // pred_check
    _
  $region3: #{discriminator_forward.8} parent=0 // pred_check_branch
    %11 = sbr.rel (0) target = $region5
  $region4: #{discriminator_forward.8} parent=0 // pred_region
    _
  $region5: #{discriminator_forward.8} parent=0 // pred_fallthru
    _
  // Predicated region
  $region6: #{discriminator_forward.8} parent=0 // pred_check
    _
  $region7: #{discriminator_forward.8} parent=0 // pred_check_branch
    %13 = sbr.rel (0) target = $region9
  $region8: #{discriminator_forward.8} parent=0 // pred_region
    _
  $region9: #{discriminator_forward.8} parent=0 // pred_fallthru
    _
  // Predicated region
  $region10: #{discriminator_forward.8} parent=0 // pred_check
    _
  $region11: #{discriminator_forward.8} parent=0 // pred_check_branch
    %15 = sbr.rel (0) target = $region13
  $region12: #{discriminator_forward.8} parent=0 // pred_region
    _
  $region13: #{discriminator_forward.8} parent=0 // pred_fallthru
    _
  // Predicated region
  $region14: #{discriminator_forward.8} parent=0 // pred_check
    _
  $region15: #{discriminator_forward.8} parent=0 // pred_check_branch
    %17 = sbr.rel (0) target = $region17
  $region16: #{discriminator_forward.8} parent=0 // pred_region
    _
  $region17: #{discriminator_forward.8} parent=0 // pred_fallthru
    _
  // Predicated region
  $region18: #{discriminator_forward.8} parent=0 // pred_check
    _
  $region19: #{discriminator_forward.8} parent=0 // pred_check_branch
    %19 = sbr.rel (0) target = $region21
  $region20: #{discriminator_forward.8} parent=0 // pred_region
    _
  $region21: #{discriminator_forward.8} parent=0 // pred_fallthru
    _
  %v20 = vld [vmem:[%s1] sm:$0x1]
  %v21 = vmul.f32 %v20, 0.125
  %v22 = vld [vmem:[%s2] sm:$0x1]
  %v23 = vmul.f32 %v22, 0.125
  %v24 = vmul.f32 %v21, %v21
  %v25 = vsub.f32 %v23, %v24
  %v26 = vld [vmem:[%s3] sm:$0x1]
  %v27 = vadd.f32 %v25, 1e-05
  %v28 = vrsqrt.pop %v27
  %v29 = vmul.f32 %v26, %v28
  %v30 = vld [vmem:[%s4] sm:$0x1]
  %v31 = vmul.f32 %v21, %v29
  %v32 = vsub.f32 %v30, %v31
  %v33 = vld [vmem:[%s0] sm:$0xf]
  %v34 = vunpack.c.l.bf16 %v33
  %v36 = vlaneseq
  %v37 = vshrl.u32 %v36, 7
  %v38 = vsub.s32 0, %v37
  %v39 = vrot.slane %v29, %v38
  %v41 = vmul.f32 %v34, %v39
  %v43 = vlaneseq
  %v44 = vshrl.u32 %v43, 7
  %v45 = vsub.s32 0, %v44
  %v46 = vrot.slane %v32, %v45
  %v48 = vadd.f32 %v41, %v46
  %vm49 = vcmp.gt.f32.partialorder %v48, 0.0
  %v50 = vmul.f32 %v48, 0.2
  %v51 = vsel %vm49, %v48, %v50
  %v52 = vpack.c.bf16 %v51, %v51
  %53 = vst [vmem:[%s5] sm:$0xf] %v52
  // Predicated region
  $region22: #{discriminator_forward.8} parent=0 // pred_check
    _
  $region23: #{discriminator_forward.8} parent=0 // pred_check_branch
    %55 = sbr.rel (0) target = $region25
  $region24: #{discriminator_forward.8} parent=0 // pred_region
    _
  $region25: #{discriminator_forward.8} parent=0 // pred_fallthru
    _
  // Predicated region
  $region26: #{discriminator_forward.8} parent=0 // pred_check
    _
  $region27: #{discriminator_forward.8} parent=0 // pred_check_branch
    %57 = sbr.rel (0) target = $region29
  $region28: #{discriminator_forward.8} parent=0 // pred_region
    _
  $region29: #{discriminator_forward.8} parent=0 // pred_fallthru
    _

// kernel: discriminator_forward.7
$region0: #{discriminator_forward.7}
  #allocation0 [shape = 'u32[]', space=smem, size = 0x4, offset = 0x4, fixed_abs, tag = 'smem constant byte address 0x4 - core index']
  #allocation1 [shape = 'u32[144,128]{1,0:T(1,128)}', space=vmem, size = 0x12000, scoped, tag = 'internal scratch']
  %s0 = inlined_call_operand.vmem [shape: bf16[8,1024], index: 0, kind: input, shape index: {}]
  %s1 = inlined_call_operand.vmem [shape: bf16[1024,128], index: 1, kind: input, shape index: {}]
  %s2 = inlined_call_operand.vmem [shape: f32[1,128], index: 2, kind: input, shape index: {}]
  %s3 = inlined_call_operand.vmem [shape: bf16[8,128], index: 3, kind: output, shape index: {0}]
  %s4 = inlined_call_operand.vmem [shape: f32[1,128], index: 4, kind: output, shape index: {1}]
  %s5 = inlined_call_operand.vmem [shape: f32[1,128], index: 5, kind: output, shape index: {2}]
  %6 = xla_tuple %s3, %s4, %s5
  %s7 = sld [smem:[#allocation0]]
  $region50: #{discriminator_forward.7} parent=0
    _
  %s9 = ssub.s32 1, %s7
  %s10 = scalar_select 0, %s9, %s7
  // Predicated region
  $region2: #{discriminator_forward.7} parent=0 // pred_check
    _
  $region3: #{discriminator_forward.7} parent=0 // pred_check_branch
    %12 = sbr.rel (0) target = $region5
  $region4: #{discriminator_forward.7} parent=0 // pred_region
    _
  $region5: #{discriminator_forward.7} parent=0 // pred_fallthru
    _
  // Predicated region
  $region6: #{discriminator_forward.7} parent=0 // pred_check
    _
  $region7: #{discriminator_forward.7} parent=0 // pred_check_branch
    %14 = sbr.rel (0) target = $region9
  $region8: #{discriminator_forward.7} parent=0 // pred_region
    _
  $region9: #{discriminator_forward.7} parent=0 // pred_fallthru
    _
  // Predicated region
  $region10: #{discriminator_forward.7} parent=0 // pred_check
    _
  $region11: #{discriminator_forward.7} parent=0 // pred_check_branch
    %16 = sbr.rel (0) target = $region13
  $region12: #{discriminator_forward.7} parent=0 // pred_region
    _
  $region13: #{discriminator_forward.7} parent=0 // pred_fallthru
    _
  %v18 = vld [vmem:[%s0] sm:$0xff]
  %v19 = vld [vmem:[%s0 + $0x8] sm:$0xff]
  %v20 = vld [vmem:[%s0 + $0x10] sm:$0xff]
  %v21 = vld [vmem:[%s0 + $0x18] sm:$0xff]
  %v22 = vld [vmem:[%s1] sm:$0xf]
  %v23 = vld [vmem:[%s1 + $0x4] sm:$0xf]
  %v24 = vld [vmem:[%s1 + $0x8] sm:$0xf]
  %v25 = vld [vmem:[%s1 + $0xc] sm:$0xf]
  %v26 = vld [vmem:[%s1 + $0x10] sm:$0xf]
  %v27 = vld [vmem:[%s1 + $0x14] sm:$0xf]
  %v28 = vld [vmem:[%s1 + $0x18] sm:$0xf]
  %v29 = vld [vmem:[%s1 + $0x1c] sm:$0xf]
  %v30 = vld [vmem:[%s1 + $0x20] sm:$0xf]
  %v31 = vld [vmem:[%s1 + $0x24] sm:$0xf]
  %v32 = vld [vmem:[%s1 + $0x28] sm:$0xf]
  %v33 = vld [vmem:[%s1 + $0x2c] sm:$0xf]
  %v34 = vld [vmem:[%s1 + $0x30] sm:$0xf]
  %v35 = vld [vmem:[%s1 + $0x34] sm:$0xf]
  %v36 = vld [vmem:[%s1 + $0x38] sm:$0xf]
  %v37 = vld [vmem:[%s1 + $0x3c] sm:$0xf]
  %v38 = vld [vmem:[%s1 + $0x40] sm:$0xf]
  %v39 = vld [vmem:[%s1 + $0x44] sm:$0xf]
  %v40 = vld [vmem:[%s1 + $0x48] sm:$0xf]
  %v41 = vld [vmem:[%s1 + $0x4c] sm:$0xf]
  %v42 = vld [vmem:[%s1 + $0x50] sm:$0xf]
  %v43 = vld [vmem:[%s1 + $0x54] sm:$0xf]
  %v44 = vld [vmem:[%s1 + $0x58] sm:$0xf]
  %v45 = vld [vmem:[%s1 + $0x5c] sm:$0xf]
  %v46 = vld [vmem:[%s1 + $0x60] sm:$0xf]
  %v47 = vld [vmem:[%s1 + $0x64] sm:$0xf]
  %v48 = vld [vmem:[%s1 + $0x68] sm:$0xf]
  %v49 = vld [vmem:[%s1 + $0x6c] sm:$0xf]
  %v50 = vld [vmem:[%s1 + $0x70] sm:$0xf]
  %v51 = vld [vmem:[%s1 + $0x74] sm:$0xf]
  %v52 = vld [vmem:[%s1 + $0x78] sm:$0xf]
  %v53 = vld [vmem:[%s1 + $0x7c] sm:$0xf]
  %v54 = vld [vmem:[%s1 + $0x80] sm:$0xf]
  %v55 = vld [vmem:[%s1 + $0x84] sm:$0xf]
  %v56 = vld [vmem:[%s1 + $0x88] sm:$0xf]
  %v57 = vld [vmem:[%s1 + $0x8c] sm:$0xf]
  %v58 = vld [vmem:[%s1 + $0x90] sm:$0xf]
  %v59 = vld [vmem:[%s1 + $0x94] sm:$0xf]
  %v60 = vld [vmem:[%s1 + $0x98] sm:$0xf]
  %v61 = vld [vmem:[%s1 + $0x9c] sm:$0xf]
  %v62 = vld [vmem:[%s1 + $0xa0] sm:$0xf]
  %v63 = vld [vmem:[%s1 + $0xa4] sm:$0xf]
  %v64 = vld [vmem:[%s1 + $0xa8] sm:$0xf]
  %v65 = vld [vmem:[%s1 + $0xac] sm:$0xf]
  %v66 = vld [vmem:[%s1 + $0xb0] sm:$0xf]
  %v67 = vld [vmem:[%s1 + $0xb4] sm:$0xf]
  %v68 = vld [vmem:[%s1 + $0xb8] sm:$0xf]
  %v69 = vld [vmem:[%s1 + $0xbc] sm:$0xf]
  %v70 = vld [vmem:[%s1 + $0xc0] sm:$0xf]
  %v71 = vld [vmem:[%s1 + $0xc4] sm:$0xf]
  %v72 = vld [vmem:[%s1 + $0xc8] sm:$0xf]
  %v73 = vld [vmem:[%s1 + $0xcc] sm:$0xf]
  %v74 = vld [vmem:[%s1 + $0xd0] sm:$0xf]
  %v75 = vld [vmem:[%s1 + $0xd4] sm:$0xf]
  %v76 = vld [vmem:[%s1 + $0xd8] sm:$0xf]
  %v77 = vld [vmem:[%s1 + $0xdc] sm:$0xf]
  %v78 = vld [vmem:[%s1 + $0xe0] sm:$0xf]
  %v79 = vld [vmem:[%s1 + $0xe4] sm:$0xf]
  %v80 = vld [vmem:[%s1 + $0xe8] sm:$0xf]
  %v81 = vld [vmem:[%s1 + $0xec] sm:$0xf]
  %v82 = vld [vmem:[%s1 + $0xf0] sm:$0xf]
  %v83 = vld [vmem:[%s1 + $0xf4] sm:$0xf]
  %v84 = vld [vmem:[%s1 + $0xf8] sm:$0xf]
  %v85 = vld [vmem:[%s1 + $0xfc] sm:$0xf]
  %v86 = vld [vmem:[%s1 + $0x100] sm:$0xf]
  %v87 = vld [vmem:[%s1 + $0x104] sm:$0xf]
  %v88 = vld [vmem:[%s1 + $0x108] sm:$0xf]
  %v89 = vld [vmem:[%s1 + $0x10c] sm:$0xf]
  %v90 = vld [vmem:[%s1 + $0x110] sm:$0xf]
  %v91 = vld [vmem:[%s1 + $0x114] sm:$0xf]
  %v92 = vld [vmem:[%s1 + $0x118] sm:$0xf]
  %v93 = vld [vmem:[%s1 + $0x11c] sm:$0xf]
  %v94 = vld [vmem:[%s1 + $0x120] sm:$0xf]
  %v95 = vld [vmem:[%s1 + $0x124] sm:$0xf]
  %v96 = vld [vmem:[%s1 + $0x128] sm:$0xf]
  %v97 = vld [vmem:[%s1 + $0x12c] sm:$0xf]
  %v98 = vld [vmem:[%s1 + $0x130] sm:$0xf]
  %v99 = vld [vmem:[%s1 + $0x134] sm:$0xf]
  %v100 = vld [vmem:[%s1 + $0x138] sm:$0xf]
  %v101 = vld [vmem:[%s1 + $0x13c] sm:$0xf]
  %v102 = vld [vmem:[%s1 + $0x140] sm:$0xf]
  %v103 = vld [vmem:[%s1 + $0x144] sm:$0xf]
  %v104 = vld [vmem:[%s1 + $0x148] sm:$0xf]
  %v105 = vld [vmem:[%s1 + $0x14c] sm:$0xf]
  %v106 = vld [vmem:[%s1 + $0x150] sm:$0xf]
  %v107 = vld [vmem:[%s1 + $0x154] sm:$0xf]
  %v108 = vld [vmem:[%s1 + $0x158] sm:$0xf]
  %v109 = vld [vmem:[%s1 + $0x15c] sm:$0xf]
  %v110 = vld [vmem:[%s1 + $0x160] sm:$0xf]
  %v111 = vld [vmem:[%s1 + $0x164] sm:$0xf]
  %v112 = vld [vmem:[%s1 + $0x168] sm:$0xf]
  %v113 = vld [vmem:[%s1 + $0x16c] sm:$0xf]
  %v114 = vld [vmem:[%s1 + $0x170] sm:$0xf]
  %v115 = vld [vmem:[%s1 + $0x174] sm:$0xf]
  %v116 = vld [vmem:[%s1 + $0x178] sm:$0xf]
  %v117 = vld [vmem:[%s1 + $0x17c] sm:$0xf]
  %v118 = vld [vmem:[%s1 + $0x180] sm:$0xf]
  %v119 = vld [vmem:[%s1 + $0x184] sm:$0xf]
  %v120 = vld [vmem:[%s1 + $0x188] sm:$0xf]
  %v121 = vld [vmem:[%s1 + $0x18c] sm:$0xf]
  %v122 = vld [vmem:[%s1 + $0x190] sm:$0xf]
  %v123 = vld [vmem:[%s1 + $0x194] sm:$0xf]
  %v124 = vld [vmem:[%s1 + $0x198] sm:$0xf]
  %v125 = vld [vmem:[%s1 + $0x19c] sm:$0xf]
  %v126 = vld [vmem:[%s1 + $0x1a0] sm:$0xf]
  %v127 = vld [vmem:[%s1 + $0x1a4] sm:$0xf]
  %v128 = vld [vmem:[%s1 + $0x1a8] sm:$0xf]
  %v129 = vld [vmem:[%s1 + $0x1ac] sm:$0xf]
  %v130 = vld [vmem:[%s1 + $0x1b0] sm:$0xf]
  %v131 = vld [vmem:[%s1 + $0x1b4] sm:$0xf]
  %v132 = vld [vmem:[%s1 + $0x1b8] sm:$0xf]
  %v133 = vld [vmem:[%s1 + $0x1bc] sm:$0xf]
  %v134 = vld [vmem:[%s1 + $0x1c0] sm:$0xf]
  %v135 = vld [vmem:[%s1 + $0x1c4] sm:$0xf]
  %v136 = vld [vmem:[%s1 + $0x1c8] sm:$0xf]
  %v137 = vld [vmem:[%s1 + $0x1cc] sm:$0xf]
  %v138 = vld [vmem:[%s1 + $0x1d0] sm:$0xf]
  %v139 = vld [vmem:[%s1 + $0x1d4] sm:$0xf]
  %v140 = vld [vmem:[%s1 + $0x1d8] sm:$0xf]
  %v141 = vld [vmem:[%s1 + $0x1dc] sm:$0xf]
  %v142 = vld [vmem:[%s1 + $0x1e0] sm:$0xf]
  %v143 = vld [vmem:[%s1 + $0x1e4] sm:$0xf]
  %v144 = vld [vmem:[%s1 + $0x1e8] sm:$0xf]
  %v145 = vld [vmem:[%s1 + $0x1ec] sm:$0xf]
  %v146 = vld [vmem:[%s1 + $0x1f0] sm:$0xf]
  %v147 = vld [vmem:[%s1 + $0x1f4] sm:$0xf]
  %v148 = vld [vmem:[%s1 + $0x1f8] sm:$0xf]
  %v149 = vld [vmem:[%s1 + $0x1fc] sm:$0xf]
  %p150 = scmp.eq.s32.totalorder 0, 0
  // Predicated region
  $region14: #{discriminator_forward.7} parent=0 // pred_check
    %p151 = pneg %p150
  $region15: #{discriminator_forward.7} parent=0 // pred_check_branch
    %153 = sbr.rel (%p151) target = $region17
  $region16: #{discriminator_forward.7} parent=0 // pred_region
    %v154 = vld [vmem:[%s2] sm:$0x1]
    %v156 = vlaneseq
    %v157 = vshrl.u32 %v156, 7
    %v158 = vsub.s32 0, %v157
    %v159 = vrot.slane %v154, %v158
    %v165 = vunpack.c.l.b16 %v18
    %v166 = vunpack.c.h.b16 %v18
    %v167 = vunpack.c.l.b16 %v19
    %v168 = vunpack.c.h.b16 %v19
    %v169 = vunpack.c.l.b16 %v20
    %v170 = vunpack.c.h.b16 %v20
    %v171 = vunpack.c.l.b16 %v21
    %v172 = vunpack.c.h.b16 %v21
    %v173 = vpack.c.b16 %v165, %v165
    %v174 = vpack.c.b16 %v166, %v166
    %v175 = vpack.c.b16 %v167, %v167
    %v176 = vpack.c.b16 %v168, %v168
    %v177 = vpack.c.b16 %v169, %v169
    %v178 = vpack.c.b16 %v170, %v170
    %v179 = vpack.c.b16 %v171, %v171
    %v180 = vpack.c.b16 %v172, %v172
    %v317 = vunpack.c.l.b16 %v22
    %v318 = vunpack.c.l.b16 %v23
    %v319 = vunpack.c.l.b16 %v24
    %v320 = vunpack.c.l.b16 %v25
    %v321 = vunpack.c.l.b16 %v26
    %v322 = vunpack.c.l.b16 %v27
    %v323 = vunpack.c.l.b16 %v28
    %v324 = vunpack.c.l.b16 %v29
    %v325 = vunpack.c.l.b16 %v30
    %v326 = vunpack.c.l.b16 %v31
    %v327 = vunpack.c.l.b16 %v32
    %v328 = vunpack.c.l.b16 %v33
    %v329 = vunpack.c.l.b16 %v34
    %v330 = vunpack.c.l.b16 %v35
    %v331 = vunpack.c.l.b16 %v36
    %v332 = vunpack.c.l.b16 %v37
    %v333 = vunpack.c.l.b16 %v38
    %v334 = vunpack.c.l.b16 %v39
    %v335 = vunpack.c.l.b16 %v40
    %v336 = vunpack.c.l.b16 %v41
    %v337 = vunpack.c.l.b16 %v42
    %v338 = vunpack.c.l.b16 %v43
    %v339 = vunpack.c.l.b16 %v44
    %v340 = vunpack.c.l.b16 %v45
    %v341 = vunpack.c.l.b16 %v46
    %v342 = vunpack.c.l.b16 %v47
    %v343 = vunpack.c.l.b16 %v48
    %v344 = vunpack.c.l.b16 %v49
    %v345 = vunpack.c.l.b16 %v50
    %v346 = vunpack.c.l.b16 %v51
    %v347 = vunpack.c.l.b16 %v52
    %v348 = vunpack.c.l.b16 %v53
    %v349 = vunpack.c.l.b16 %v54
    %v350 = vunpack.c.l.b16 %v55
    %v351 = vunpack.c.l.b16 %v56
    %v352 = vunpack.c.l.b16 %v57
    %v353 = vunpack.c.l.b16 %v58
    %v354 = vunpack.c.l.b16 %v59
    %v355 = vunpack.c.l.b16 %v60
    %v356 = vunpack.c.l.b16 %v61
    %v357 = vunpack.c.l.b16 %v62
    %v358 = vunpack.c.l.b16 %v63
    %v359 = vunpack.c.l.b16 %v64
    %v360 = vunpack.c.l.b16 %v65
    %v361 = vunpack.c.l.b16 %v66
    %v362 = vunpack.c.l.b16 %v67
    %v363 = vunpack.c.l.b16 %v68
    %v364 = vunpack.c.l.b16 %v69
    %v365 = vunpack.c.l.b16 %v70
    %v366 = vunpack.c.l.b16 %v71
    %v367 = vunpack.c.l.b16 %v72
    %v368 = vunpack.c.l.b16 %v73
    %v369 = vunpack.c.l.b16 %v74
    %v370 = vunpack.c.l.b16 %v75
    %v371 = vunpack.c.l.b16 %v76
    %v372 = vunpack.c.l.b16 %v77
    %v373 = vunpack.c.l.b16 %v78
    %v374 = vunpack.c.l.b16 %v79
    %v375 = vunpack.c.l.b16 %v80
    %v376 = vunpack.c.l.b16 %v81
    %v377 = vunpack.c.l.b16 %v82
    %v378 = vunpack.c.l.b16 %v83
    %v379 = vunpack.c.l.b16 %v84
    %v380 = vunpack.c.l.b16 %v85
    %v381 = vunpack.c.l.b16 %v86
    %v382 = vunpack.c.l.b16 %v87
    %v383 = vunpack.c.l.b16 %v88
    %v384 = vunpack.c.l.b16 %v89
    %v385 = vunpack.c.l.b16 %v90
    %v386 = vunpack.c.l.b16 %v91
    %v387 = vunpack.c.l.b16 %v92
    %v388 = vunpack.c.l.b16 %v93
    %v389 = vunpack.c.l.b16 %v94
    %v390 = vunpack.c.l.b16 %v95
    %v391 = vunpack.c.l.b16 %v96
    %v392 = vunpack.c.l.b16 %v97
    %v393 = vunpack.c.l.b16 %v98
    %v394 = vunpack.c.l.b16 %v99
    %v395 = vunpack.c.l.b16 %v100
    %v396 = vunpack.c.l.b16 %v101
    %v397 = vunpack.c.l.b16 %v102
    %v398 = vunpack.c.l.b16 %v103
    %v399 = vunpack.c.l.b16 %v104
    %v400 = vunpack.c.l.b16 %v105
    %v401 = vunpack.c.l.b16 %v106
    %v402 = vunpack.c.l.b16 %v107
    %v403 = vunpack.c.l.b16 %v108
    %v404 = vunpack.c.l.b16 %v109
    %v405 = vunpack.c.l.b16 %v110
    %v406 = vunpack.c.l.b16 %v111
    %v407 = vunpack.c.l.b16 %v112
    %v408 = vunpack.c.l.b16 %v113
    %v409 = vunpack.c.l.b16 %v114
    %v410 = vunpack.c.l.b16 %v115
    %v411 = vunpack.c.l.b16 %v116
    %v412 = vunpack.c.l.b16 %v117
    %v413 = vunpack.c.l.b16 %v118
    %v414 = vunpack.c.l.b16 %v119
    %v415 = vunpack.c.l.b16 %v120
    %v416 = vunpack.c.l.b16 %v121
    %v417 = vunpack.c.l.b16 %v122
    %v418 = vunpack.c.l.b16 %v123
    %v419 = vunpack.c.l.b16 %v124
    %v420 = vunpack.c.l.b16 %v125
    %v421 = vunpack.c.l.b16 %v126
    %v422 = vunpack.c.l.b16 %v127
    %v423 = vunpack.c.l.b16 %v128
    %v424 = vunpack.c.l.b16 %v129
    %v425 = vunpack.c.l.b16 %v130
    %v426 = vunpack.c.l.b16 %v131
    %v427 = vunpack.c.l.b16 %v132
    %v428 = vunpack.c.l.b16 %v133
    %v429 = vunpack.c.l.b16 %v134
    %v430 = vunpack.c.l.b16 %v135
    %v431 = vunpack.c.l.b16 %v136
    %v432 = vunpack.c.l.b16 %v137
    %v433 = vunpack.c.l.b16 %v138
    %v434 = vunpack.c.l.b16 %v139
    %v435 = vunpack.c.l.b16 %v140
    %v436 = vunpack.c.l.b16 %v141
    %v437 = vunpack.c.l.b16 %v142
    %v438 = vunpack.c.l.b16 %v143
    %v439 = vunpack.c.l.b16 %v144
    %v440 = vunpack.c.l.b16 %v145
    %v441 = vunpack.c.l.b16 %v146
    %v442 = vunpack.c.l.b16 %v147
    %v443 = vunpack.c.l.b16 %v148
    %v444 = vunpack.c.l.b16 %v149
    %v445 = vpack.c.b16 %v318, %v317
    %v446 = vpack.c.b16 %v320, %v319
    %v447 = vpack.c.b16 %v322, %v321
    %v448 = vpack.c.b16 %v324, %v323
    %v449 = vpack.c.b16 %v326, %v325
    %v450 = vpack.c.b16 %v328, %v327
    %v451 = vpack.c.b16 %v330, %v329
    %v452 = vpack.c.b16 %v332, %v331
    %v453 = vpack.c.b16 %v334, %v333
    %v454 = vpack.c.b16 %v336, %v335
    %v455 = vpack.c.b16 %v338, %v337
    %v456 = vpack.c.b16 %v340, %v339
    %v457 = vpack.c.b16 %v342, %v341
    %v458 = vpack.c.b16 %v344, %v343
    %v459 = vpack.c.b16 %v346, %v345
    %v460 = vpack.c.b16 %v348, %v347
    %v461 = vpack.c.b16 %v350, %v349
    %v462 = vpack.c.b16 %v352, %v351
    %v463 = vpack.c.b16 %v354, %v353
    %v464 = vpack.c.b16 %v356, %v355
    %v465 = vpack.c.b16 %v358, %v357
    %v466 = vpack.c.b16 %v360, %v359
    %v467 = vpack.c.b16 %v362, %v361
    %v468 = vpack.c.b16 %v364, %v363
    %v469 = vpack.c.b16 %v366, %v365
    %v470 = vpack.c.b16 %v368, %v367
    %v471 = vpack.c.b16 %v370, %v369
    %v472 = vpack.c.b16 %v372, %v371
    %v473 = vpack.c.b16 %v374, %v373
    %v474 = vpack.c.b16 %v376, %v375
    %v475 = vpack.c.b16 %v378, %v377
    %v476 = vpack.c.b16 %v380, %v379
    %v477 = vpack.c.b16 %v382, %v381
    %v478 = vpack.c.b16 %v384, %v383
    %v479 = vpack.c.b16 %v386, %v385
    %v480 = vpack.c.b16 %v388, %v387
    %v481 = vpack.c.b16 %v390, %v389
    %v482 = vpack.c.b16 %v392, %v391
    %v483 = vpack.c.b16 %v394, %v393
    %v484 = vpack.c.b16 %v396, %v395
    %v485 = vpack.c.b16 %v398, %v397
    %v486 = vpack.c.b16 %v400, %v399
    %v487 = vpack.c.b16 %v402, %v401
    %v488 = vpack.c.b16 %v404, %v403
    %v489 = vpack.c.b16 %v406, %v405
    %v490 = vpack.c.b16 %v408, %v407
    %v491 = vpack.c.b16 %v410, %v409
    %v492 = vpack.c.b16 %v412, %v411
    %v493 = vpack.c.b16 %v414, %v413
    %v494 = vpack.c.b16 %v416, %v415
    %v495 = vpack.c.b16 %v418, %v417
    %v496 = vpack.c.b16 %v420, %v419
    %v497 = vpack.c.b16 %v422, %v421
    %v498 = vpack.c.b16 %v424, %v423
    %v499 = vpack.c.b16 %v426, %v425
    %v500 = vpack.c.b16 %v428, %v427
    %v501 = vpack.c.b16 %v430, %v429
    %v502 = vpack.c.b16 %v432, %v431
    %v503 = vpack.c.b16 %v434, %v433
    %v504 = vpack.c.b16 %v436, %v435
    %v505 = vpack.c.b16 %v438, %v437
    %v506 = vpack.c.b16 %v440, %v439
    %v507 = vpack.c.b16 %v442, %v441
    %v508 = vpack.c.b16 %v444, %v443
    %573 = vmatprep.subr.bf16.mxu0 0
    %574 = vmatpush1.bf16.msra.mxu0 %v445
    %575 = vmatprep.subr.bf16.mxu0 0
    %576 = vmatpush1.bf16.msra.mxu0 %v446
    %577 = vmatprep.subr.bf16.mxu0 0
    %578 = vmatpush1.bf16.msra.mxu0 %v447
    %579 = vmatprep.subr.bf16.mxu0 0
    %580 = vmatpush1.bf16.msra.mxu0 %v448
    %581 = vmatprep.subr.bf16.mxu0 0
    %582 = vmatpush1.bf16.msra.mxu0 %v449
    %583 = vmatprep.subr.bf16.mxu0 0
    %584 = vmatpush1.bf16.msra.mxu0 %v450
    %585 = vmatprep.subr.bf16.mxu0 0
    %586 = vmatpush1.bf16.msra.mxu0 %v451
    %587 = vmatprep.subr.bf16.mxu0 0
    %588 = vmatpush1.bf16.msra.mxu0 %v452
    %589 = vmatprep.subr.bf16.mxu0 0
    %590 = vmatpush1.bf16.msra.mxu0 %v453
    %591 = vmatprep.subr.bf16.mxu0 0
    %592 = vmatpush1.bf16.msra.mxu0 %v454
    %593 = vmatprep.subr.bf16.mxu0 0
    %594 = vmatpush1.bf16.msra.mxu0 %v455
    %595 = vmatprep.subr.bf16.mxu0 0
    %596 = vmatpush1.bf16.msra.mxu0 %v456
    %597 = vmatprep.subr.bf16.mxu0 0
    %598 = vmatpush1.bf16.msra.mxu0 %v457
    %599 = vmatprep.subr.bf16.mxu0 0
    %600 = vmatpush1.bf16.msra.mxu0 %v458
    %601 = vmatprep.subr.bf16.mxu0 0
    %602 = vmatpush1.bf16.msra.mxu0 %v459
    %603 = vmatprep.subr.bf16.mxu0 0
    %604 = vmatpush1.bf16.msra.mxu0 %v460
    %605 = vmatprep.mubr.bf16.mxu0 %v174
    %606 = vmatmul.mubr.bf16.gmra.mrb[0].mxu0 %v173
    %v607 = vpop.f32.mrb[0].mxu0
    %v608 = vadd.f32 %v159, %v607
    %v609 = vpop.f32.mrb[0].mxu0
    %v610 = vpop.f32.mrb[0].mxu0
    %v611 = vpop.f32.mrb[0].mxu0
    %612 = vdwg.mxu0
    %613 = vmatprep.subr.bf16.mxu0 0
    %614 = vmatpush1.bf16.msra.mxu0 %v461
    %615 = vmatprep.subr.bf16.mxu0 0
    %616 = vmatpush1.bf16.msra.mxu0 %v462
    %617 = vmatprep.subr.bf16.mxu0 0
    %618 = vmatpush1.bf16.msra.mxu0 %v463
    %619 = vmatprep.subr.bf16.mxu0 0
    %620 = vmatpush1.bf16.msra.mxu0 %v464
    %621 = vmatprep.subr.bf16.mxu0 0
    %622 = vmatpush1.bf16.msra.mxu0 %v465
    %623 = vmatprep.subr.bf16.mxu0 0
    %624 = vmatpush1.bf16.msra.mxu0 %v466
    %625 = vmatprep.subr.bf16.mxu0 0
    %626 = vmatpush1.bf16.msra.mxu0 %v467
    %627 = vmatprep.subr.bf16.mxu0 0
    %628 = vmatpush1.bf16.msra.mxu0 %v468
    %629 = vmatprep.subr.bf16.mxu0 0
    %630 = vmatpush1.bf16.msra.mxu0 %v469
    %631 = vmatprep.subr.bf16.mxu0 0
    %632 = vmatpush1.bf16.msra.mxu0 %v470
    %633 = vmatprep.subr.bf16.mxu0 0
    %634 = vmatpush1.bf16.msra.mxu0 %v471
    %635 = vmatprep.subr.bf16.mxu0 0
    %636 = vmatpush1.bf16.msra.mxu0 %v472
    %637 = vmatprep.subr.bf16.mxu0 0
    %638 = vmatpush1.bf16.msra.mxu0 %v473
    %639 = vmatprep.subr.bf16.mxu0 0
    %640 = vmatpush1.bf16.msra.mxu0 %v474
    %641 = vmatprep.subr.bf16.mxu0 0
    %642 = vmatpush1.bf16.msra.mxu0 %v475
    %643 = vmatprep.subr.bf16.mxu0 0
    %644 = vmatpush1.bf16.msra.mxu0 %v476
    %645 = vmatprep.mubr.bf16.mxu0 %v176
    %646 = vmatmul.mubr.bf16.gmra.mrb[0].mxu0 %v175
    %v647 = vpop.f32.mrb[0].mxu0
    %v648 = vadd.f32 %v608, %v647
    %v649 = vpop.f32.mrb[0].mxu0
    %v650 = vpop.f32.mrb[0].mxu0
    %v651 = vpop.f32.mrb[0].mxu0
    %652 = vdwg.mxu0
    %653 = vmatprep.subr.bf16.mxu0 0
    %654 = vmatpush1.bf16.msra.mxu0 %v477
    %655 = vmatprep.subr.bf16.mxu0 0
    %656 = vmatpush1.bf16.msra.mxu0 %v478
    %657 = vmatprep.subr.bf16.mxu0 0
    %658 = vmatpush1.bf16.msra.mxu0 %v479
    %659 = vmatprep.subr.bf16.mxu0 0
    %660 = vmatpush1.bf16.msra.mxu0 %v480
    %661 = vmatprep.subr.bf16.mxu0 0
    %662 = vmatpush1.bf16.msra.mxu0 %v481
    %663 = vmatprep.subr.bf16.mxu0 0
    %664 = vmatpush1.bf16.msra.mxu0 %v482
    %665 = vmatprep.subr.bf16.mxu0 0
    %666 = vmatpush1.bf16.msra.mxu0 %v483
    %667 = vmatprep.subr.bf16.mxu0 0
    %668 = vmatpush1.bf16.msra.mxu0 %v484
    %669 = vmatprep.subr.bf16.mxu0 0
    %670 = vmatpush1.bf16.msra.mxu0 %v485
    %671 = vmatprep.subr.bf16.mxu0 0
    %672 = vmatpush1.bf16.msra.mxu0 %v486
    %673 = vmatprep.subr.bf16.mxu0 0
    %674 = vmatpush1.bf16.msra.mxu0 %v487
    %675 = vmatprep.subr.bf16.mxu0 0
    %676 = vmatpush1.bf16.msra.mxu0 %v488
    %677 = vmatprep.subr.bf16.mxu0 0
    %678 = vmatpush1.bf16.msra.mxu0 %v489
    %679 = vmatprep.subr.bf16.mxu0 0
    %680 = vmatpush1.bf16.msra.mxu0 %v490
    %681 = vmatprep.subr.bf16.mxu0 0
    %682 = vmatpush1.bf16.msra.mxu0 %v491
    %683 = vmatprep.subr.bf16.mxu0 0
    %684 = vmatpush1.bf16.msra.mxu0 %v492
    %685 = vmatprep.mubr.bf16.mxu0 %v178
    %686 = vmatmul.mubr.bf16.gmra.mrb[0].mxu0 %v177
    %v687 = vpop.f32.mrb[0].mxu0
    %v688 = vadd.f32 %v648, %v687
    %v689 = vpop.f32.mrb[0].mxu0
    %v690 = vpop.f32.mrb[0].mxu0
    %v691 = vpop.f32.mrb[0].mxu0
    %692 = vdwg.mxu0
    %693 = vmatprep.subr.bf16.mxu0 0
    %694 = vmatpush1.bf16.msra.mxu0 %v493
    %695 = vmatprep.subr.bf16.mxu0 0
    %696 = vmatpush1.bf16.msra.mxu0 %v494
    %697 = vmatprep.subr.bf16.mxu0 0
    %698 = vmatpush1.bf16.msra.mxu0 %v495
    %699 = vmatprep.subr.bf16.mxu0 0
    %700 = vmatpush1.bf16.msra.mxu0 %v496
    %701 = vmatprep.subr.bf16.mxu0 0
    %702 = vmatpush1.bf16.msra.mxu0 %v497
    %703 = vmatprep.subr.bf16.mxu0 0
    %704 = vmatpush1.bf16.msra.mxu0 %v498
    %705 = vmatprep.subr.bf16.mxu0 0
    %706 = vmatpush1.bf16.msra.mxu0 %v499
    %707 = vmatprep.subr.bf16.mxu0 0
    %708 = vmatpush1.bf16.msra.mxu0 %v500
    %709 = vmatprep.subr.bf16.mxu0 0
    %710 = vmatpush1.bf16.msra.mxu0 %v501
    %711 = vmatprep.subr.bf16.mxu0 0
    %712 = vmatpush1.bf16.msra.mxu0 %v502
    %713 = vmatprep.subr.bf16.mxu0 0
    %714 = vmatpush1.bf16.msra.mxu0 %v503
    %715 = vmatprep.subr.bf16.mxu0 0
    %716 = vmatpush1.bf16.msra.mxu0 %v504
    %717 = vmatprep.subr.bf16.mxu0 0
    %718 = vmatpush1.bf16.msra.mxu0 %v505
    %719 = vmatprep.subr.bf16.mxu0 0
    %720 = vmatpush1.bf16.msra.mxu0 %v506
    %721 = vmatprep.subr.bf16.mxu0 0
    %722 = vmatpush1.bf16.msra.mxu0 %v507
    %723 = vmatprep.subr.bf16.mxu0 0
    %724 = vmatpush1.bf16.msra.mxu0 %v508
    %725 = vmatprep.mubr.bf16.mxu0 %v180
    %726 = vmatmul.mubr.bf16.gmra.mrb[0].mxu0 %v179
    %v727 = vpop.f32.mrb[0].mxu0
    %v728 = vadd.f32 %v688, %v727
    %v729 = vpop.f32.mrb[0].mxu0
    %v730 = vpop.f32.mrb[0].mxu0
    %v731 = vpop.f32.mrb[0].mxu0
    %732 = vdwg.mxu0
    %v733 = vpack.c.bf16 %v728, %v728
    %734 = vst [vmem:[%s3] sm:$0xf] %v733
    %v735 = vrot.slane %v728, 4
    %v736 = vadd.f32 %v728, %v735
    %v737 = vrot.slane %v736, 2
    %v738 = vadd.f32 %v736, %v737
    %v739 = vrot.slane %v738, 1
    %v740 = vadd.f32 %v738, %v739
    %v741 = vmul.f32 %v728, %v728
    %v742 = vrot.slane %v741, 4
    %v743 = vadd.f32 %v741, %v742
    %v744 = vrot.slane %v743, 2
    %v745 = vadd.f32 %v743, %v744
    %v746 = vrot.slane %v745, 1
    %v747 = vadd.f32 %v745, %v746
    %p748 = scmp.eq.s32.totalorder 0, 0
    // Predicated region
    $region18: #{discriminator_forward.7} parent=16 // pred_check
      %p749 = pneg %p748
    $region19: #{discriminator_forward.7} parent=16 // pred_check_branch
      %751 = sbr.rel (%p749) target = $region21
    $region20: #{discriminator_forward.7} parent=16 // pred_region
      %752 = vst [vmem:[%s4] sm:$0x1] %v740
      %753 = vst [vmem:[%s5] sm:$0x1] %v747
    $region21: #{discriminator_forward.7} parent=16 // pred_fallthru
      _
    %p754 = scmp.gt.s32.totalorder 0, 0
    // Predicated region
    $region22: #{discriminator_forward.7} parent=16 // pred_check
      %p755 = pneg %p754
    $region23: #{discriminator_forward.7} parent=16 // pred_check_branch
      %757 = sbr.rel (%p755) target = $region25
    $region24: #{discriminator_forward.7} parent=16 // pred_region
      %v758 = vld [vmem:[%s4] sm:$0x1]
      %v759 = vadd.f32 %v758, %v740
      %760 = vst [vmem:[%s4] sm:$0x1] %v759
      %v761 = vld [vmem:[%s5] sm:$0x1]
      %v762 = vadd.f32 %v761, %v747
      %763 = vst [vmem:[%s5] sm:$0x1] %v762
    $region25: #{discriminator_forward.7} parent=16 // pred_fallthru
      _
  $region17: #{discriminator_forward.7} parent=0 // pred_fallthru
    _
  // Predicated region
  $region26: #{discriminator_forward.7} parent=0 // pred_check
    _
  $region27: #{discriminator_forward.7} parent=0 // pred_check_branch
    %765 = sbr.rel (0) target = $region29
  $region28: #{discriminator_forward.7} parent=0 // pred_region
    _
  $region29: #{discriminator_forward.7} parent=0 // pred_fallthru
    _
  // Predicated region
  $region30: #{discriminator_forward.7} parent=0 // pred_check
    _
  $region31: #{discriminator_forward.7} parent=0 // pred_check_branch
    %767 = sbr.rel (0) target = $region33
  $region32: #{discriminator_forward.7} parent=0 // pred_region
    _
  $region33: #{discriminator_forward.7} parent=0 // pred_fallthru
    _
  // Predicated region
  $region34: #{discriminator_forward.7} parent=0 // pred_check
    _
  $region35: #{discriminator_forward.7} parent=0 // pred_check_branch
    %769 = sbr.rel (0) target = $region37
  $region36: #{discriminator_forward.7} parent=0 // pred_region
    _
  $region37: #{discriminator_forward.7} parent=0 // pred_fallthru
    _
  // Predicated region
  $region38: #{discriminator_forward.7} parent=0 // pred_check
    _
  $region39: #{discriminator_forward.7} parent=0 // pred_check_branch
    %771 = sbr.rel (0) target = $region41
  $region40: #{discriminator_forward.7} parent=0 // pred_region
    _
  $region41: #{discriminator_forward.7} parent=0 // pred_fallthru
    _
  // Predicated region
  $region42: #{discriminator_forward.7} parent=0 // pred_check
    _
  $region43: #{discriminator_forward.7} parent=0 // pred_check_branch
    %773 = sbr.rel (0) target = $region45
  $region44: #{discriminator_forward.7} parent=0 // pred_region
    _
  $region45: #{discriminator_forward.7} parent=0 // pred_fallthru
    _
  // Predicated region
  $region46: #{discriminator_forward.7} parent=0 // pred_check
    _
  $region47: #{discriminator_forward.7} parent=0 // pred_check_branch
    %775 = sbr.rel (0) target = $region49
  $region48: #{discriminator_forward.7} parent=0 // pred_region
    _
  $region49: #{discriminator_forward.7} parent=0 // pred_fallthru
    _

// kernel: discriminator_forward.9
$region0: #{discriminator_forward.9}
  #allocation0 [shape = 'u32[]', space=smem, size = 0x4, offset = 0x4, fixed_abs, tag = 'smem constant byte address 0x4 - core index']
  #allocation1 [shape = 'u32[144,128]{1,0:T(1,128)}', space=vmem, size = 0x12000, scoped, tag = 'internal scratch']
  %s0 = inlined_call_operand.vmem [shape: bf16[2,512], index: 0, kind: input, shape index: {}]
  %s1 = inlined_call_operand.vmem [shape: bf16[512,1024], index: 1, kind: input, shape index: {}]
  %s2 = inlined_call_operand.vmem [shape: f32[1,1024], index: 2, kind: input, shape index: {}]
  %s3 = inlined_call_operand.vmem [shape: bf16[1024,128], index: 3, kind: input, shape index: {}]
  %s4 = inlined_call_operand.vmem [shape: f32[1,128], index: 4, kind: input, shape index: {}]
  %s5 = inlined_call_operand.vmem [shape: bf16[128,128], index: 5, kind: input, shape index: {}]
  %s6 = inlined_call_operand.vmem [shape: f32[1,128], index: 6, kind: input, shape index: {}]
  %s7 = inlined_call_operand.vmem [shape: bf16[128,128], index: 7, kind: input, shape index: {}]
  %s8 = inlined_call_operand.vmem [shape: f32[1,128], index: 8, kind: input, shape index: {}]
  %s9 = inlined_call_operand.hbm [shape: f32[2,128], index: 9, kind: output, shape index: {0}]
  %s10 = inlined_call_operand.hbm [shape: f32[2,128], index: 10, kind: output, shape index: {1}]
  %s11 = inlined_call_operand.vmem [shape: f32[2,128], index: 11, kind: output, shape index: {2}]
  %12 = xla_tuple %s9, %s10, %s11
  %s13 = sld [smem:[#allocation0]]
  $region66: #{discriminator_forward.9} parent=0
    _
  %s15 = ssub.s32 1, %s13
  %s16 = scalar_select 0, %s15, %s13
  $region1: #{discriminator_forward.9} parent=0
    #allocation2 [shape = 'u8[1024]{0}', space=vmem, size = 0x400, scoped, tag = 'output window, operand 0, single buffered']
    #allocation3 [shape = 's32[1]{0}', space=sflag, size = 0x4, scoped, tag = 'scoped memory for discriminator_forward.9']
    #allocation4 [shape = 'u8[1024]{0}', space=vmem, size = 0x400, scoped, tag = 'output window, operand 1, single buffered']
    #allocation5 [shape = 's32[1]{0}', space=sflag, size = 0x4, scoped, tag = 'scoped memory for discriminator_forward.9']
    %17 = vsyncpa [#allocation3], 0
    %18 = vsyncpa [#allocation5], 0
    // Predicated region
    $region2: #{discriminator_forward.9} parent=1 // pred_check
      _
    $region3: #{discriminator_forward.9} parent=1 // pred_check_branch
      %20 = sbr.rel (0) target = $region5
    $region4: #{discriminator_forward.9} parent=1 // pred_region
      _
    $region5: #{discriminator_forward.9} parent=1 // pred_fallthru
      _
    // Predicated region
    $region6: #{discriminator_forward.9} parent=1 // pred_check
      _
    $region7: #{discriminator_forward.9} parent=1 // pred_check_branch
      %22 = sbr.rel (0) target = $region9
    $region8: #{discriminator_forward.9} parent=1 // pred_region
      _
    $region9: #{discriminator_forward.9} parent=1 // pred_fallthru
      _
    // Predicated region
    $region10: #{discriminator_forward.9} parent=1 // pred_check
      _
    $region11: #{discriminator_forward.9} parent=1 // pred_check_branch
      %24 = sbr.rel (0) target = $region13
    $region12: #{discriminator_forward.9} parent=1 // pred_region
      _
    $region13: #{discriminator_forward.9} parent=1 // pred_fallthru
      _
    // Predicated region
    $region14: #{discriminator_forward.9} parent=1 // pred_check
      _
    $region15: #{discriminator_forward.9} parent=1 // pred_check_branch
      %26 = sbr.rel (0) target = $region17
    $region16: #{discriminator_forward.9} parent=1 // pred_region
      _
    $region17: #{discriminator_forward.9} parent=1 // pred_fallthru
      _
    // Predicated region
    $region18: #{discriminator_forward.9} parent=1 // pred_check
      _
    $region19: #{discriminator_forward.9} parent=1 // pred_check_branch
      %28 = sbr.rel (0) target = $region21
    $region20: #{discriminator_forward.9} parent=1 // pred_region
      _
    $region21: #{discriminator_forward.9} parent=1 // pred_fallthru
      _
    // Predicated region
    $region22: #{discriminator_forward.9} parent=1 // pred_check
      _
    $region23: #{discriminator_forward.9} parent=1 // pred_check_branch
      %30 = sbr.rel (0) target = $region25
    $region24: #{discriminator_forward.9} parent=1 // pred_region
      _
    $region25: #{discriminator_forward.9} parent=1 // pred_fallthru
      _
    // Predicated region
    $region26: #{discriminator_forward.9} parent=1 // pred_check
      _
    $region27: #{discriminator_forward.9} parent=1 // pred_check_branch
      %32 = sbr.rel (0) target = $region29
    $region28: #{discriminator_forward.9} parent=1 // pred_region
      _
    $region29: #{discriminator_forward.9} parent=1 // pred_fallthru
      _
    // Predicated region
    $region30: #{discriminator_forward.9} parent=1 // pred_check
      _
    $region31: #{discriminator_forward.9} parent=1 // pred_check_branch
      %34 = sbr.rel (0) target = $region33
    $region32: #{discriminator_forward.9} parent=1 // pred_region
      _
    $region33: #{discriminator_forward.9} parent=1 // pred_fallthru
      _
    // Predicated region
    $region34: #{discriminator_forward.9} parent=1 // pred_check
      _
    $region35: #{discriminator_forward.9} parent=1 // pred_check_branch
      %36 = sbr.rel (0) target = $region37
    $region36: #{discriminator_forward.9} parent=1 // pred_region
      _
    $region37: #{discriminator_forward.9} parent=1 // pred_fallthru
      _
    %v38 = vld [vmem:[%s0] sm:$0xf]
    %v39 = vld [vmem:[%s1] sm:$0xff]
    %v40 = vld [vmem:[%s1 + $0x8] sm:$0xff]
    %v41 = vld [vmem:[%s1 + $0x10] sm:$0xff]
    %v42 = vld [vmem:[%s1 + $0x18] sm:$0xff]
    %v43 = vld [vmem:[%s1 + $0x20] sm:$0xff]
    %v44 = vld [vmem:[%s1 + $0x28] sm:$0xff]
    %v45 = vld [vmem:[%s1 + $0x30] sm:$0xff]
    %v46 = vld [vmem:[%s1 + $0x38] sm:$0xff]
    %v47 = vld [vmem:[%s1 + $0x40] sm:$0xff]
    %v48 = vld [vmem:[%s1 + $0x48] sm:$0xff]
    %v49 = vld [vmem:[%s1 + $0x50] sm:$0xff]
    %v50 = vld [vmem:[%s1 + $0x58] sm:$0xff]
    %v51 = vld [vmem:[%s1 + $0x60] sm:$0xff]
    %v52 = vld [vmem:[%s1 + $0x68] sm:$0xff]
    %v53 = vld [vmem:[%s1 + $0x70] sm:$0xff]
    %v54 = vld [vmem:[%s1 + $0x78] sm:$0xff]
    %v55 = vld [vmem:[%s1 + $0x80] sm:$0xff]
    %v56 = vld [vmem:[%s1 + $0x88] sm:$0xff]
    %v57 = vld [vmem:[%s1 + $0x90] sm:$0xff]
    %v58 = vld [vmem:[%s1 + $0x98] sm:$0xff]
    %v59 = vld [vmem:[%s1 + $0xa0] sm:$0xff]
    %v60 = vld [vmem:[%s1 + $0xa8] sm:$0xff]
    %v61 = vld [vmem:[%s1 + $0xb0] sm:$0xff]
    %v62 = vld [vmem:[%s1 + $0xb8] sm:$0xff]
    %v63 = vld [vmem:[%s1 + $0xc0] sm:$0xff]
    %v64 = vld [vmem:[%s1 + $0xc8] sm:$0xff]
    %v65 = vld [vmem:[%s1 + $0xd0] sm:$0xff]
    %v66 = vld [vmem:[%s1 + $0xd8] sm:$0xff]
    %v67 = vld [vmem:[%s1 + $0xe0] sm:$0xff]
    %v68 = vld [vmem:[%s1 + $0xe8] sm:$0xff]
    %v69 = vld [vmem:[%s1 + $0xf0] sm:$0xff]
    %v70 = vld [vmem:[%s1 + $0xf8] sm:$0xff]
    %v71 = vld [vmem:[%s1 + $0x100] sm:$0xff]
    %v72 = vld [vmem:[%s1 + $0x108] sm:$0xff]
    %v73 = vld [vmem:[%s1 + $0x110] sm:$0xff]
    %v74 = vld [vmem:[%s1 + $0x118] sm:$0xff]
    %v75 = vld [vmem:[%s1 + $0x120] sm:$0xff]
    %v76 = vld [vmem:[%s1 + $0x128] sm:$0xff]
    %v77 = vld [vmem:[%s1 + $0x130] sm:$0xff]
    %v78 = vld [vmem:[%s1 + $0x138] sm:$0xff]
    %v79 = vld [vmem:[%s1 + $0x140] sm:$0xff]
    %v80 = vld [vmem:[%s1 + $0x148] sm:$0xff]
    %v81 = vld [vmem:[%s1 + $0x150] sm:$0xff]
    %v82 = vld [vmem:[%s1 + $0x158] sm:$0xff]
    %v83 = vld [vmem:[%s1 + $0x160] sm:$0xff]
    %v84 = vld [vmem:[%s1 + $0x168] sm:$0xff]
    %v85 = vld [vmem:[%s1 + $0x170] sm:$0xff]
    %v86 = vld [vmem:[%s1 + $0x178] sm:$0xff]
    %v87 = vld [vmem:[%s1 + $0x180] sm:$0xff]
    %v88 = vld [vmem:[%s1 + $0x188] sm:$0xff]
    %v89 = vld [vmem:[%s1 + $0x190] sm:$0xff]
    %v90 = vld [vmem:[%s1 + $0x198] sm:$0xff]
    %v91 = vld [vmem:[%s1 + $0x1a0] sm:$0xff]
    %v92 = vld [vmem:[%s1 + $0x1a8] sm:$0xff]
    %v93 = vld [vmem:[%s1 + $0x1b0] sm:$0xff]
    %v94 = vld [vmem:[%s1 + $0x1b8] sm:$0xff]
    %v95 = vld [vmem:[%s1 + $0x1c0] sm:$0xff]
    %v96 = vld [vmem:[%s1 + $0x1c8] sm:$0xff]
    %v97 = vld [vmem:[%s1 + $0x1d0] sm:$0xff]
    %v98 = vld [vmem:[%s1 + $0x1d8] sm:$0xff]
    %v99 = vld [vmem:[%s1 + $0x1e0] sm:$0xff]
    %v100 = vld [vmem:[%s1 + $0x1e8] sm:$0xff]
    %v101 = vld [vmem:[%s1 + $0x1f0] sm:$0xff]
    %v102 = vld [vmem:[%s1 + $0x1f8] sm:$0xff]
    %v103 = vld [vmem:[%s1 + $0x200] sm:$0xff]
    %v104 = vld [vmem:[%s1 + $0x208] sm:$0xff]
    %v105 = vld [vmem:[%s1 + $0x210] sm:$0xff]
    %v106 = vld [vmem:[%s1 + $0x218] sm:$0xff]
    %v107 = vld [vmem:[%s1 + $0x220] sm:$0xff]
    %v108 = vld [vmem:[%s1 + $0x228] sm:$0xff]
    %v109 = vld [vmem:[%s1 + $0x230] sm:$0xff]
    %v110 = vld [vmem:[%s1 + $0x238] sm:$0xff]
    %v111 = vld [vmem:[%s1 + $0x240] sm:$0xff]
    %v112 = vld [vmem:[%s1 + $0x248] sm:$0xff]
    %v113 = vld [vmem:[%s1 + $0x250] sm:$0xff]
    %v114 = vld [vmem:[%s1 + $0x258] sm:$0xff]
    %v115 = vld [vmem:[%s1 + $0x260] sm:$0xff]
    %v116 = vld [vmem:[%s1 + $0x268] sm:$0xff]
    %v117 = vld [vmem:[%s1 + $0x270] sm:$0xff]
    %v118 = vld [vmem:[%s1 + $0x278] sm:$0xff]
    %v119 = vld [vmem:[%s1 + $0x280] sm:$0xff]
    %v120 = vld [vmem:[%s1 + $0x288] sm:$0xff]
    %v121 = vld [vmem:[%s1 + $0x290] sm:$0xff]
    %v122 = vld [vmem:[%s1 + $0x298] sm:$0xff]
    %v123 = vld [vmem:[%s1 + $0x2a0] sm:$0xff]
    %v124 = vld [vmem:[%s1 + $0x2a8] sm:$0xff]
    %v125 = vld [vmem:[%s1 + $0x2b0] sm:$0xff]
    %v126 = vld [vmem:[%s1 + $0x2b8] sm:$0xff]
    %v127 = vld [vmem:[%s1 + $0x2c0] sm:$0xff]
    %v128 = vld [vmem:[%s1 + $0x2c8] sm:$0xff]
    %v129 = vld [vmem:[%s1 + $0x2d0] sm:$0xff]
    %v130 = vld [vmem:[%s1 + $0x2d8] sm:$0xff]
    %v131 = vld [vmem:[%s1 + $0x2e0] sm:$0xff]
    %v132 = vld [vmem:[%s1 + $0x2e8] sm:$0xff]
    %v133 = vld [vmem:[%s1 + $0x2f0] sm:$0xff]
    %v134 = vld [vmem:[%s1 + $0x2f8] sm:$0xff]
    %v135 = vld [vmem:[%s1 + $0x300] sm:$0xff]
    %v136 = vld [vmem:[%s1 + $0x308] sm:$0xff]
    %v137 = vld [vmem:[%s1 + $0x310] sm:$0xff]
    %v138 = vld [vmem:[%s1 + $0x318] sm:$0xff]
    %v139 = vld [vmem:[%s1 + $0x320] sm:$0xff]
    %v140 = vld [vmem:[%s1 + $0x328] sm:$0xff]
    %v141 = vld [vmem:[%s1 + $0x330] sm:$0xff]
    %v142 = vld [vmem:[%s1 + $0x338] sm:$0xff]
    %v143 = vld [vmem:[%s1 + $0x340] sm:$0xff]
    %v144 = vld [vmem:[%s1 + $0x348] sm:$0xff]
    %v145 = vld [vmem:[%s1 + $0x350] sm:$0xff]
    %v146 = vld [vmem:[%s1 + $0x358] sm:$0xff]
    %v147 = vld [vmem:[%s1 + $0x360] sm:$0xff]
    %v148 = vld [vmem:[%s1 + $0x368] sm:$0xff]
    %v149 = vld [vmem:[%s1 + $0x370] sm:$0xff]
    %v150 = vld [vmem:[%s1 + $0x378] sm:$0xff]
    %v151 = vld [vmem:[%s1 + $0x380] sm:$0xff]
    %v152 = vld [vmem:[%s1 + $0x388] sm:$0xff]
    %v153 = vld [vmem:[%s1 + $0x390] sm:$0xff]
    %v154 = vld [vmem:[%s1 + $0x398] sm:$0xff]
    %v155 = vld [vmem:[%s1 + $0x3a0] sm:$0xff]
    %v156 = vld [vmem:[%s1 + $0x3a8] sm:$0xff]
    %v157 = vld [vmem:[%s1 + $0x3b0] sm:$0xff]
    %v158 = vld [vmem:[%s1 + $0x3b8] sm:$0xff]
    %v159 = vld [vmem:[%s1 + $0x3c0] sm:$0xff]
    %v160 = vld [vmem:[%s1 + $0x3c8] sm:$0xff]
    %v161 = vld [vmem:[%s1 + $0x3d0] sm:$0xff]
    %v162 = vld [vmem:[%s1 + $0x3d8] sm:$0xff]
    %v163 = vld [vmem:[%s1 + $0x3e0] sm:$0xff]
    %v164 = vld [vmem:[%s1 + $0x3e8] sm:$0xff]
    %v165 = vld [vmem:[%s1 + $0x3f0] sm:$0xff]
    %v166 = vld [vmem:[%s1 + $0x3f8] sm:$0xff]
    %v167 = vld [vmem:[%s1 + $0x400] sm:$0xff]
    %v168 = vld [vmem:[%s1 + $0x408] sm:$0xff]
    %v169 = vld [vmem:[%s1 + $0x410] sm:$0xff]
    %v170 = vld [vmem:[%s1 + $0x418] sm:$0xff]
    %v171 = vld [vmem:[%s1 + $0x420] sm:$0xff]
    %v172 = vld [vmem:[%s1 + $0x428] sm:$0xff]
    %v173 = vld [vmem:[%s1 + $0x430] sm:$0xff]
    %v174 = vld [vmem:[%s1 + $0x438] sm:$0xff]
    %v175 = vld [vmem:[%s1 + $0x440] sm:$0xff]
    %v176 = vld [vmem:[%s1 + $0x448] sm:$0xff]
    %v177 = vld [vmem:[%s1 + $0x450] sm:$0xff]
    %v178 = vld [vmem:[%s1 + $0x458] sm:$0xff]
    %v179 = vld [vmem:[%s1 + $0x460] sm:$0xff]
    %v180 = vld [vmem:[%s1 + $0x468] sm:$0xff]
    %v181 = vld [vmem:[%s1 + $0x470] sm:$0xff]
    %v182 = vld [vmem:[%s1 + $0x478] sm:$0xff]
    %v183 = vld [vmem:[%s1 + $0x480] sm:$0xff]
    %v184 = vld [vmem:[%s1 + $0x488] sm:$0xff]
    %v185 = vld [vmem:[%s1 + $0x490] sm:$0xff]
    %v186 = vld [vmem:[%s1 + $0x498] sm:$0xff]
    %v187 = vld [vmem:[%s1 + $0x4a0] sm:$0xff]
    %v188 = vld [vmem:[%s1 + $0x4a8] sm:$0xff]
    %v189 = vld [vmem:[%s1 + $0x4b0] sm:$0xff]
    %v190 = vld [vmem:[%s1 + $0x4b8] sm:$0xff]
    %v191 = vld [vmem:[%s1 + $0x4c0] sm:$0xff]
    %v192 = vld [vmem:[%s1 + $0x4c8] sm:$0xff]
    %v193 = vld [vmem:[%s1 + $0x4d0] sm:$0xff]
    %v194 = vld [vmem:[%s1 + $0x4d8] sm:$0xff]
    %v195 = vld [vmem:[%s1 + $0x4e0] sm:$0xff]
    %v196 = vld [vmem:[%s1 + $0x4e8] sm:$0xff]
    %v197 = vld [vmem:[%s1 + $0x4f0] sm:$0xff]
    %v198 = vld [vmem:[%s1 + $0x4f8] sm:$0xff]
    %v199 = vld [vmem:[%s1 + $0x500] sm:$0xff]
    %v200 = vld [vmem:[%s1 + $0x508] sm:$0xff]
    %v201 = vld [vmem:[%s1 + $0x510] sm:$0xff]
    %v202 = vld [vmem:[%s1 + $0x518] sm:$0xff]
    %v203 = vld [vmem:[%s1 + $0x520] sm:$0xff]
    %v204 = vld [vmem:[%s1 + $0x528] sm:$0xff]
    %v205 = vld [vmem:[%s1 + $0x530] sm:$0xff]
    %v206 = vld [vmem:[%s1 + $0x538] sm:$0xff]
    %v207 = vld [vmem:[%s1 + $0x540] sm:$0xff]
    %v208 = vld [vmem:[%s1 + $0x548] sm:$0xff]
    %v209 = vld [vmem:[%s1 + $0x550] sm:$0xff]
    %v210 = vld [vmem:[%s1 + $0x558] sm:$0xff]
    %v211 = vld [vmem:[%s1 + $0x560] sm:$0xff]
    %v212 = vld [vmem:[%s1 + $0x568] sm:$0xff]
    %v213 = vld [vmem:[%s1 + $0x570] sm:$0xff]
    %v214 = vld [vmem:[%s1 + $0x578] sm:$0xff]
    %v215 = vld [vmem:[%s1 + $0x580] sm:$0xff]
    %v216 = vld [vmem:[%s1 + $0x588] sm:$0xff]
    %v217 = vld [vmem:[%s1 + $0x590] sm:$0xff]
    %v218 = vld [vmem:[%s1 + $0x598] sm:$0xff]
    %v219 = vld [vmem:[%s1 + $0x5a0] sm:$0xff]
    %v220 = vld [vmem:[%s1 + $0x5a8] sm:$0xff]
    %v221 = vld [vmem:[%s1 + $0x5b0] sm:$0xff]
    %v222 = vld [vmem:[%s1 + $0x5b8] sm:$0xff]
    %v223 = vld [vmem:[%s1 + $0x5c0] sm:$0xff]
    %v224 = vld [vmem:[%s1 + $0x5c8] sm:$0xff]
    %v225 = vld [vmem:[%s1 + $0x5d0] sm:$0xff]
    %v226 = vld [vmem:[%s1 + $0x5d8] sm:$0xff]
    %v227 = vld [vmem:[%s1 + $0x5e0] sm:$0xff]
    %v228 = vld [vmem:[%s1 + $0x5e8] sm:$0xff]
    %v229 = vld [vmem:[%s1 + $0x5f0] sm:$0xff]
    %v230 = vld [vmem:[%s1 + $0x5f8] sm:$0xff]
    %v231 = vld [vmem:[%s1 + $0x600] sm:$0xff]
    %v232 = vld [vmem:[%s1 + $0x608] sm:$0xff]
    %v233 = vld [vmem:[%s1 + $0x610] sm:$0xff]
    %v234 = vld [vmem:[%s1 + $0x618] sm:$0xff]
    %v235 = vld [vmem:[%s1 + $0x620] sm:$0xff]
    %v236 = vld [vmem:[%s1 + $0x628] sm:$0xff]
    %v237 = vld [vmem:[%s1 + $0x630] sm:$0xff]
    %v238 = vld [vmem:[%s1 + $0x638] sm:$0xff]
    %v239 = vld [vmem:[%s1 + $0x640] sm:$0xff]
    %v240 = vld [vmem:[%s1 + $0x648] sm:$0xff]
    %v241 = vld [vmem:[%s1 + $0x650] sm:$0xff]
    %v242 = vld [vmem:[%s1 + $0x658] sm:$0xff]
    %v243 = vld [vmem:[%s1 + $0x660] sm:$0xff]
    %v244 = vld [vmem:[%s1 + $0x668] sm:$0xff]
    %v245 = vld [vmem:[%s1 + $0x670] sm:$0xff]
    %v246 = vld [vmem:[%s1 + $0x678] sm:$0xff]
    %v247 = vld [vmem:[%s1 + $0x680] sm:$0xff]
    %v248 = vld [vmem:[%s1 + $0x688] sm:$0xff]
    %v249 = vld [vmem:[%s1 + $0x690] sm:$0xff]
    %v250 = vld [vmem:[%s1 + $0x698] sm:$0xff]
    %v251 = vld [vmem:[%s1 + $0x6a0] sm:$0xff]
    %v252 = vld [vmem:[%s1 + $0x6a8] sm:$0xff]
    %v253 = vld [vmem:[%s1 + $0x6b0] sm:$0xff]
    %v254 = vld [vmem:[%s1 + $0x6b8] sm:$0xff]
    %v255 = vld [vmem:[%s1 + $0x6c0] sm:$0xff]
    %v256 = vld [vmem:[%s1 + $0x6c8] sm:$0xff]
    %v257 = vld [vmem:[%s1 + $0x6d0] sm:$0xff]
    %v258 = vld [vmem:[%s1 + $0x6d8] sm:$0xff]
    %v259 = vld [vmem:[%s1 + $0x6e0] sm:$0xff]
    %v260 = vld [vmem:[%s1 + $0x6e8] sm:$0xff]
    %v261 = vld [vmem:[%s1 + $0x6f0] sm:$0xff]
    %v262 = vld [vmem:[%s1 + $0x6f8] sm:$0xff]
    %v263 = vld [vmem:[%s1 + $0x700] sm:$0xff]
    %v264 = vld [vmem:[%s1 + $0x708] sm:$0xff]
    %v265 = vld [vmem:[%s1 + $0x710] sm:$0xff]
    %v266 = vld [vmem:[%s1 + $0x718] sm:$0xff]
    %v267 = vld [vmem:[%s1 + $0x720] sm:$0xff]
    %v268 = vld [vmem:[%s1 + $0x728] sm:$0xff]
    %v269 = vld [vmem:[%s1 + $0x730] sm:$0xff]
    %v270 = vld [vmem:[%s1 + $0x738] sm:$0xff]
    %v271 = vld [vmem:[%s1 + $0x740] sm:$0xff]
    %v272 = vld [vmem:[%s1 + $0x748] sm:$0xff]
    %v273 = vld [vmem:[%s1 + $0x750] sm:$0xff]
    %v274 = vld [vmem:[%s1 + $0x758] sm:$0xff]
    %v275 = vld [vmem:[%s1 + $0x760] sm:$0xff]
    %v276 = vld [vmem:[%s1 + $0x768] sm:$0xff]
    %v277 = vld [vmem:[%s1 + $0x770] sm:$0xff]
    %v278 = vld [vmem:[%s1 + $0x778] sm:$0xff]
    %v279 = vld [vmem:[%s1 + $0x780] sm:$0xff]
    %v280 = vld [vmem:[%s1 + $0x788] sm:$0xff]
    %v281 = vld [vmem:[%s1 + $0x790] sm:$0xff]
    %v282 = vld [vmem:[%s1 + $0x798] sm:$0xff]
    %v283 = vld [vmem:[%s1 + $0x7a0] sm:$0xff]
    %v284 = vld [vmem:[%s1 + $0x7a8] sm:$0xff]
    %v285 = vld [vmem:[%s1 + $0x7b0] sm:$0xff]
    %v286 = vld [vmem:[%s1 + $0x7b8] sm:$0xff]
    %v287 = vld [vmem:[%s1 + $0x7c0] sm:$0xff]
    %v288 = vld [vmem:[%s1 + $0x7c8] sm:$0xff]
    %v289 = vld [vmem:[%s1 + $0x7d0] sm:$0xff]
    %v290 = vld [vmem:[%s1 + $0x7d8] sm:$0xff]
    %v291 = vld [vmem:[%s1 + $0x7e0] sm:$0xff]
    %v292 = vld [vmem:[%s1 + $0x7e8] sm:$0xff]
    %v293 = vld [vmem:[%s1 + $0x7f0] sm:$0xff]
    %v294 = vld [vmem:[%s1 + $0x7f8] sm:$0xff]
    %p295 = scmp.eq.s32.totalorder 0, 0
    // Predicated region
    $region38: #{discriminator_forward.9} parent=1 // pred_check
      %p296 = pneg %p295
    $region39: #{discriminator_forward.9} parent=1 // pred_check_branch
      %298 = sbr.rel (%p296) target = $region41
    $region40: #{discriminator_forward.9} parent=1 // pred_region
      %v299 = vld [vmem:[%s2] sm:$0xff]
      %v301 = vlaneseq
      %v302 = vshrl.u32 %v301, 7
      %v303 = vsub.s32 0, %v302
      %v304 = vrot.slane %v299, %v303
      %v305 = vlaneseq
      %v306 = vshrl.u32 %v305, 7
      %v307 = vsub.s32 1, %v306
      %v308 = vrot.slane %v299, %v307
      %v309 = vlaneseq
      %v310 = vshrl.u32 %v309, 7
      %v311 = vsub.s32 2, %v310
      %v312 = vrot.slane %v299, %v311
      %v313 = vlaneseq
      %v314 = vshrl.u32 %v313, 7
      %v315 = vsub.s32 3, %v314
      %v316 = vrot.slane %v299, %v315
      %v317 = vlaneseq
      %v318 = vshrl.u32 %v317, 7
      %v319 = vsub.s32 4, %v318
      %v320 = vrot.slane %v299, %v319
      %v321 = vlaneseq
      %v322 = vshrl.u32 %v321, 7
      %v323 = vsub.s32 5, %v322
      %v324 = vrot.slane %v299, %v323
      %v325 = vlaneseq
      %v326 = vshrl.u32 %v325, 7
      %v327 = vsub.s32 6, %v326
      %v328 = vrot.slane %v299, %v327
      %v329 = vlaneseq
      %v330 = vshrl.u32 %v329, 7
      %v331 = vsub.s32 7, %v330
      %v332 = vrot.slane %v299, %v331
      %v343 = vunpack.c.l.s4 1966171168
      %v344 = vunpack.c.0.s8 %v343
      %v345 = vlaneseq
      %v346 = vshrl.u32 %v345, 7
      %v347 = vsub.s32 %v344, %v346
      %v348 = vrot.slane %v38, %v347
      %v349 = vcombine.high %v348, %v348
      %v351 = vunpack.c.l.s4 1966171168
      %v352 = vunpack.c.0.s8 %v351
      %v353 = vlaneseq
      %v354 = vshrl.u32 %v353, 7
      %v355 = vsub.s32 %v352, %v354
      %v356 = vrot.slane %v348, %v355
      %v358 = vunpack.c.l.s4 1966171168
      %v359 = vunpack.c.0.s8 %v358
      %v360 = vlaneseq
      %v361 = vshrl.u32 %v360, 7
      %v362 = vsub.s32 %v359, %v361
      %v363 = vrot.slane %v349, %v362
      %v364 = vcombine.high %v356, %v356
      %v365 = vcombine.high %v363, %v363
      %v626 = vunpack.c.l.b16 %v39
      %v627 = vunpack.c.h.b16 %v39
      %v628 = vunpack.c.l.b16 %v40
      %v629 = vunpack.c.h.b16 %v40
      %v630 = vunpack.c.l.b16 %v41
      %v631 = vunpack.c.h.b16 %v41
      %v632 = vunpack.c.l.b16 %v42
      %v633 = vunpack.c.h.b16 %v42
      %v634 = vunpack.c.l.b16 %v43
      %v635 = vunpack.c.h.b16 %v43
      %v636 = vunpack.c.l.b16 %v44
      %v637 = vunpack.c.h.b16 %v44
      %v638 = vunpack.c.l.b16 %v45
      %v639 = vunpack.c.h.b16 %v45
      %v640 = vunpack.c.l.b16 %v46
      %v641 = vunpack.c.h.b16 %v46
      %v642 = vunpack.c.l.b16 %v47
      %v643 = vunpack.c.h.b16 %v47
      %v644 = vunpack.c.l.b16 %v48
      %v645 = vunpack.c.h.b16 %v48
      %v646 = vunpack.c.l.b16 %v49
      %v647 = vunpack.c.h.b16 %v49
      %v648 = vunpack.c.l.b16 %v50
      %v649 = vunpack.c.h.b16 %v50
      %v650 = vunpack.c.l.b16 %v51
      %v651 = vunpack.c.h.b16 %v51
      %v652 = vunpack.c.l.b16 %v52
      %v653 = vunpack.c.h.b16 %v52
      %v654 = vunpack.c.l.b16 %v53
      %v655 = vunpack.c.h.b16 %v53
      %v656 = vunpack.c.l.b16 %v54
      %v657 = vunpack.c.h.b16 %v54
      %v658 = vunpack.c.l.b16 %v55
      %v659 = vunpack.c.h.b16 %v55
      %v660 = vunpack.c.l.b16 %v56
      %v661 = vunpack.c.h.b16 %v56
      %v662 = vunpack.c.l.b16 %v57
      %v663 = vunpack.c.h.b16 %v57
      %v664 = vunpack.c.l.b16 %v58
      %v665 = vunpack.c.h.b16 %v58
      %v666 = vunpack.c.l.b16 %v59
      %v667 = vunpack.c.h.b16 %v59
      %v668 = vunpack.c.l.b16 %v60
      %v669 = vunpack.c.h.b16 %v60
      %v670 = vunpack.c.l.b16 %v61
      %v671 = vunpack.c.h.b16 %v61
      %v672 = vunpack.c.l.b16 %v62
      %v673 = vunpack.c.h.b16 %v62
      %v674 = vunpack.c.l.b16 %v63
      %v675 = vunpack.c.h.b16 %v63
      %v676 = vunpack.c.l.b16 %v64
      %v677 = vunpack.c.h.b16 %v64
      %v678 = vunpack.c.l.b16 %v65
      %v679 = vunpack.c.h.b16 %v65
      %v680 = vunpack.c.l.b16 %v66
      %v681 = vunpack.c.h.b16 %v66
      %v682 = vunpack.c.l.b16 %v67
      %v683 = vunpack.c.h.b16 %v67
      %v684 = vunpack.c.l.b16 %v68
      %v685 = vunpack.c.h.b16 %v68
      %v686 = vunpack.c.l.b16 %v69
      %v687 = vunpack.c.h.b16 %v69
      %v688 = vunpack.c.l.b16 %v70
      %v689 = vunpack.c.h.b16 %v70
      %v690 = vunpack.c.l.b16 %v71
      %v691 = vunpack.c.h.b16 %v71
      %v692 = vunpack.c.l.b16 %v72
      %v693 = vunpack.c.h.b16 %v72
      %v694 = vunpack.c.l.b16 %v73
      %v695 = vunpack.c.h.b16 %v73
      %v696 = vunpack.c.l.b16 %v74
      %v697 = vunpack.c.h.b16 %v74
      %v698 = vunpack.c.l.b16 %v75
      %v699 = vunpack.c.h.b16 %v75
      %v700 = vunpack.c.l.b16 %v76
      %v701 = vunpack.c.h.b16 %v76
      %v702 = vunpack.c.l.b16 %v77
      %v703 = vunpack.c.h.b16 %v77
      %v704 = vunpack.c.l.b16 %v78
      %v705 = vunpack.c.h.b16 %v78
      %v706 = vunpack.c.l.b16 %v79
      %v707 = vunpack.c.h.b16 %v79
      %v708 = vunpack.c.l.b16 %v80
      %v709 = vunpack.c.h.b16 %v80
      %v710 = vunpack.c.l.b16 %v81
      %v711 = vunpack.c.h.b16 %v81
      %v712 = vunpack.c.l.b16 %v82
      %v713 = vunpack.c.h.b16 %v82
      %v714 = vunpack.c.l.b16 %v83
      %v715 = vunpack.c.h.b16 %v83
      %v716 = vunpack.c.l.b16 %v84
      %v717 = vunpack.c.h.b16 %v84
      %v718 = vunpack.c.l.b16 %v85
      %v719 = vunpack.c.h.b16 %v85
      %v720 = vunpack.c.l.b16 %v86
      %v721 = vunpack.c.h.b16 %v86
      %v722 = vunpack.c.l.b16 %v87
      %v723 = vunpack.c.h.b16 %v87
      %v724 = vunpack.c.l.b16 %v88
      %v725 = vunpack.c.h.b16 %v88
      %v726 = vunpack.c.l.b16 %v89
      %v727 = vunpack.c.h.b16 %v89
      %v728 = vunpack.c.l.b16 %v90
      %v729 = vunpack.c.h.b16 %v90
      %v730 = vunpack.c.l.b16 %v91
      %v731 = vunpack.c.h.b16 %v91
      %v732 = vunpack.c.l.b16 %v92
      %v733 = vunpack.c.h.b16 %v92
      %v734 = vunpack.c.l.b16 %v93
      %v735 = vunpack.c.h.b16 %v93
      %v736 = vunpack.c.l.b16 %v94
      %v737 = vunpack.c.h.b16 %v94
      %v738 = vunpack.c.l.b16 %v95
      %v739 = vunpack.c.h.b16 %v95
      %v740 = vunpack.c.l.b16 %v96
      %v741 = vunpack.c.h.b16 %v96
      %v742 = vunpack.c.l.b16 %v97
      %v743 = vunpack.c.h.b16 %v97
      %v744 = vunpack.c.l.b16 %v98
      %v745 = vunpack.c.h.b16 %v98
      %v746 = vunpack.c.l.b16 %v99
      %v747 = vunpack.c.h.b16 %v99
      %v748 = vunpack.c.l.b16 %v100
      %v749 = vunpack.c.h.b16 %v100
      %v750 = vunpack.c.l.b16 %v101
      %v751 = vunpack.c.h.b16 %v101
      %v752 = vunpack.c.l.b16 %v102
      %v753 = vunpack.c.h.b16 %v102
      %v754 = vunpack.c.l.b16 %v103
      %v755 = vunpack.c.h.b16 %v103
      %v756 = vunpack.c.l.b16 %v104
      %v757 = vunpack.c.h.b16 %v104
      %v758 = vunpack.c.l.b16 %v105
      %v759 = vunpack.c.h.b16 %v105
      %v760 = vunpack.c.l.b16 %v106
      %v761 = vunpack.c.h.b16 %v106
      %v762 = vunpack.c.l.b16 %v107
      %v763 = vunpack.c.h.b16 %v107
      %v764 = vunpack.c.l.b16 %v108
      %v765 = vunpack.c.h.b16 %v108
      %v766 = vunpack.c.l.b16 %v109
      %v767 = vunpack.c.h.b16 %v109
      %v768 = vunpack.c.l.b16 %v110
      %v769 = vunpack.c.h.b16 %v110
      %v770 = vunpack.c.l.b16 %v111
      %v771 = vunpack.c.h.b16 %v111
      %v772 = vunpack.c.l.b16 %v112
      %v773 = vunpack.c.h.b16 %v112
      %v774 = vunpack.c.l.b16 %v113
      %v775 = vunpack.c.h.b16 %v113
      %v776 = vunpack.c.l.b16 %v114
      %v777 = vunpack.c.h.b16 %v114
      %v778 = vunpack.c.l.b16 %v115
      %v779 = vunpack.c.h.b16 %v115
      %v780 = vunpack.c.l.b16 %v116
      %v781 = vunpack.c.h.b16 %v116
      %v782 = vunpack.c.l.b16 %v117
      %v783 = vunpack.c.h.b16 %v117
      %v784 = vunpack.c.l.b16 %v118
      %v785 = vunpack.c.h.b16 %v118
      %v786 = vunpack.c.l.b16 %v119
      %v787 = vunpack.c.h.b16 %v119
      %v788 = vunpack.c.l.b16 %v120
      %v789 = vunpack.c.h.b16 %v120
      %v790 = vunpack.c.l.b16 %v121
      %v791 = vunpack.c.h.b16 %v121
      %v792 = vunpack.c.l.b16 %v122
      %v793 = vunpack.c.h.b16 %v122
      %v794 = vunpack.c.l.b16 %v123
      %v795 = vunpack.c.h.b16 %v123
      %v796 = vunpack.c.l.b16 %v124
      %v797 = vunpack.c.h.b16 %v124
      %v798 = vunpack.c.l.b16 %v125
      %v799 = vunpack.c.h.b16 %v125
      %v800 = vunpack.c.l.b16 %v126
      %v801 = vunpack.c.h.b16 %v126
      %v802 = vunpack.c.l.b16 %v127
      %v803 = vunpack.c.h.b16 %v127
      %v804 = vunpack.c.l.b16 %v128
      %v805 = vunpack.c.h.b16 %v128
      %v806 = vunpack.c.l.b16 %v129
      %v807 = vunpack.c.h.b16 %v129
      %v808 = vunpack.c.l.b16 %v130
      %v809 = vunpack.c.h.b16 %v130
      %v810 = vunpack.c.l.b16 %v131
      %v811 = vunpack.c.h.b16 %v131
      %v812 = vunpack.c.l.b16 %v132
      %v813 = vunpack.c.h.b16 %v132
      %v814 = vunpack.c.l.b16 %v133
      %v815 = vunpack.c.h.b16 %v133
      %v816 = vunpack.c.l.b16 %v134
      %v817 = vunpack.c.h.b16 %v134
      %v818 = vunpack.c.l.b16 %v135
      %v819 = vunpack.c.h.b16 %v135
      %v820 = vunpack.c.l.b16 %v136
      %v821 = vunpack.c.h.b16 %v136
      %v822 = vunpack.c.l.b16 %v137
      %v823 = vunpack.c.h.b16 %v137
      %v824 = vunpack.c.l.b16 %v138
      %v825 = vunpack.c.h.b16 %v138
      %v826 = vunpack.c.l.b16 %v139
      %v827 = vunpack.c.h.b16 %v139
      %v828 = vunpack.c.l.b16 %v140
      %v829 = vunpack.c.h.b16 %v140
      %v830 = vunpack.c.l.b16 %v141
      %v831 = vunpack.c.h.b16 %v141
      %v832 = vunpack.c.l.b16 %v142
      %v833 = vunpack.c.h.b16 %v142
      %v834 = vunpack.c.l.b16 %v143
      %v835 = vunpack.c.h.b16 %v143
      %v836 = vunpack.c.l.b16 %v144
      %v837 = vunpack.c.h.b16 %v144
      %v838 = vunpack.c.l.b16 %v145
      %v839 = vunpack.c.h.b16 %v145
      %v840 = vunpack.c.l.b16 %v146
      %v841 = vunpack.c.h.b16 %v146
      %v842 = vunpack.c.l.b16 %v147
      %v843 = vunpack.c.h.b16 %v147
      %v844 = vunpack.c.l.b16 %v148
      %v845 = vunpack.c.h.b16 %v148
      %v846 = vunpack.c.l.b16 %v149
      %v847 = vunpack.c.h.b16 %v149
      %v848 = vunpack.c.l.b16 %v150
      %v849 = vunpack.c.h.b16 %v150
      %v850 = vunpack.c.l.b16 %v151
      %v851 = vunpack.c.h.b16 %v151
      %v852 = vunpack.c.l.b16 %v152
      %v853 = vunpack.c.h.b16 %v152
      %v854 = vunpack.c.l.b16 %v153
      %v855 = vunpack.c.h.b16 %v153
      %v856 = vunpack.c.l.b16 %v154
      %v857 = vunpack.c.h.b16 %v154
      %v858 = vunpack.c.l.b16 %v155
      %v859 = vunpack.c.h.b16 %v155
      %v860 = vunpack.c.l.b16 %v156
      %v861 = vunpack.c.h.b16 %v156
      %v862 = vunpack.c.l.b16 %v157
      %v863 = vunpack.c.h.b16 %v157
      %v864 = vunpack.c.l.b16 %v158
      %v865 = vunpack.c.h.b16 %v158
      %v866 = vunpack.c.l.b16 %v159
      %v867 = vunpack.c.h.b16 %v159
      %v868 = vunpack.c.l.b16 %v160
      %v869 = vunpack.c.h.b16 %v160
      %v870 = vunpack.c.l.b16 %v161
      %v871 = vunpack.c.h.b16 %v161
      %v872 = vunpack.c.l.b16 %v162
      %v873 = vunpack.c.h.b16 %v162
      %v874 = vunpack.c.l.b16 %v163
      %v875 = vunpack.c.h.b16 %v163
      %v876 = vunpack.c.l.b16 %v164
      %v877 = vunpack.c.h.b16 %v164
      %v878 = vunpack.c.l.b16 %v165
      %v879 = vunpack.c.h.b16 %v165
      %v880 = vunpack.c.l.b16 %v166
      %v881 = vunpack.c.h.b16 %v166
      %v882 = vunpack.c.l.b16 %v167
      %v883 = vunpack.c.h.b16 %v167
      %v884 = vunpack.c.l.b16 %v168
      %v885 = vunpack.c.h.b16 %v168
      %v886 = vunpack.c.l.b16 %v169
      %v887 = vunpack.c.h.b16 %v169
      %v888 = vunpack.c.l.b16 %v170
      %v889 = vunpack.c.h.b16 %v170
      %v890 = vunpack.c.l.b16 %v171
      %v891 = vunpack.c.h.b16 %v171
      %v892 = vunpack.c.l.b16 %v172
      %v893 = vunpack.c.h.b16 %v172
      %v894 = vunpack.c.l.b16 %v173
      %v895 = vunpack.c.h.b16 %v173
      %v896 = vunpack.c.l.b16 %v174
      %v897 = vunpack.c.h.b16 %v174
      %v898 = vunpack.c.l.b16 %v175
      %v899 = vunpack.c.h.b16 %v175
      %v900 = vunpack.c.l.b16 %v176
      %v901 = vunpack.c.h.b16 %v176
      %v902 = vunpack.c.l.b16 %v177
      %v903 = vunpack.c.h.b16 %v177
      %v904 = vunpack.c.l.b16 %v178
      %v905 = vunpack.c.h.b16 %v178
      %v906 = vunpack.c.l.b16 %v179
      %v907 = vunpack.c.h.b16 %v179
      %v908 = vunpack.c.l.b16 %v180
      %v909 = vunpack.c.h.b16 %v180
      %v910 = vunpack.c.l.b16 %v181
      %v911 = vunpack.c.h.b16 %v181
      %v912 = vunpack.c.l.b16 %v182
      %v913 = vunpack.c.h.b16 %v182
      %v914 = vunpack.c.l.b16 %v183
      %v915 = vunpack.c.h.b16 %v183
      %v916 = vunpack.c.l.b16 %v184
      %v917 = vunpack.c.h.b16 %v184
      %v918 = vunpack.c.l.b16 %v185
      %v919 = vunpack.c.h.b16 %v185
      %v920 = vunpack.c.l.b16 %v186
      %v921 = vunpack.c.h.b16 %v186
      %v922 = vunpack.c.l.b16 %v187
      %v923 = vunpack.c.h.b16 %v187
      %v924 = vunpack.c.l.b16 %v188
      %v925 = vunpack.c.h.b16 %v188
      %v926 = vunpack.c.l.b16 %v189
      %v927 = vunpack.c.h.b16 %v189
      %v928 = vunpack.c.l.b16 %v190
      %v929 = vunpack.c.h.b16 %v190
      %v930 = vunpack.c.l.b16 %v191
      %v931 = vunpack.c.h.b16 %v191
      %v932 = vunpack.c.l.b16 %v192
      %v933 = vunpack.c.h.b16 %v192
      %v934 = vunpack.c.l.b16 %v193
      %v935 = vunpack.c.h.b16 %v193
      %v936 = vunpack.c.l.b16 %v194
      %v937 = vunpack.c.h.b16 %v194
      %v938 = vunpack.c.l.b16 %v195
      %v939 = vunpack.c.h.b16 %v195
      %v940 = vunpack.c.l.b16 %v196
      %v941 = vunpack.c.h.b16 %v196
      %v942 = vunpack.c.l.b16 %v197
      %v943 = vunpack.c.h.b16 %v197
      %v944 = vunpack.c.l.b16 %v198
      %v945 = vunpack.c.h.b16 %v198
      %v946 = vunpack.c.l.b16 %v199
      %v947 = vunpack.c.h.b16 %v199
      %v948 = vunpack.c.l.b16 %v200
      %v949 = vunpack.c.h.b16 %v200
      %v950 = vunpack.c.l.b16 %v201
      %v951 = vunpack.c.h.b16 %v201
      %v952 = vunpack.c.l.b16 %v202
      %v953 = vunpack.c.h.b16 %v202
      %v954 = vunpack.c.l.b16 %v203
      %v955 = vunpack.c.h.b16 %v203
      %v956 = vunpack.c.l.b16 %v204
      %v957 = vunpack.c.h.b16 %v204
      %v958 = vunpack.c.l.b16 %v205
      %v959 = vunpack.c.h.b16 %v205
      %v960 = vunpack.c.l.b16 %v206
      %v961 = vunpack.c.h.b16 %v206
      %v962 = vunpack.c.l.b16 %v207
      %v963 = vunpack.c.h.b16 %v207
      %v964 = vunpack.c.l.b16 %v208
      %v965 = vunpack.c.h.b16 %v208
      %v966 = vunpack.c.l.b16 %v209
      %v967 = vunpack.c.h.b16 %v209
      %v968 = vunpack.c.l.b16 %v210
      %v969 = vunpack.c.h.b16 %v210
      %v970 = vunpack.c.l.b16 %v211
      %v971 = vunpack.c.h.b16 %v211
      %v972 = vunpack.c.l.b16 %v212
      %v973 = vunpack.c.h.b16 %v212
      %v974 = vunpack.c.l.b16 %v213
      %v975 = vunpack.c.h.b16 %v213
      %v976 = vunpack.c.l.b16 %v214
      %v977 = vunpack.c.h.b16 %v214
      %v978 = vunpack.c.l.b16 %v215
      %v979 = vunpack.c.h.b16 %v215
      %v980 = vunpack.c.l.b16 %v216
      %v981 = vunpack.c.h.b16 %v216
      %v982 = vunpack.c.l.b16 %v217
      %v983 = vunpack.c.h.b16 %v217
      %v984 = vunpack.c.l.b16 %v218
      %v985 = vunpack.c.h.b16 %v218
      %v986 = vunpack.c.l.b16 %v219
      %v987 = vunpack.c.h.b16 %v219
      %v988 = vunpack.c.l.b16 %v220
      %v989 = vunpack.c.h.b16 %v220
      %v990 = vunpack.c.l.b16 %v221
      %v991 = vunpack.c.h.b16 %v221
      %v992 = vunpack.c.l.b16 %v222
      %v993 = vunpack.c.h.b16 %v222
      %v994 = vunpack.c.l.b16 %v223
      %v995 = vunpack.c.h.b16 %v223
      %v996 = vunpack.c.l.b16 %v224
      %v997 = vunpack.c.h.b16 %v224
      %v998 = vunpack.c.l.b16 %v225
      %v999 = vunpack.c.h.b16 %v225
      %v1000 = vunpack.c.l.b16 %v226
      %v1001 = vunpack.c.h.b16 %v226
      %v1002 = vunpack.c.l.b16 %v227
      %v1003 = vunpack.c.h.b16 %v227
      %v1004 = vunpack.c.l.b16 %v228
      %v1005 = vunpack.c.h.b16 %v228
      %v1006 = vunpack.c.l.b16 %v229
      %v1007 = vunpack.c.h.b16 %v229
      %v1008 = vunpack.c.l.b16 %v230
      %v1009 = vunpack.c.h.b16 %v230
      %v1010 = vunpack.c.l.b16 %v231
      %v1011 = vunpack.c.h.b16 %v231
      %v1012 = vunpack.c.l.b16 %v232
      %v1013 = vunpack.c.h.b16 %v232
      %v1014 = vunpack.c.l.b16 %v233
      %v1015 = vunpack.c.h.b16 %v233
      %v1016 = vunpack.c.l.b16 %v234
      %v1017 = vunpack.c.h.b16 %v234
      %v1018 = vunpack.c.l.b16 %v235
      %v1019 = vunpack.c.h.b16 %v235
      %v1020 = vunpack.c.l.b16 %v236
      %v1021 = vunpack.c.h.b16 %v236
      %v1022 = vunpack.c.l.b16 %v237
      %v1023 = vunpack.c.h.b16 %v237
      %v1024 = vunpack.c.l.b16 %v238
      %v1025 = vunpack.c.h.b16 %v238
      %v1026 = vunpack.c.l.b16 %v239
      %v1027 = vunpack.c.h.b16 %v239
      %v1028 = vunpack.c.l.b16 %v240
      %v1029 = vunpack.c.h.b16 %v240
      %v1030 = vunpack.c.l.b16 %v241
      %v1031 = vunpack.c.h.b16 %v241
      %v1032 = vunpack.c.l.b16 %v242
      %v1033 = vunpack.c.h.b16 %v242
      %v1034 = vunpack.c.l.b16 %v243
      %v1035 = vunpack.c.h.b16 %v243
      %v1036 = vunpack.c.l.b16 %v244
      %v1037 = vunpack.c.h.b16 %v244
      %v1038 = vunpack.c.l.b16 %v245
      %v1039 = vunpack.c.h.b16 %v245
      %v1040 = vunpack.c.l.b16 %v246
      %v1041 = vunpack.c.h.b16 %v246
      %v1042 = vunpack.c.l.b16 %v247
      %v1043 = vunpack.c.h.b16 %v247
      %v1044 = vunpack.c.l.b16 %v248
      %v1045 = vunpack.c.h.b16 %v248
      %v1046 = vunpack.c.l.b16 %v249
      %v1047 = vunpack.c.h.b16 %v249
      %v1048 = vunpack.c.l.b16 %v250
      %v1049 = vunpack.c.h.b16 %v250
      %v1050 = vunpack.c.l.b16 %v251
      %v1051 = vunpack.c.h.b16 %v251
      %v1052 = vunpack.c.l.b16 %v252
      %v1053 = vunpack.c.h.b16 %v252
      %v1054 = vunpack.c.l.b16 %v253
      %v1055 = vunpack.c.h.b16 %v253
      %v1056 = vunpack.c.l.b16 %v254
      %v1057 = vunpack.c.h.b16 %v254
      %v1058 = vunpack.c.l.b16 %v255
      %v1059 = vunpack.c.h.b16 %v255
      %v1060 = vunpack.c.l.b16 %v256
      %v1061 = vunpack.c.h.b16 %v256
      %v1062 = vunpack.c.l.b16 %v257
      %v1063 = vunpack.c.h.b16 %v257
      %v1064 = vunpack.c.l.b16 %v258
      %v1065 = vunpack.c.h.b16 %v258
      %v1066 = vunpack.c.l.b16 %v259
      %v1067 = vunpack.c.h.b16 %v259
      %v1068 = vunpack.c.l.b16 %v260
      %v1069 = vunpack.c.h.b16 %v260
      %v1070 = vunpack.c.l.b16 %v261
      %v1071 = vunpack.c.h.b16 %v261
      %v1072 = vunpack.c.l.b16 %v262
      %v1073 = vunpack.c.h.b16 %v262
      %v1074 = vunpack.c.l.b16 %v263
      %v1075 = vunpack.c.h.b16 %v263
      %v1076 = vunpack.c.l.b16 %v264
      %v1077 = vunpack.c.h.b16 %v264
      %v1078 = vunpack.c.l.b16 %v265
      %v1079 = vunpack.c.h.b16 %v265
      %v1080 = vunpack.c.l.b16 %v266
      %v1081 = vunpack.c.h.b16 %v266
      %v1082 = vunpack.c.l.b16 %v267
      %v1083 = vunpack.c.h.b16 %v267
      %v1084 = vunpack.c.l.b16 %v268
      %v1085 = vunpack.c.h.b16 %v268
      %v1086 = vunpack.c.l.b16 %v269
      %v1087 = vunpack.c.h.b16 %v269
      %v1088 = vunpack.c.l.b16 %v270
      %v1089 = vunpack.c.h.b16 %v270
      %v1090 = vunpack.c.l.b16 %v271
      %v1091 = vunpack.c.h.b16 %v271
      %v1092 = vunpack.c.l.b16 %v272
      %v1093 = vunpack.c.h.b16 %v272
      %v1094 = vunpack.c.l.b16 %v273
      %v1095 = vunpack.c.h.b16 %v273
      %v1096 = vunpack.c.l.b16 %v274
      %v1097 = vunpack.c.h.b16 %v274
      %v1098 = vunpack.c.l.b16 %v275
      %v1099 = vunpack.c.h.b16 %v275
      %v1100 = vunpack.c.l.b16 %v276
      %v1101 = vunpack.c.h.b16 %v276
      %v1102 = vunpack.c.l.b16 %v277
      %v1103 = vunpack.c.h.b16 %v277
      %v1104 = vunpack.c.l.b16 %v278
      %v1105 = vunpack.c.h.b16 %v278
      %v1106 = vunpack.c.l.b16 %v279
      %v1107 = vunpack.c.h.b16 %v279
      %v1108 = vunpack.c.l.b16 %v280
      %v1109 = vunpack.c.h.b16 %v280
      %v1110 = vunpack.c.l.b16 %v281
      %v1111 = vunpack.c.h.b16 %v281
      %v1112 = vunpack.c.l.b16 %v282
      %v1113 = vunpack.c.h.b16 %v282
      %v1114 = vunpack.c.l.b16 %v283
      %v1115 = vunpack.c.h.b16 %v283
      %v1116 = vunpack.c.l.b16 %v284
      %v1117 = vunpack.c.h.b16 %v284
      %v1118 = vunpack.c.l.b16 %v285
      %v1119 = vunpack.c.h.b16 %v285
      %v1120 = vunpack.c.l.b16 %v286
      %v1121 = vunpack.c.h.b16 %v286
      %v1122 = vunpack.c.l.b16 %v287
      %v1123 = vunpack.c.h.b16 %v287
      %v1124 = vunpack.c.l.b16 %v288
      %v1125 = vunpack.c.h.b16 %v288
      %v1126 = vunpack.c.l.b16 %v289
      %v1127 = vunpack.c.h.b16 %v289
      %v1128 = vunpack.c.l.b16 %v290
      %v1129 = vunpack.c.h.b16 %v290
      %v1130 = vunpack.c.l.b16 %v291
      %v1131 = vunpack.c.h.b16 %v291
      %v1132 = vunpack.c.l.b16 %v292
      %v1133 = vunpack.c.h.b16 %v292
      %v1134 = vunpack.c.l.b16 %v293
      %v1135 = vunpack.c.h.b16 %v293
      %v1136 = vunpack.c.l.b16 %v294
      %v1137 = vunpack.c.h.b16 %v294
      %v1138 = vpack.c.b16 %v634, %v626
      %v1139 = vpack.c.b16 %v635, %v627
      %v1140 = vpack.c.b16 %v636, %v628
      %v1141 = vpack.c.b16 %v637, %v629
      %v1142 = vpack.c.b16 %v638, %v630
      %v1143 = vpack.c.b16 %v639, %v631
      %v1144 = vpack.c.b16 %v640, %v632
      %v1145 = vpack.c.b16 %v641, %v633
      %v1146 = vpack.c.b16 %v650, %v642
      %v1147 = vpack.c.b16 %v651, %v643
      %v1148 = vpack.c.b16 %v652, %v644
      %v1149 = vpack.c.b16 %v653, %v645
      %v1150 = vpack.c.b16 %v654, %v646
      %v1151 = vpack.c.b16 %v655, %v647
      %v1152 = vpack.c.b16 %v656, %v648
      %v1153 = vpack.c.b16 %v657, %v649
      %v1154 = vpack.c.b16 %v666, %v658
      %v1155 = vpack.c.b16 %v667, %v659
      %v1156 = vpack.c.b16 %v668, %v660
      %v1157 = vpack.c.b16 %v669, %v661
      %v1158 = vpack.c.b16 %v670, %v662
      %v1159 = vpack.c.b16 %v671, %v663
      %v1160 = vpack.c.b16 %v672, %v664
      %v1161 = vpack.c.b16 %v673, %v665
      %v1162 = vpack.c.b16 %v682, %v674
      %v1163 = vpack.c.b16 %v683, %v675
      %v1164 = vpack.c.b16 %v684, %v676
      %v1165 = vpack.c.b16 %v685, %v677
      %v1166 = vpack.c.b16 %v686, %v678
      %v1167 = vpack.c.b16 %v687, %v679
      %v1168 = vpack.c.b16 %v688, %v680
      %v1169 = vpack.c.b16 %v689, %v681
      %v1170 = vpack.c.b16 %v698, %v690
      %v1171 = vpack.c.b16 %v699, %v691
      %v1172 = vpack.c.b16 %v700, %v692
      %v1173 = vpack.c.b16 %v701, %v693
      %v1174 = vpack.c.b16 %v702, %v694
      %v1175 = vpack.c.b16 %v703, %v695
      %v1176 = vpack.c.b16 %v704, %v696
      %v1177 = vpack.c.b16 %v705, %v697
      %v1178 = vpack.c.b16 %v714, %v706
      %v1179 = vpack.c.b16 %v715, %v707
      %v1180 = vpack.c.b16 %v716, %v708
      %v1181 = vpack.c.b16 %v717, %v709
      %v1182 = vpack.c.b16 %v718, %v710
      %v1183 = vpack.c.b16 %v719, %v711
      %v1184 = vpack.c.b16 %v720, %v712
      %v1185 = vpack.c.b16 %v721, %v713
      %v1186 = vpack.c.b16 %v730, %v722
      %v1187 = vpack.c.b16 %v731, %v723
      %v1188 = vpack.c.b16 %v732, %v724
      %v1189 = vpack.c.b16 %v733, %v725
      %v1190 = vpack.c.b16 %v734, %v726
      %v1191 = vpack.c.b16 %v735, %v727
      %v1192 = vpack.c.b16 %v736, %v728
      %v1193 = vpack.c.b16 %v737, %v729
      %v1194 = vpack.c.b16 %v746, %v738
      %v1195 = vpack.c.b16 %v747, %v739
      %v1196 = vpack.c.b16 %v748, %v740
      %v1197 = vpack.c.b16 %v749, %v741
      %v1198 = vpack.c.b16 %v750, %v742
      %v1199 = vpack.c.b16 %v751, %v743
      %v1200 = vpack.c.b16 %v752, %v744
      %v1201 = vpack.c.b16 %v753, %v745
      %v1202 = vpack.c.b16 %v762, %v754
      %v1203 = vpack.c.b16 %v763, %v755
      %v1204 = vpack.c.b16 %v764, %v756
      %v1205 = vpack.c.b16 %v765, %v757
      %v1206 = vpack.c.b16 %v766, %v758
      %v1207 = vpack.c.b16 %v767, %v759
      %v1208 = vpack.c.b16 %v768, %v760
      %v1209 = vpack.c.b16 %v769, %v761
      %v1210 = vpack.c.b16 %v778, %v770
      %v1211 = vpack.c.b16 %v779, %v771
      %v1212 = vpack.c.b16 %v780, %v772
      %v1213 = vpack.c.b16 %v781, %v773
      %v1214 = vpack.c.b16 %v782, %v774
      %v1215 = vpack.c.b16 %v783, %v775
      %v1216 = vpack.c.b16 %v784, %v776
      %v1217 = vpack.c.b16 %v785, %v777
      %v1218 = vpack.c.b16 %v794, %v786
      %v1219 = vpack.c.b16 %v795, %v787
      %v1220 = vpack.c.b16 %v796, %v788
      %v1221 = vpack.c.b16 %v797, %v789
      %v1222 = vpack.c.b16 %v798, %v790
      %v1223 = vpack.c.b16 %v799, %v791
      %v1224 = vpack.c.b16 %v800, %v792
      %v1225 = vpack.c.b16 %v801, %v793
      %v1226 = vpack.c.b16 %v810, %v802
      %v1227 = vpack.c.b16 %v811, %v803
      %v1228 = vpack.c.b16 %v812, %v804
      %v1229 = vpack.c.b16 %v813, %v805
      %v1230 = vpack.c.b16 %v814, %v806
      %v1231 = vpack.c.b16 %v815, %v807
      %v1232 = vpack.c.b16 %v816, %v808
      %v1233 = vpack.c.b16 %v817, %v809
      %v1234 = vpack.c.b16 %v826, %v818
      %v1235 = vpack.c.b16 %v827, %v819
      %v1236 = vpack.c.b16 %v828, %v820
      %v1237 = vpack.c.b16 %v829, %v821
      %v1238 = vpack.c.b16 %v830, %v822
      %v1239 = vpack.c.b16 %v831, %v823
      %v1240 = vpack.c.b16 %v832, %v824
      %v1241 = vpack.c.b16 %v833, %v825
      %v1242 = vpack.c.b16 %v842, %v834
      %v1243 = vpack.c.b16 %v843, %v835
      %v1244 = vpack.c.b16 %v844, %v836
      %v1245 = vpack.c.b16 %v845, %v837
      %v1246 = vpack.c.b16 %v846, %v838
      %v1247 = vpack.c.b16 %v847, %v839
      %v1248 = vpack.c.b16 %v848, %v840
      %v1249 = vpack.c.b16 %v849, %v841
      %v1250 = vpack.c.b16 %v858, %v850
      %v1251 = vpack.c.b16 %v859, %v851
      %v1252 = vpack.c.b16 %v860, %v852
      %v1253 = vpack.c.b16 %v861, %v853
      %v1254 = vpack.c.b16 %v862, %v854
      %v1255 = vpack.c.b16 %v863, %v855
      %v1256 = vpack.c.b16 %v864, %v856
      %v1257 = vpack.c.b16 %v865, %v857
      %v1258 = vpack.c.b16 %v874, %v866
      %v1259 = vpack.c.b16 %v875, %v867
      %v1260 = vpack.c.b16 %v876, %v868
      %v1261 = vpack.c.b16 %v877, %v869
      %v1262 = vpack.c.b16 %v878, %v870
      %v1263 = vpack.c.b16 %v879, %v871
      %v1264 = vpack.c.b16 %v880, %v872
      %v1265 = vpack.c.b16 %v881, %v873
      %v1266 = vpack.c.b16 %v890, %v882
      %v1267 = vpack.c.b16 %v891, %v883
      %v1268 = vpack.c.b16 %v892, %v884
      %v1269 = vpack.c.b16 %v893, %v885
      %v1270 = vpack.c.b16 %v894, %v886
      %v1271 = vpack.c.b16 %v895, %v887
      %v1272 = vpack.c.b16 %v896, %v888
      %v1273 = vpack.c.b16 %v897, %v889
      %v1274 = vpack.c.b16 %v906, %v898
      %v1275 = vpack.c.b16 %v907, %v899
      %v1276 = vpack.c.b16 %v908, %v900
      %v1277 = vpack.c.b16 %v909, %v901
      %v1278 = vpack.c.b16 %v910, %v902
      %v1279 = vpack.c.b16 %v911, %v903
      %v1280 = vpack.c.b16 %v912, %v904
      %v1281 = vpack.c.b16 %v913, %v905
      %v1282 = vpack.c.b16 %v922, %v914
      %v1283 = vpack.c.b16 %v923, %v915
      %v1284 = vpack.c.b16 %v924, %v916
      %v1285 = vpack.c.b16 %v925, %v917
      %v1286 = vpack.c.b16 %v926, %v918
      %v1287 = vpack.c.b16 %v927, %v919
      %v1288 = vpack.c.b16 %v928, %v920
      %v1289 = vpack.c.b16 %v929, %v921
      %v1290 = vpack.c.b16 %v938, %v930
      %v1291 = vpack.c.b16 %v939, %v931
      %v1292 = vpack.c.b16 %v940, %v932
      %v1293 = vpack.c.b16 %v941, %v933
      %v1294 = vpack.c.b16 %v942, %v934
      %v1295 = vpack.c.b16 %v943, %v935
      %v1296 = vpack.c.b16 %v944, %v936
      %v1297 = vpack.c.b16 %v945, %v937
      %v1298 = vpack.c.b16 %v954, %v946
      %v1299 = vpack.c.b16 %v955, %v947
      %v1300 = vpack.c.b16 %v956, %v948
      %v1301 = vpack.c.b16 %v957, %v949
      %v1302 = vpack.c.b16 %v958, %v950
      %v1303 = vpack.c.b16 %v959, %v951
      %v1304 = vpack.c.b16 %v960, %v952
      %v1305 = vpack.c.b16 %v961, %v953
      %v1306 = vpack.c.b16 %v970, %v962
      %v1307 = vpack.c.b16 %v971, %v963
      %v1308 = vpack.c.b16 %v972, %v964
      %v1309 = vpack.c.b16 %v973, %v965
      %v1310 = vpack.c.b16 %v974, %v966
      %v1311 = vpack.c.b16 %v975, %v967
      %v1312 = vpack.c.b16 %v976, %v968
      %v1313 = vpack.c.b16 %v977, %v969
      %v1314 = vpack.c.b16 %v986, %v978
      %v1315 = vpack.c.b16 %v987, %v979
      %v1316 = vpack.c.b16 %v988, %v980
      %v1317 = vpack.c.b16 %v989, %v981
      %v1318 = vpack.c.b16 %v990, %v982
      %v1319 = vpack.c.b16 %v991, %v983
      %v1320 = vpack.c.b16 %v992, %v984
      %v1321 = vpack.c.b16 %v993, %v985
      %v1322 = vpack.c.b16 %v1002, %v994
      %v1323 = vpack.c.b16 %v1003, %v995
      %v1324 = vpack.c.b16 %v1004, %v996
      %v1325 = vpack.c.b16 %v1005, %v997
      %v1326 = vpack.c.b16 %v1006, %v998
      %v1327 = vpack.c.b16 %v1007, %v999
      %v1328 = vpack.c.b16 %v1008, %v1000
      %v1329 = vpack.c.b16 %v1009, %v1001
      %v1330 = vpack.c.b16 %v1018, %v1010
      %v1331 = vpack.c.b16 %v1019, %v1011
      %v1332 = vpack.c.b16 %v1020, %v1012
      %v1333 = vpack.c.b16 %v1021, %v1013
      %v1334 = vpack.c.b16 %v1022, %v1014
      %v1335 = vpack.c.b16 %v1023, %v1015
      %v1336 = vpack.c.b16 %v1024, %v1016
      %v1337 = vpack.c.b16 %v1025, %v1017
      %v1338 = vpack.c.b16 %v1034, %v1026
      %v1339 = vpack.c.b16 %v1035, %v1027
      %v1340 = vpack.c.b16 %v1036, %v1028
      %v1341 = vpack.c.b16 %v1037, %v1029
      %v1342 = vpack.c.b16 %v1038, %v1030
      %v1343 = vpack.c.b16 %v1039, %v1031
      %v1344 = vpack.c.b16 %v1040, %v1032
      %v1345 = vpack.c.b16 %v1041, %v1033
      %v1346 = vpack.c.b16 %v1050, %v1042
      %v1347 = vpack.c.b16 %v1051, %v1043
      %v1348 = vpack.c.b16 %v1052, %v1044
      %v1349 = vpack.c.b16 %v1053, %v1045
      %v1350 = vpack.c.b16 %v1054, %v1046
      %v1351 = vpack.c.b16 %v1055, %v1047
      %v1352 = vpack.c.b16 %v1056, %v1048
      %v1353 = vpack.c.b16 %v1057, %v1049
      %v1354 = vpack.c.b16 %v1066, %v1058
      %v1355 = vpack.c.b16 %v1067, %v1059
      %v1356 = vpack.c.b16 %v1068, %v1060
      %v1357 = vpack.c.b16 %v1069, %v1061
      %v1358 = vpack.c.b16 %v1070, %v1062
      %v1359 = vpack.c.b16 %v1071, %v1063
      %v1360 = vpack.c.b16 %v1072, %v1064
      %v1361 = vpack.c.b16 %v1073, %v1065
      %v1362 = vpack.c.b16 %v1082, %v1074
      %v1363 = vpack.c.b16 %v1083, %v1075
      %v1364 = vpack.c.b16 %v1084, %v1076
      %v1365 = vpack.c.b16 %v1085, %v1077
      %v1366 = vpack.c.b16 %v1086, %v1078
      %v1367 = vpack.c.b16 %v1087, %v1079
      %v1368 = vpack.c.b16 %v1088, %v1080
      %v1369 = vpack.c.b16 %v1089, %v1081
      %v1370 = vpack.c.b16 %v1098, %v1090
      %v1371 = vpack.c.b16 %v1099, %v1091
      %v1372 = vpack.c.b16 %v1100, %v1092
      %v1373 = vpack.c.b16 %v1101, %v1093
      %v1374 = vpack.c.b16 %v1102, %v1094
      %v1375 = vpack.c.b16 %v1103, %v1095
      %v1376 = vpack.c.b16 %v1104, %v1096
      %v1377 = vpack.c.b16 %v1105, %v1097
      %v1378 = vpack.c.b16 %v1114, %v1106
      %v1379 = vpack.c.b16 %v1115, %v1107
      %v1380 = vpack.c.b16 %v1116, %v1108
      %v1381 = vpack.c.b16 %v1117, %v1109
      %v1382 = vpack.c.b16 %v1118, %v1110
      %v1383 = vpack.c.b16 %v1119, %v1111
      %v1384 = vpack.c.b16 %v1120, %v1112
      %v1385 = vpack.c.b16 %v1121, %v1113
      %v1386 = vpack.c.b16 %v1130, %v1122
      %v1387 = vpack.c.b16 %v1131, %v1123
      %v1388 = vpack.c.b16 %v1132, %v1124
      %v1389 = vpack.c.b16 %v1133, %v1125
      %v1390 = vpack.c.b16 %v1134, %v1126
      %v1391 = vpack.c.b16 %v1135, %v1127
      %v1392 = vpack.c.b16 %v1136, %v1128
      %v1393 = vpack.c.b16 %v1137, %v1129
      %1650 = vmatprep.subr.bf16.mxu0 %v1139
      %1651 = vmatpush1.bf16.msra.mxu0 %v1138
      %1652 = vmatprep.subr.bf16.mxu0 %v1147
      %1653 = vmatpush1.bf16.msra.mxu0 %v1146
      %1654 = vmatprep.subr.bf16.mxu0 %v1155
      %1655 = vmatpush1.bf16.msra.mxu0 %v1154
      %1656 = vmatprep.subr.bf16.mxu0 %v1163
      %1657 = vmatpush1.bf16.msra.mxu0 %v1162
      %1658 = vmatprep.subr.bf16.mxu0 %v1171
      %1659 = vmatpush1.bf16.msra.mxu0 %v1170
      %1660 = vmatprep.subr.bf16.mxu0 %v1179
      %1661 = vmatpush1.bf16.msra.mxu0 %v1178
      %1662 = vmatprep.subr.bf16.mxu0 %v1187
      %1663 = vmatpush1.bf16.msra.mxu0 %v1186
      %1664 = vmatprep.subr.bf16.mxu0 %v1195
      %1665 = vmatpush1.bf16.msra.mxu0 %v1194
      %1666 = vmatprep.subr.bf16.mxu0 %v1203
      %1667 = vmatpush1.bf16.msra.mxu0 %v1202
      %1668 = vmatprep.subr.bf16.mxu0 %v1211
      %1669 = vmatpush1.bf16.msra.mxu0 %v1210
      %1670 = vmatprep.subr.bf16.mxu0 %v1219
      %1671 = vmatpush1.bf16.msra.mxu0 %v1218
      %1672 = vmatprep.subr.bf16.mxu0 %v1227
      %1673 = vmatpush1.bf16.msra.mxu0 %v1226
      %1674 = vmatprep.subr.bf16.mxu0 %v1235
      %1675 = vmatpush1.bf16.msra.mxu0 %v1234
      %1676 = vmatprep.subr.bf16.mxu0 %v1243
      %1677 = vmatpush1.bf16.msra.mxu0 %v1242
      %1678 = vmatprep.subr.bf16.mxu0 %v1251
      %1679 = vmatpush1.bf16.msra.mxu0 %v1250
      %1680 = vmatprep.subr.bf16.mxu0 %v1259
      %1681 = vmatpush1.bf16.msra.mxu0 %v1258
      %1682 = vmatprep.mubr.bf16.mxu0 %v363
      %1683 = vmatmul.mubr.bf16.gmra.mrb[0].mxu0 %v356
      %v1684 = vpop.f32.mrb[0].mxu0
      %v1685 = vadd.f32 %v304, %v1684
      %v1686 = vpop.f32.mrb[0].mxu0
      %v1687 = vadd.f32 %v308, %v1686
      %v1688 = vpop.f32.mrb[0].mxu0
      %v1689 = vpop.f32.mrb[0].mxu0
      %1690 = vdwg.mxu0
      %1691 = vmatprep.subr.bf16.mxu0 %v1267
      %1692 = vmatpush1.bf16.msra.mxu0 %v1266
      %1693 = vmatprep.subr.bf16.mxu0 %v1275
      %1694 = vmatpush1.bf16.msra.mxu0 %v1274
      %1695 = vmatprep.subr.bf16.mxu0 %v1283
      %1696 = vmatpush1.bf16.msra.mxu0 %v1282
      %1697 = vmatprep.subr.bf16.mxu0 %v1291
      %1698 = vmatpush1.bf16.msra.mxu0 %v1290
      %1699 = vmatprep.subr.bf16.mxu0 %v1299
      %1700 = vmatpush1.bf16.msra.mxu0 %v1298
      %1701 = vmatprep.subr.bf16.mxu0 %v1307
      %1702 = vmatpush1.bf16.msra.mxu0 %v1306
      %1703 = vmatprep.subr.bf16.mxu0 %v1315
      %1704 = vmatpush1.bf16.msra.mxu0 %v1314
      %1705 = vmatprep.subr.bf16.mxu0 %v1323
      %1706 = vmatpush1.bf16.msra.mxu0 %v1322
      %1707 = vmatprep.subr.bf16.mxu0 %v1331
      %1708 = vmatpush1.bf16.msra.mxu0 %v1330
      %1709 = vmatprep.subr.bf16.mxu0 %v1339
      %1710 = vmatpush1.bf16.msra.mxu0 %v1338
      %1711 = vmatprep.subr.bf16.mxu0 %v1347
      %1712 = vmatpush1.bf16.msra.mxu0 %v1346
      %1713 = vmatprep.subr.bf16.mxu0 %v1355
      %1714 = vmatpush1.bf16.msra.mxu0 %v1354
      %1715 = vmatprep.subr.bf16.mxu0 %v1363
      %1716 = vmatpush1.bf16.msra.mxu0 %v1362
      %1717 = vmatprep.subr.bf16.mxu0 %v1371
      %1718 = vmatpush1.bf16.msra.mxu0 %v1370
      %1719 = vmatprep.subr.bf16.mxu0 %v1379
      %1720 = vmatpush1.bf16.msra.mxu0 %v1378
      %1721 = vmatprep.subr.bf16.mxu0 %v1387
      %1722 = vmatpush1.bf16.msra.mxu0 %v1386
      %1723 = vmatprep.mubr.bf16.mxu0 %v365
      %1724 = vmatmul.mubr.bf16.gmra.mrb[0].mxu0 %v364
      %v1725 = vpop.f32.mrb[0].mxu0
      %v1726 = vadd.f32 %v1685, %v1725
      %v1727 = vpop.f32.mrb[0].mxu0
      %v1728 = vadd.f32 %v1687, %v1727
      %v1729 = vpop.f32.mrb[0].mxu0
      %v1730 = vpop.f32.mrb[0].mxu0
      %1731 = vdwg.mxu0
      %1732 = vmatprep.subr.bf16.mxu0 %v1141
      %1733 = vmatpush1.bf16.msra.mxu0 %v1140
      %1734 = vmatprep.subr.bf16.mxu0 %v1149
      %1735 = vmatpush1.bf16.msra.mxu0 %v1148
      %1736 = vmatprep.subr.bf16.mxu0 %v1157
      %1737 = vmatpush1.bf16.msra.mxu0 %v1156
      %1738 = vmatprep.subr.bf16.mxu0 %v1165
      %1739 = vmatpush1.bf16.msra.mxu0 %v1164
      %1740 = vmatprep.subr.bf16.mxu0 %v1173
      %1741 = vmatpush1.bf16.msra.mxu0 %v1172
      %1742 = vmatprep.subr.bf16.mxu0 %v1181
      %1743 = vmatpush1.bf16.msra.mxu0 %v1180
      %1744 = vmatprep.subr.bf16.mxu0 %v1189
      %1745 = vmatpush1.bf16.msra.mxu0 %v1188
      %1746 = vmatprep.subr.bf16.mxu0 %v1197
      %1747 = vmatpush1.bf16.msra.mxu0 %v1196
      %1748 = vmatprep.subr.bf16.mxu0 %v1205
      %1749 = vmatpush1.bf16.msra.mxu0 %v1204
      %1750 = vmatprep.subr.bf16.mxu0 %v1213
      %1751 = vmatpush1.bf16.msra.mxu0 %v1212
      %1752 = vmatprep.subr.bf16.mxu0 %v1221
      %1753 = vmatpush1.bf16.msra.mxu0 %v1220
      %1754 = vmatprep.subr.bf16.mxu0 %v1229
      %1755 = vmatpush1.bf16.msra.mxu0 %v1228
      %1756 = vmatprep.subr.bf16.mxu0 %v1237
      %1757 = vmatpush1.bf16.msra.mxu0 %v1236
      %1758 = vmatprep.subr.bf16.mxu0 %v1245
      %1759 = vmatpush1.bf16.msra.mxu0 %v1244
      %1760 = vmatprep.subr.bf16.mxu0 %v1253
      %1761 = vmatpush1.bf16.msra.mxu0 %v1252
      %1762 = vmatprep.subr.bf16.mxu0 %v1261
      %1763 = vmatpush1.bf16.msra.mxu0 %v1260
      %1764 = vmatprep.mubr.bf16.mxu0 %v363
      %1765 = vmatmul.mubr.bf16.gmra.mrb[0].mxu0 %v356
      %v1766 = vpop.f32.mrb[0].mxu0
      %v1767 = vadd.f32 %v312, %v1766
      %v1768 = vpop.f32.mrb[0].mxu0
      %v1769 = vadd.f32 %v316, %v1768
      %v1770 = vpop.f32.mrb[0].mxu0
      %v1771 = vpop.f32.mrb[0].mxu0
      %1772 = vdwg.mxu0
      %1773 = vmatprep.subr.bf16.mxu0 %v1269
      %1774 = vmatpush1.bf16.msra.mxu0 %v1268
      %1775 = vmatprep.subr.bf16.mxu0 %v1277
      %1776 = vmatpush1.bf16.msra.mxu0 %v1276
      %1777 = vmatprep.subr.bf16.mxu0 %v1285
      %1778 = vmatpush1.bf16.msra.mxu0 %v1284
      %1779 = vmatprep.subr.bf16.mxu0 %v1293
      %1780 = vmatpush1.bf16.msra.mxu0 %v1292
      %1781 = vmatprep.subr.bf16.mxu0 %v1301
      %1782 = vmatpush1.bf16.msra.mxu0 %v1300
      %1783 = vmatprep.subr.bf16.mxu0 %v1309
      %1784 = vmatpush1.bf16.msra.mxu0 %v1308
      %1785 = vmatprep.subr.bf16.mxu0 %v1317
      %1786 = vmatpush1.bf16.msra.mxu0 %v1316
      %1787 = vmatprep.subr.bf16.mxu0 %v1325
      %1788 = vmatpush1.bf16.msra.mxu0 %v1324
      %1789 = vmatprep.subr.bf16.mxu0 %v1333
      %1790 = vmatpush1.bf16.msra.mxu0 %v1332
      %1791 = vmatprep.subr.bf16.mxu0 %v1341
      %1792 = vmatpush1.bf16.msra.mxu0 %v1340
      %1793 = vmatprep.subr.bf16.mxu0 %v1349
      %1794 = vmatpush1.bf16.msra.mxu0 %v1348
      %1795 = vmatprep.subr.bf16.mxu0 %v1357
      %1796 = vmatpush1.bf16.msra.mxu0 %v1356
      %1797 = vmatprep.subr.bf16.mxu0 %v1365
      %1798 = vmatpush1.bf16.msra.mxu0 %v1364
      %1799 = vmatprep.subr.bf16.mxu0 %v1373
      %1800 = vmatpush1.bf16.msra.mxu0 %v1372
      %1801 = vmatprep.subr.bf16.mxu0 %v1381
      %1802 = vmatpush1.bf16.msra.mxu0 %v1380
      %1803 = vmatprep.subr.bf16.mxu0 %v1389
      %1804 = vmatpush1.bf16.msra.mxu0 %v1388
      %1805 = vmatprep.mubr.bf16.mxu0 %v365
      %1806 = vmatmul.mubr.bf16.gmra.mrb[0].mxu0 %v364
      %v1807 = vpop.f32.mrb[0].mxu0
      %v1808 = vadd.f32 %v1767, %v1807
      %v1809 = vpop.f32.mrb[0].mxu0
      %v1810 = vadd.f32 %v1769, %v1809
      %v1811 = vpop.f32.mrb[0].mxu0
      %v1812 = vpop.f32.mrb[0].mxu0
      %1813 = vdwg.mxu0
      %1814 = vmatprep.subr.bf16.mxu0 %v1143
      %1815 = vmatpush1.bf16.msra.mxu0 %v1142
      %1816 = vmatprep.subr.bf16.mxu0 %v1151
      %1817 = vmatpush1.bf16.msra.mxu0 %v1150
      %1818 = vmatprep.subr.bf16.mxu0 %v1159
      %1819 = vmatpush1.bf16.msra.mxu0 %v1158
      %1820 = vmatprep.subr.bf16.mxu0 %v1167
      %1821 = vmatpush1.bf16.msra.mxu0 %v1166
      %1822 = vmatprep.subr.bf16.mxu0 %v1175
      %1823 = vmatpush1.bf16.msra.mxu0 %v1174
      %1824 = vmatprep.subr.bf16.mxu0 %v1183
      %1825 = vmatpush1.bf16.msra.mxu0 %v1182
      %1826 = vmatprep.subr.bf16.mxu0 %v1191
      %1827 = vmatpush1.bf16.msra.mxu0 %v1190
      %1828 = vmatprep.subr.bf16.mxu0 %v1199
      %1829 = vmatpush1.bf16.msra.mxu0 %v1198
      %1830 = vmatprep.subr.bf16.mxu0 %v1207
      %1831 = vmatpush1.bf16.msra.mxu0 %v1206
      %1832 = vmatprep.subr.bf16.mxu0 %v1215
      %1833 = vmatpush1.bf16.msra.mxu0 %v1214
      %1834 = vmatprep.subr.bf16.mxu0 %v1223
      %1835 = vmatpush1.bf16.msra.mxu0 %v1222
      %1836 = vmatprep.subr.bf16.mxu0 %v1231
      %1837 = vmatpush1.bf16.msra.mxu0 %v1230
      %1838 = vmatprep.subr.bf16.mxu0 %v1239
      %1839 = vmatpush1.bf16.msra.mxu0 %v1238
      %1840 = vmatprep.subr.bf16.mxu0 %v1247
      %1841 = vmatpush1.bf16.msra.mxu0 %v1246
      %1842 = vmatprep.subr.bf16.mxu0 %v1255
      %1843 = vmatpush1.bf16.msra.mxu0 %v1254
      %1844 = vmatprep.subr.bf16.mxu0 %v1263
      %1845 = vmatpush1.bf16.msra.mxu0 %v1262
      %1846 = vmatprep.mubr.bf16.mxu0 %v363
      %1847 = vmatmul.mubr.bf16.gmra.mrb[0].mxu0 %v356
      %v1848 = vpop.f32.mrb[0].mxu0
      %v1849 = vadd.f32 %v320, %v1848
      %v1850 = vpop.f32.mrb[0].mxu0
      %v1851 = vadd.f32 %v324, %v1850
      %v1852 = vpop.f32.mrb[0].mxu0
      %v1853 = vpop.f32.mrb[0].mxu0
      %1854 = vdwg.mxu0
      %1855 = vmatprep.subr.bf16.mxu0 %v1271
      %1856 = vmatpush1.bf16.msra.mxu0 %v1270
      %1857 = vmatprep.subr.bf16.mxu0 %v1279
      %1858 = vmatpush1.bf16.msra.mxu0 %v1278
      %1859 = vmatprep.subr.bf16.mxu0 %v1287
      %1860 = vmatpush1.bf16.msra.mxu0 %v1286
      %1861 = vmatprep.subr.bf16.mxu0 %v1295
      %1862 = vmatpush1.bf16.msra.mxu0 %v1294
      %1863 = vmatprep.subr.bf16.mxu0 %v1303
      %1864 = vmatpush1.bf16.msra.mxu0 %v1302
      %1865 = vmatprep.subr.bf16.mxu0 %v1311
      %1866 = vmatpush1.bf16.msra.mxu0 %v1310
      %1867 = vmatprep.subr.bf16.mxu0 %v1319
      %1868 = vmatpush1.bf16.msra.mxu0 %v1318
      %1869 = vmatprep.subr.bf16.mxu0 %v1327
      %1870 = vmatpush1.bf16.msra.mxu0 %v1326
      %1871 = vmatprep.subr.bf16.mxu0 %v1335
      %1872 = vmatpush1.bf16.msra.mxu0 %v1334
      %1873 = vmatprep.subr.bf16.mxu0 %v1343
      %1874 = vmatpush1.bf16.msra.mxu0 %v1342
      %1875 = vmatprep.subr.bf16.mxu0 %v1351
      %1876 = vmatpush1.bf16.msra.mxu0 %v1350
      %1877 = vmatprep.subr.bf16.mxu0 %v1359
      %1878 = vmatpush1.bf16.msra.mxu0 %v1358
      %1879 = vmatprep.subr.bf16.mxu0 %v1367
      %1880 = vmatpush1.bf16.msra.mxu0 %v1366
      %1881 = vmatprep.subr.bf16.mxu0 %v1375
      %1882 = vmatpush1.bf16.msra.mxu0 %v1374
      %1883 = vmatprep.subr.bf16.mxu0 %v1383
      %1884 = vmatpush1.bf16.msra.mxu0 %v1382
      %1885 = vmatprep.subr.bf16.mxu0 %v1391
      %1886 = vmatpush1.bf16.msra.mxu0 %v1390
      %1887 = vmatprep.mubr.bf16.mxu0 %v365
      %1888 = vmatmul.mubr.bf16.gmra.mrb[0].mxu0 %v364
      %v1889 = vpop.f32.mrb[0].mxu0
      %v1890 = vadd.f32 %v1849, %v1889
      %v1891 = vpop.f32.mrb[0].mxu0
      %v1892 = vadd.f32 %v1851, %v1891
      %v1893 = vpop.f32.mrb[0].mxu0
      %v1894 = vpop.f32.mrb[0].mxu0
      %1895 = vdwg.mxu0
      %1896 = vmatprep.subr.bf16.mxu0 %v1145
      %1897 = vmatpush1.bf16.msra.mxu0 %v1144
      %1898 = vmatprep.subr.bf16.mxu0 %v1153
      %1899 = vmatpush1.bf16.msra.mxu0 %v1152
      %1900 = vmatprep.subr.bf16.mxu0 %v1161
      %1901 = vmatpush1.bf16.msra.mxu0 %v1160
      %1902 = vmatprep.subr.bf16.mxu0 %v1169
      %1903 = vmatpush1.bf16.msra.mxu0 %v1168
      %1904 = vmatprep.subr.bf16.mxu0 %v1177
      %1905 = vmatpush1.bf16.msra.mxu0 %v1176
      %1906 = vmatprep.subr.bf16.mxu0 %v1185
      %1907 = vmatpush1.bf16.msra.mxu0 %v1184
      %1908 = vmatprep.subr.bf16.mxu0 %v1193
      %1909 = vmatpush1.bf16.msra.mxu0 %v1192
      %1910 = vmatprep.subr.bf16.mxu0 %v1201
      %1911 = vmatpush1.bf16.msra.mxu0 %v1200
      %1912 = vmatprep.subr.bf16.mxu0 %v1209
      %1913 = vmatpush1.bf16.msra.mxu0 %v1208
      %1914 = vmatprep.subr.bf16.mxu0 %v1217
      %1915 = vmatpush1.bf16.msra.mxu0 %v1216
      %1916 = vmatprep.subr.bf16.mxu0 %v1225
      %1917 = vmatpush1.bf16.msra.mxu0 %v1224
      %1918 = vmatprep.subr.bf16.mxu0 %v1233
      %1919 = vmatpush1.bf16.msra.mxu0 %v1232
      %1920 = vmatprep.subr.bf16.mxu0 %v1241
      %1921 = vmatpush1.bf16.msra.mxu0 %v1240
      %1922 = vmatprep.subr.bf16.mxu0 %v1249
      %1923 = vmatpush1.bf16.msra.mxu0 %v1248
      %1924 = vmatprep.subr.bf16.mxu0 %v1257
      %1925 = vmatpush1.bf16.msra.mxu0 %v1256
      %1926 = vmatprep.subr.bf16.mxu0 %v1265
      %1927 = vmatpush1.bf16.msra.mxu0 %v1264
      %1928 = vmatprep.mubr.bf16.mxu0 %v363
      %1929 = vmatmul.mubr.bf16.gmra.mrb[0].mxu0 %v356
      %v1930 = vpop.f32.mrb[0].mxu0
      %v1931 = vadd.f32 %v328, %v1930
      %v1932 = vpop.f32.mrb[0].mxu0
      %v1933 = vadd.f32 %v332, %v1932
      %v1934 = vpop.f32.mrb[0].mxu0
      %v1935 = vpop.f32.mrb[0].mxu0
      %1936 = vdwg.mxu0
      %1937 = vmatprep.subr.bf16.mxu0 %v1273
      %1938 = vmatpush1.bf16.msra.mxu0 %v1272
      %1939 = vmatprep.subr.bf16.mxu0 %v1281
      %1940 = vmatpush1.bf16.msra.mxu0 %v1280
      %1941 = vmatprep.subr.bf16.mxu0 %v1289
      %1942 = vmatpush1.bf16.msra.mxu0 %v1288
      %1943 = vmatprep.subr.bf16.mxu0 %v1297
      %1944 = vmatpush1.bf16.msra.mxu0 %v1296
      %1945 = vmatprep.subr.bf16.mxu0 %v1305
      %1946 = vmatpush1.bf16.msra.mxu0 %v1304
      %1947 = vmatprep.subr.bf16.mxu0 %v1313
      %1948 = vmatpush1.bf16.msra.mxu0 %v1312
      %1949 = vmatprep.subr.bf16.mxu0 %v1321
      %1950 = vmatpush1.bf16.msra.mxu0 %v1320
      %1951 = vmatprep.subr.bf16.mxu0 %v1329
      %1952 = vmatpush1.bf16.msra.mxu0 %v1328
      %1953 = vmatprep.subr.bf16.mxu0 %v1337
      %1954 = vmatpush1.bf16.msra.mxu0 %v1336
      %1955 = vmatprep.subr.bf16.mxu0 %v1345
      %1956 = vmatpush1.bf16.msra.mxu0 %v1344
      %1957 = vmatprep.subr.bf16.mxu0 %v1353
      %1958 = vmatpush1.bf16.msra.mxu0 %v1352
      %1959 = vmatprep.subr.bf16.mxu0 %v1361
      %1960 = vmatpush1.bf16.msra.mxu0 %v1360
      %1961 = vmatprep.subr.bf16.mxu0 %v1369
      %1962 = vmatpush1.bf16.msra.mxu0 %v1368
      %1963 = vmatprep.subr.bf16.mxu0 %v1377
      %1964 = vmatpush1.bf16.msra.mxu0 %v1376
      %1965 = vmatprep.subr.bf16.mxu0 %v1385
      %1966 = vmatpush1.bf16.msra.mxu0 %v1384
      %1967 = vmatprep.subr.bf16.mxu0 %v1393
      %1968 = vmatpush1.bf16.msra.mxu0 %v1392
      %1969 = vmatprep.mubr.bf16.mxu0 %v365
      %1970 = vmatmul.mubr.bf16.gmra.mrb[0].mxu0 %v364
      %v1971 = vpop.f32.mrb[0].mxu0
      %v1972 = vadd.f32 %v1931, %v1971
      %v1973 = vpop.f32.mrb[0].mxu0
      %v1974 = vadd.f32 %v1933, %v1973
      %v1975 = vpop.f32.mrb[0].mxu0
      %v1976 = vpop.f32.mrb[0].mxu0
      %1977 = vdwg.mxu0
      %vm1978 = vcmp.gt.f32.partialorder %v1726, 0.0
      %vm1979 = vcmp.gt.f32.partialorder %v1728, 0.0
      %vm1980 = vcmp.gt.f32.partialorder %v1808, 0.0
      %vm1981 = vcmp.gt.f32.partialorder %v1810, 0.0
      %vm1982 = vcmp.gt.f32.partialorder %v1890, 0.0
      %vm1983 = vcmp.gt.f32.partialorder %v1892, 0.0
      %vm1984 = vcmp.gt.f32.partialorder %v1972, 0.0
      %vm1985 = vcmp.gt.f32.partialorder %v1974, 0.0
      %v1986 = vmul.f32 %v1726, 0.2
      %v1987 = vmul.f32 %v1728, 0.2
      %v1988 = vmul.f32 %v1808, 0.2
      %v1989 = vmul.f32 %v1810, 0.2
      %v1990 = vmul.f32 %v1890, 0.2
      %v1991 = vmul.f32 %v1892, 0.2
      %v1992 = vmul.f32 %v1972, 0.2
      %v1993 = vmul.f32 %v1974, 0.2
      %v1994 = vsel %vm1978, %v1726, %v1986
      %v1995 = vsel %vm1979, %v1728, %v1987
      %v1996 = vsel %vm1980, %v1808, %v1988
      %v1997 = vsel %vm1981, %v1810, %v1989
      %v1998 = vsel %vm1982, %v1890, %v1990
      %v1999 = vsel %vm1983, %v1892, %v1991
      %v2000 = vsel %vm1984, %v1972, %v1992
      %v2001 = vsel %vm1985, %v1974, %v1993
      %v2002 = vpack.c.bf16 %v1994, %v1994
      %v2003 = vpack.c.bf16 %v1995, %v1995
      %v2004 = vpack.c.bf16 %v1996, %v1996
      %v2005 = vpack.c.bf16 %v1997, %v1997
      %v2006 = vpack.c.bf16 %v1998, %v1998
      %v2007 = vpack.c.bf16 %v1999, %v1999
      %v2008 = vpack.c.bf16 %v2000, %v2000
      %v2009 = vpack.c.bf16 %v2001, %v2001
      %v2010 = vld [vmem:[%s3] sm:$0xf]
      %v2011 = vld [vmem:[%s3 + $0x4] sm:$0xf]
      %v2012 = vld [vmem:[%s3 + $0x8] sm:$0xf]
      %v2013 = vld [vmem:[%s3 + $0xc] sm:$0xf]
      %v2014 = vld [vmem:[%s3 + $0x10] sm:$0xf]
      %v2015 = vld [vmem:[%s3 + $0x14] sm:$0xf]
      %v2016 = vld [vmem:[%s3 + $0x18] sm:$0xf]
      %v2017 = vld [vmem:[%s3 + $0x1c] sm:$0xf]
      %v2018 = vld [vmem:[%s3 + $0x20] sm:$0xf]
      %v2019 = vld [vmem:[%s3 + $0x24] sm:$0xf]
      %v2020 = vld [vmem:[%s3 + $0x28] sm:$0xf]
      %v2021 = vld [vmem:[%s3 + $0x2c] sm:$0xf]
      %v2022 = vld [vmem:[%s3 + $0x30] sm:$0xf]
      %v2023 = vld [vmem:[%s3 + $0x34] sm:$0xf]
      %v2024 = vld [vmem:[%s3 + $0x38] sm:$0xf]
      %v2025 = vld [vmem:[%s3 + $0x3c] sm:$0xf]
      %v2026 = vld [vmem:[%s3 + $0x40] sm:$0xf]
      %v2027 = vld [vmem:[%s3 + $0x44] sm:$0xf]
      %v2028 = vld [vmem:[%s3 + $0x48] sm:$0xf]
      %v2029 = vld [vmem:[%s3 + $0x4c] sm:$0xf]
      %v2030 = vld [vmem:[%s3 + $0x50] sm:$0xf]
      %v2031 = vld [vmem:[%s3 + $0x54] sm:$0xf]
      %v2032 = vld [vmem:[%s3 + $0x58] sm:$0xf]
      %v2033 = vld [vmem:[%s3 + $0x5c] sm:$0xf]
      %v2034 = vld [vmem:[%s3 + $0x60] sm:$0xf]
      %v2035 = vld [vmem:[%s3 + $0x64] sm:$0xf]
      %v2036 = vld [vmem:[%s3 + $0x68] sm:$0xf]
      %v2037 = vld [vmem:[%s3 + $0x6c] sm:$0xf]
      %v2038 = vld [vmem:[%s3 + $0x70] sm:$0xf]
      %v2039 = vld [vmem:[%s3 + $0x74] sm:$0xf]
      %v2040 = vld [vmem:[%s3 + $0x78] sm:$0xf]
      %v2041 = vld [vmem:[%s3 + $0x7c] sm:$0xf]
      %v2042 = vld [vmem:[%s3 + $0x80] sm:$0xf]
      %v2043 = vld [vmem:[%s3 + $0x84] sm:$0xf]
      %v2044 = vld [vmem:[%s3 + $0x88] sm:$0xf]
      %v2045 = vld [vmem:[%s3 + $0x8c] sm:$0xf]
      %v2046 = vld [vmem:[%s3 + $0x90] sm:$0xf]
      %v2047 = vld [vmem:[%s3 + $0x94] sm:$0xf]
      %v2048 = vld [vmem:[%s3 + $0x98] sm:$0xf]
      %v2049 = vld [vmem:[%s3 + $0x9c] sm:$0xf]
      %v2050 = vld [vmem:[%s3 + $0xa0] sm:$0xf]
      %v2051 = vld [vmem:[%s3 + $0xa4] sm:$0xf]
      %v2052 = vld [vmem:[%s3 + $0xa8] sm:$0xf]
      %v2053 = vld [vmem:[%s3 + $0xac] sm:$0xf]
      %v2054 = vld [vmem:[%s3 + $0xb0] sm:$0xf]
      %v2055 = vld [vmem:[%s3 + $0xb4] sm:$0xf]
      %v2056 = vld [vmem:[%s3 + $0xb8] sm:$0xf]
      %v2057 = vld [vmem:[%s3 + $0xbc] sm:$0xf]
      %v2058 = vld [vmem:[%s3 + $0xc0] sm:$0xf]
      %v2059 = vld [vmem:[%s3 + $0xc4] sm:$0xf]
      %v2060 = vld [vmem:[%s3 + $0xc8] sm:$0xf]
      %v2061 = vld [vmem:[%s3 + $0xcc] sm:$0xf]
      %v2062 = vld [vmem:[%s3 + $0xd0] sm:$0xf]
      %v2063 = vld [vmem:[%s3 + $0xd4] sm:$0xf]
      %v2064 = vld [vmem:[%s3 + $0xd8] sm:$0xf]
      %v2065 = vld [vmem:[%s3 + $0xdc] sm:$0xf]
      %v2066 = vld [vmem:[%s3 + $0xe0] sm:$0xf]
      %v2067 = vld [vmem:[%s3 + $0xe4] sm:$0xf]
      %v2068 = vld [vmem:[%s3 + $0xe8] sm:$0xf]
      %v2069 = vld [vmem:[%s3 + $0xec] sm:$0xf]
      %v2070 = vld [vmem:[%s3 + $0xf0] sm:$0xf]
      %v2071 = vld [vmem:[%s3 + $0xf4] sm:$0xf]
      %v2072 = vld [vmem:[%s3 + $0xf8] sm:$0xf]
      %v2073 = vld [vmem:[%s3 + $0xfc] sm:$0xf]
      %v2074 = vld [vmem:[%s3 + $0x100] sm:$0xf]
      %v2075 = vld [vmem:[%s3 + $0x104] sm:$0xf]
      %v2076 = vld [vmem:[%s3 + $0x108] sm:$0xf]
      %v2077 = vld [vmem:[%s3 + $0x10c] sm:$0xf]
      %v2078 = vld [vmem:[%s3 + $0x110] sm:$0xf]
      %v2079 = vld [vmem:[%s3 + $0x114] sm:$0xf]
      %v2080 = vld [vmem:[%s3 + $0x118] sm:$0xf]
      %v2081 = vld [vmem:[%s3 + $0x11c] sm:$0xf]
      %v2082 = vld [vmem:[%s3 + $0x120] sm:$0xf]
      %v2083 = vld [vmem:[%s3 + $0x124] sm:$0xf]
      %v2084 = vld [vmem:[%s3 + $0x128] sm:$0xf]
      %v2085 = vld [vmem:[%s3 + $0x12c] sm:$0xf]
      %v2086 = vld [vmem:[%s3 + $0x130] sm:$0xf]
      %v2087 = vld [vmem:[%s3 + $0x134] sm:$0xf]
      %v2088 = vld [vmem:[%s3 + $0x138] sm:$0xf]
      %v2089 = vld [vmem:[%s3 + $0x13c] sm:$0xf]
      %v2090 = vld [vmem:[%s3 + $0x140] sm:$0xf]
      %v2091 = vld [vmem:[%s3 + $0x144] sm:$0xf]
      %v2092 = vld [vmem:[%s3 + $0x148] sm:$0xf]
      %v2093 = vld [vmem:[%s3 + $0x14c] sm:$0xf]
      %v2094 = vld [vmem:[%s3 + $0x150] sm:$0xf]
      %v2095 = vld [vmem:[%s3 + $0x154] sm:$0xf]
      %v2096 = vld [vmem:[%s3 + $0x158] sm:$0xf]
      %v2097 = vld [vmem:[%s3 + $0x15c] sm:$0xf]
      %v2098 = vld [vmem:[%s3 + $0x160] sm:$0xf]
      %v2099 = vld [vmem:[%s3 + $0x164] sm:$0xf]
      %v2100 = vld [vmem:[%s3 + $0x168] sm:$0xf]
      %v2101 = vld [vmem:[%s3 + $0x16c] sm:$0xf]
      %v2102 = vld [vmem:[%s3 + $0x170] sm:$0xf]
      %v2103 = vld [vmem:[%s3 + $0x174] sm:$0xf]
      %v2104 = vld [vmem:[%s3 + $0x178] sm:$0xf]
      %v2105 = vld [vmem:[%s3 + $0x17c] sm:$0xf]
      %v2106 = vld [vmem:[%s3 + $0x180] sm:$0xf]
      %v2107 = vld [vmem:[%s3 + $0x184] sm:$0xf]
      %v2108 = vld [vmem:[%s3 + $0x188] sm:$0xf]
      %v2109 = vld [vmem:[%s3 + $0x18c] sm:$0xf]
      %v2110 = vld [vmem:[%s3 + $0x190] sm:$0xf]
      %v2111 = vld [vmem:[%s3 + $0x194] sm:$0xf]
      %v2112 = vld [vmem:[%s3 + $0x198] sm:$0xf]
      %v2113 = vld [vmem:[%s3 + $0x19c] sm:$0xf]
      %v2114 = vld [vmem:[%s3 + $0x1a0] sm:$0xf]
      %v2115 = vld [vmem:[%s3 + $0x1a4] sm:$0xf]
      %v2116 = vld [vmem:[%s3 + $0x1a8] sm:$0xf]
      %v2117 = vld [vmem:[%s3 + $0x1ac] sm:$0xf]
      %v2118 = vld [vmem:[%s3 + $0x1b0] sm:$0xf]
      %v2119 = vld [vmem:[%s3 + $0x1b4] sm:$0xf]
      %v2120 = vld [vmem:[%s3 + $0x1b8] sm:$0xf]
      %v2121 = vld [vmem:[%s3 + $0x1bc] sm:$0xf]
      %v2122 = vld [vmem:[%s3 + $0x1c0] sm:$0xf]
      %v2123 = vld [vmem:[%s3 + $0x1c4] sm:$0xf]
      %v2124 = vld [vmem:[%s3 + $0x1c8] sm:$0xf]
      %v2125 = vld [vmem:[%s3 + $0x1cc] sm:$0xf]
      %v2126 = vld [vmem:[%s3 + $0x1d0] sm:$0xf]
      %v2127 = vld [vmem:[%s3 + $0x1d4] sm:$0xf]
      %v2128 = vld [vmem:[%s3 + $0x1d8] sm:$0xf]
      %v2129 = vld [vmem:[%s3 + $0x1dc] sm:$0xf]
      %v2130 = vld [vmem:[%s3 + $0x1e0] sm:$0xf]
      %v2131 = vld [vmem:[%s3 + $0x1e4] sm:$0xf]
      %v2132 = vld [vmem:[%s3 + $0x1e8] sm:$0xf]
      %v2133 = vld [vmem:[%s3 + $0x1ec] sm:$0xf]
      %v2134 = vld [vmem:[%s3 + $0x1f0] sm:$0xf]
      %v2135 = vld [vmem:[%s3 + $0x1f4] sm:$0xf]
      %v2136 = vld [vmem:[%s3 + $0x1f8] sm:$0xf]
      %v2137 = vld [vmem:[%s3 + $0x1fc] sm:$0xf]
      %v2138 = vld [vmem:[%s4] sm:$0x1]
      %v2140 = vlaneseq
      %v2141 = vshrl.u32 %v2140, 7
      %v2142 = vsub.s32 0, %v2141
      %v2143 = vrot.slane %v2138, %v2142
      %v2273 = vunpack.c.l.b16 %v2010
      %v2274 = vunpack.c.l.b16 %v2011
      %v2275 = vunpack.c.l.b16 %v2012
      %v2276 = vunpack.c.l.b16 %v2013
      %v2277 = vunpack.c.l.b16 %v2014
      %v2278 = vunpack.c.l.b16 %v2015
      %v2279 = vunpack.c.l.b16 %v2016
      %v2280 = vunpack.c.l.b16 %v2017
      %v2281 = vunpack.c.l.b16 %v2018
      %v2282 = vunpack.c.l.b16 %v2019
      %v2283 = vunpack.c.l.b16 %v2020
      %v2284 = vunpack.c.l.b16 %v2021
      %v2285 = vunpack.c.l.b16 %v2022
      %v2286 = vunpack.c.l.b16 %v2023
      %v2287 = vunpack.c.l.b16 %v2024
      %v2288 = vunpack.c.l.b16 %v2025
      %v2289 = vunpack.c.l.b16 %v2026
      %v2290 = vunpack.c.l.b16 %v2027
      %v2291 = vunpack.c.l.b16 %v2028
      %v2292 = vunpack.c.l.b16 %v2029
      %v2293 = vunpack.c.l.b16 %v2030
      %v2294 = vunpack.c.l.b16 %v2031
      %v2295 = vunpack.c.l.b16 %v2032
      %v2296 = vunpack.c.l.b16 %v2033
      %v2297 = vunpack.c.l.b16 %v2034
      %v2298 = vunpack.c.l.b16 %v2035
      %v2299 = vunpack.c.l.b16 %v2036
      %v2300 = vunpack.c.l.b16 %v2037
      %v2301 = vunpack.c.l.b16 %v2038
      %v2302 = vunpack.c.l.b16 %v2039
      %v2303 = vunpack.c.l.b16 %v2040
      %v2304 = vunpack.c.l.b16 %v2041
      %v2305 = vunpack.c.l.b16 %v2042
      %v2306 = vunpack.c.l.b16 %v2043
      %v2307 = vunpack.c.l.b16 %v2044
      %v2308 = vunpack.c.l.b16 %v2045
      %v2309 = vunpack.c.l.b16 %v2046
      %v2310 = vunpack.c.l.b16 %v2047
      %v2311 = vunpack.c.l.b16 %v2048
      %v2312 = vunpack.c.l.b16 %v2049
      %v2313 = vunpack.c.l.b16 %v2050
      %v2314 = vunpack.c.l.b16 %v2051
      %v2315 = vunpack.c.l.b16 %v2052
      %v2316 = vunpack.c.l.b16 %v2053
      %v2317 = vunpack.c.l.b16 %v2054
      %v2318 = vunpack.c.l.b16 %v2055
      %v2319 = vunpack.c.l.b16 %v2056
      %v2320 = vunpack.c.l.b16 %v2057
      %v2321 = vunpack.c.l.b16 %v2058
      %v2322 = vunpack.c.l.b16 %v2059
      %v2323 = vunpack.c.l.b16 %v2060
      %v2324 = vunpack.c.l.b16 %v2061
      %v2325 = vunpack.c.l.b16 %v2062
      %v2326 = vunpack.c.l.b16 %v2063
      %v2327 = vunpack.c.l.b16 %v2064
      %v2328 = vunpack.c.l.b16 %v2065
      %v2329 = vunpack.c.l.b16 %v2066
      %v2330 = vunpack.c.l.b16 %v2067
      %v2331 = vunpack.c.l.b16 %v2068
      %v2332 = vunpack.c.l.b16 %v2069
      %v2333 = vunpack.c.l.b16 %v2070
      %v2334 = vunpack.c.l.b16 %v2071
      %v2335 = vunpack.c.l.b16 %v2072
      %v2336 = vunpack.c.l.b16 %v2073
      %v2337 = vunpack.c.l.b16 %v2074
      %v2338 = vunpack.c.l.b16 %v2075
      %v2339 = vunpack.c.l.b16 %v2076
      %v2340 = vunpack.c.l.b16 %v2077
      %v2341 = vunpack.c.l.b16 %v2078
      %v2342 = vunpack.c.l.b16 %v2079
      %v2343 = vunpack.c.l.b16 %v2080
      %v2344 = vunpack.c.l.b16 %v2081
      %v2345 = vunpack.c.l.b16 %v2082
      %v2346 = vunpack.c.l.b16 %v2083
      %v2347 = vunpack.c.l.b16 %v2084
      %v2348 = vunpack.c.l.b16 %v2085
      %v2349 = vunpack.c.l.b16 %v2086
      %v2350 = vunpack.c.l.b16 %v2087
      %v2351 = vunpack.c.l.b16 %v2088
      %v2352 = vunpack.c.l.b16 %v2089
      %v2353 = vunpack.c.l.b16 %v2090
      %v2354 = vunpack.c.l.b16 %v2091
      %v2355 = vunpack.c.l.b16 %v2092
      %v2356 = vunpack.c.l.b16 %v2093
      %v2357 = vunpack.c.l.b16 %v2094
      %v2358 = vunpack.c.l.b16 %v2095
      %v2359 = vunpack.c.l.b16 %v2096
      %v2360 = vunpack.c.l.b16 %v2097
      %v2361 = vunpack.c.l.b16 %v2098
      %v2362 = vunpack.c.l.b16 %v2099
      %v2363 = vunpack.c.l.b16 %v2100
      %v2364 = vunpack.c.l.b16 %v2101
      %v2365 = vunpack.c.l.b16 %v2102
      %v2366 = vunpack.c.l.b16 %v2103
      %v2367 = vunpack.c.l.b16 %v2104
      %v2368 = vunpack.c.l.b16 %v2105
      %v2369 = vunpack.c.l.b16 %v2106
      %v2370 = vunpack.c.l.b16 %v2107
      %v2371 = vunpack.c.l.b16 %v2108
      %v2372 = vunpack.c.l.b16 %v2109
      %v2373 = vunpack.c.l.b16 %v2110
      %v2374 = vunpack.c.l.b16 %v2111
      %v2375 = vunpack.c.l.b16 %v2112
      %v2376 = vunpack.c.l.b16 %v2113
      %v2377 = vunpack.c.l.b16 %v2114
      %v2378 = vunpack.c.l.b16 %v2115
      %v2379 = vunpack.c.l.b16 %v2116
      %v2380 = vunpack.c.l.b16 %v2117
      %v2381 = vunpack.c.l.b16 %v2118
      %v2382 = vunpack.c.l.b16 %v2119
      %v2383 = vunpack.c.l.b16 %v2120
      %v2384 = vunpack.c.l.b16 %v2121
      %v2385 = vunpack.c.l.b16 %v2122
      %v2386 = vunpack.c.l.b16 %v2123
      %v2387 = vunpack.c.l.b16 %v2124
      %v2388 = vunpack.c.l.b16 %v2125
      %v2389 = vunpack.c.l.b16 %v2126
      %v2390 = vunpack.c.l.b16 %v2127
      %v2391 = vunpack.c.l.b16 %v2128
      %v2392 = vunpack.c.l.b16 %v2129
      %v2393 = vunpack.c.l.b16 %v2130
      %v2394 = vunpack.c.l.b16 %v2131
      %v2395 = vunpack.c.l.b16 %v2132
      %v2396 = vunpack.c.l.b16 %v2133
      %v2397 = vunpack.c.l.b16 %v2134
      %v2398 = vunpack.c.l.b16 %v2135
      %v2399 = vunpack.c.l.b16 %v2136
      %v2400 = vunpack.c.l.b16 %v2137
      %v2401 = vpack.c.b16 %v2274, %v2273
      %v2402 = vpack.c.b16 %v2276, %v2275
      %v2403 = vpack.c.b16 %v2278, %v2277
      %v2404 = vpack.c.b16 %v2280, %v2279
      %v2405 = vpack.c.b16 %v2282, %v2281
      %v2406 = vpack.c.b16 %v2284, %v2283
      %v2407 = vpack.c.b16 %v2286, %v2285
      %v2408 = vpack.c.b16 %v2288, %v2287
      %v2409 = vpack.c.b16 %v2290, %v2289
      %v2410 = vpack.c.b16 %v2292, %v2291
      %v2411 = vpack.c.b16 %v2294, %v2293
      %v2412 = vpack.c.b16 %v2296, %v2295
      %v2413 = vpack.c.b16 %v2298, %v2297
      %v2414 = vpack.c.b16 %v2300, %v2299
      %v2415 = vpack.c.b16 %v2302, %v2301
      %v2416 = vpack.c.b16 %v2304, %v2303
      %v2417 = vpack.c.b16 %v2306, %v2305
      %v2418 = vpack.c.b16 %v2308, %v2307
      %v2419 = vpack.c.b16 %v2310, %v2309
      %v2420 = vpack.c.b16 %v2312, %v2311
      %v2421 = vpack.c.b16 %v2314, %v2313
      %v2422 = vpack.c.b16 %v2316, %v2315
      %v2423 = vpack.c.b16 %v2318, %v2317
      %v2424 = vpack.c.b16 %v2320, %v2319
      %v2425 = vpack.c.b16 %v2322, %v2321
      %v2426 = vpack.c.b16 %v2324, %v2323
      %v2427 = vpack.c.b16 %v2326, %v2325
      %v2428 = vpack.c.b16 %v2328, %v2327
      %v2429 = vpack.c.b16 %v2330, %v2329
      %v2430 = vpack.c.b16 %v2332, %v2331
      %v2431 = vpack.c.b16 %v2334, %v2333
      %v2432 = vpack.c.b16 %v2336, %v2335
      %v2433 = vpack.c.b16 %v2338, %v2337
      %v2434 = vpack.c.b16 %v2340, %v2339
      %v2435 = vpack.c.b16 %v2342, %v2341
      %v2436 = vpack.c.b16 %v2344, %v2343
      %v2437 = vpack.c.b16 %v2346, %v2345
      %v2438 = vpack.c.b16 %v2348, %v2347
      %v2439 = vpack.c.b16 %v2350, %v2349
      %v2440 = vpack.c.b16 %v2352, %v2351
      %v2441 = vpack.c.b16 %v2354, %v2353
      %v2442 = vpack.c.b16 %v2356, %v2355
      %v2443 = vpack.c.b16 %v2358, %v2357
      %v2444 = vpack.c.b16 %v2360, %v2359
      %v2445 = vpack.c.b16 %v2362, %v2361
      %v2446 = vpack.c.b16 %v2364, %v2363
      %v2447 = vpack.c.b16 %v2366, %v2365
      %v2448 = vpack.c.b16 %v2368, %v2367
      %v2449 = vpack.c.b16 %v2370, %v2369
      %v2450 = vpack.c.b16 %v2372, %v2371
      %v2451 = vpack.c.b16 %v2374, %v2373
      %v2452 = vpack.c.b16 %v2376, %v2375
      %v2453 = vpack.c.b16 %v2378, %v2377
      %v2454 = vpack.c.b16 %v2380, %v2379
      %v2455 = vpack.c.b16 %v2382, %v2381
      %v2456 = vpack.c.b16 %v2384, %v2383
      %v2457 = vpack.c.b16 %v2386, %v2385
      %v2458 = vpack.c.b16 %v2388, %v2387
      %v2459 = vpack.c.b16 %v2390, %v2389
      %v2460 = vpack.c.b16 %v2392, %v2391
      %v2461 = vpack.c.b16 %v2394, %v2393
      %v2462 = vpack.c.b16 %v2396, %v2395
      %v2463 = vpack.c.b16 %v2398, %v2397
      %v2464 = vpack.c.b16 %v2400, %v2399
      %2529 = vmatprep.subr.bf16.mxu0 0
      %2530 = vmatpush1.bf16.msra.mxu0 %v2401
      %2531 = vmatprep.subr.bf16.mxu0 0
      %2532 = vmatpush1.bf16.msra.mxu0 %v2402
      %2533 = vmatprep.subr.bf16.mxu0 0
      %2534 = vmatpush1.bf16.msra.mxu0 %v2403
      %2535 = vmatprep.subr.bf16.mxu0 0
      %2536 = vmatpush1.bf16.msra.mxu0 %v2404
      %2537 = vmatprep.subr.bf16.mxu0 0
      %2538 = vmatpush1.bf16.msra.mxu0 %v2405
      %2539 = vmatprep.subr.bf16.mxu0 0
      %2540 = vmatpush1.bf16.msra.mxu0 %v2406
      %2541 = vmatprep.subr.bf16.mxu0 0
      %2542 = vmatpush1.bf16.msra.mxu0 %v2407
      %2543 = vmatprep.subr.bf16.mxu0 0
      %2544 = vmatpush1.bf16.msra.mxu0 %v2408
      %2545 = vmatprep.subr.bf16.mxu0 0
      %2546 = vmatpush1.bf16.msra.mxu0 %v2409
      %2547 = vmatprep.subr.bf16.mxu0 0
      %2548 = vmatpush1.bf16.msra.mxu0 %v2410
      %2549 = vmatprep.subr.bf16.mxu0 0
      %2550 = vmatpush1.bf16.msra.mxu0 %v2411
      %2551 = vmatprep.subr.bf16.mxu0 0
      %2552 = vmatpush1.bf16.msra.mxu0 %v2412
      %2553 = vmatprep.subr.bf16.mxu0 0
      %2554 = vmatpush1.bf16.msra.mxu0 %v2413
      %2555 = vmatprep.subr.bf16.mxu0 0
      %2556 = vmatpush1.bf16.msra.mxu0 %v2414
      %2557 = vmatprep.subr.bf16.mxu0 0
      %2558 = vmatpush1.bf16.msra.mxu0 %v2415
      %2559 = vmatprep.subr.bf16.mxu0 0
      %2560 = vmatpush1.bf16.msra.mxu0 %v2416
      %2561 = vmatprep.mubr.bf16.mxu0 %v2003
      %2562 = vmatmul.mubr.bf16.gmra.mrb[0].mxu0 %v2002
      %v2563 = vpop.f32.mrb[0].mxu0
      %v2564 = vadd.f32 %v2143, %v2563
      %v2565 = vpop.f32.mrb[0].mxu0
      %v2566 = vpop.f32.mrb[0].mxu0
      %v2567 = vpop.f32.mrb[0].mxu0
      %2568 = vdwg.mxu0
      %2569 = vmatprep.subr.bf16.mxu0 0
      %2570 = vmatpush1.bf16.msra.mxu0 %v2417
      %2571 = vmatprep.subr.bf16.mxu0 0
      %2572 = vmatpush1.bf16.msra.mxu0 %v2418
      %2573 = vmatprep.subr.bf16.mxu0 0
      %2574 = vmatpush1.bf16.msra.mxu0 %v2419
      %2575 = vmatprep.subr.bf16.mxu0 0
      %2576 = vmatpush1.bf16.msra.mxu0 %v2420
      %2577 = vmatprep.subr.bf16.mxu0 0
      %2578 = vmatpush1.bf16.msra.mxu0 %v2421
      %2579 = vmatprep.subr.bf16.mxu0 0
      %2580 = vmatpush1.bf16.msra.mxu0 %v2422
      %2581 = vmatprep.subr.bf16.mxu0 0
      %2582 = vmatpush1.bf16.msra.mxu0 %v2423
      %2583 = vmatprep.subr.bf16.mxu0 0
      %2584 = vmatpush1.bf16.msra.mxu0 %v2424
      %2585 = vmatprep.subr.bf16.mxu0 0
      %2586 = vmatpush1.bf16.msra.mxu0 %v2425
      %2587 = vmatprep.subr.bf16.mxu0 0
      %2588 = vmatpush1.bf16.msra.mxu0 %v2426
      %2589 = vmatprep.subr.bf16.mxu0 0
      %2590 = vmatpush1.bf16.msra.mxu0 %v2427
      %2591 = vmatprep.subr.bf16.mxu0 0
      %2592 = vmatpush1.bf16.msra.mxu0 %v2428
      %2593 = vmatprep.subr.bf16.mxu0 0
      %2594 = vmatpush1.bf16.msra.mxu0 %v2429
      %2595 = vmatprep.subr.bf16.mxu0 0
      %2596 = vmatpush1.bf16.msra.mxu0 %v2430
      %2597 = vmatprep.subr.bf16.mxu0 0
      %2598 = vmatpush1.bf16.msra.mxu0 %v2431
      %2599 = vmatprep.subr.bf16.mxu0 0
      %2600 = vmatpush1.bf16.msra.mxu0 %v2432
      %2601 = vmatprep.mubr.bf16.mxu0 %v2005
      %2602 = vmatmul.mubr.bf16.gmra.mrb[0].mxu0 %v2004
      %v2603 = vpop.f32.mrb[0].mxu0
      %v2604 = vadd.f32 %v2564, %v2603
      %v2605 = vpop.f32.mrb[0].mxu0
      %v2606 = vpop.f32.mrb[0].mxu0
      %v2607 = vpop.f32.mrb[0].mxu0
      %2608 = vdwg.mxu0
      %2609 = vmatprep.subr.bf16.mxu0 0
      %2610 = vmatpush1.bf16.msra.mxu0 %v2433
      %2611 = vmatprep.subr.bf16.mxu0 0
      %2612 = vmatpush1.bf16.msra.mxu0 %v2434
      %2613 = vmatprep.subr.bf16.mxu0 0
      %2614 = vmatpush1.bf16.msra.mxu0 %v2435
      %2615 = vmatprep.subr.bf16.mxu0 0
      %2616 = vmatpush1.bf16.msra.mxu0 %v2436
      %2617 = vmatprep.subr.bf16.mxu0 0
      %2618 = vmatpush1.bf16.msra.mxu0 %v2437
      %2619 = vmatprep.subr.bf16.mxu0 0
      %2620 = vmatpush1.bf16.msra.mxu0 %v2438
      %2621 = vmatprep.subr.bf16.mxu0 0
      %2622 = vmatpush1.bf16.msra.mxu0 %v2439
      %2623 = vmatprep.subr.bf16.mxu0 0
      %2624 = vmatpush1.bf16.msra.mxu0 %v2440
      %2625 = vmatprep.subr.bf16.mxu0 0
      %2626 = vmatpush1.bf16.msra.mxu0 %v2441
      %2627 = vmatprep.subr.bf16.mxu0 0
      %2628 = vmatpush1.bf16.msra.mxu0 %v2442
      %2629 = vmatprep.subr.bf16.mxu0 0
      %2630 = vmatpush1.bf16.msra.mxu0 %v2443
      %2631 = vmatprep.subr.bf16.mxu0 0
      %2632 = vmatpush1.bf16.msra.mxu0 %v2444
      %2633 = vmatprep.subr.bf16.mxu0 0
      %2634 = vmatpush1.bf16.msra.mxu0 %v2445
      %2635 = vmatprep.subr.bf16.mxu0 0
      %2636 = vmatpush1.bf16.msra.mxu0 %v2446
      %2637 = vmatprep.subr.bf16.mxu0 0
      %2638 = vmatpush1.bf16.msra.mxu0 %v2447
      %2639 = vmatprep.subr.bf16.mxu0 0
      %2640 = vmatpush1.bf16.msra.mxu0 %v2448
      %2641 = vmatprep.mubr.bf16.mxu0 %v2007
      %2642 = vmatmul.mubr.bf16.gmra.mrb[0].mxu0 %v2006
      %v2643 = vpop.f32.mrb[0].mxu0
      %v2644 = vadd.f32 %v2604, %v2643
      %v2645 = vpop.f32.mrb[0].mxu0
      %v2646 = vpop.f32.mrb[0].mxu0
      %v2647 = vpop.f32.mrb[0].mxu0
      %2648 = vdwg.mxu0
      %2649 = vmatprep.subr.bf16.mxu0 0
      %2650 = vmatpush1.bf16.msra.mxu0 %v2449
      %2651 = vmatprep.subr.bf16.mxu0 0
      %2652 = vmatpush1.bf16.msra.mxu0 %v2450
      %2653 = vmatprep.subr.bf16.mxu0 0
      %2654 = vmatpush1.bf16.msra.mxu0 %v2451
      %2655 = vmatprep.subr.bf16.mxu0 0
      %2656 = vmatpush1.bf16.msra.mxu0 %v2452
      %2657 = vmatprep.subr.bf16.mxu0 0
      %2658 = vmatpush1.bf16.msra.mxu0 %v2453
      %2659 = vmatprep.subr.bf16.mxu0 0
      %2660 = vmatpush1.bf16.msra.mxu0 %v2454
      %2661 = vmatprep.subr.bf16.mxu0 0
      %2662 = vmatpush1.bf16.msra.mxu0 %v2455
      %2663 = vmatprep.subr.bf16.mxu0 0
      %2664 = vmatpush1.bf16.msra.mxu0 %v2456
      %2665 = vmatprep.subr.bf16.mxu0 0
      %2666 = vmatpush1.bf16.msra.mxu0 %v2457
      %2667 = vmatprep.subr.bf16.mxu0 0
      %2668 = vmatpush1.bf16.msra.mxu0 %v2458
      %2669 = vmatprep.subr.bf16.mxu0 0
      %2670 = vmatpush1.bf16.msra.mxu0 %v2459
      %2671 = vmatprep.subr.bf16.mxu0 0
      %2672 = vmatpush1.bf16.msra.mxu0 %v2460
      %2673 = vmatprep.subr.bf16.mxu0 0
      %2674 = vmatpush1.bf16.msra.mxu0 %v2461
      %2675 = vmatprep.subr.bf16.mxu0 0
      %2676 = vmatpush1.bf16.msra.mxu0 %v2462
      %2677 = vmatprep.subr.bf16.mxu0 0
      %2678 = vmatpush1.bf16.msra.mxu0 %v2463
      %2679 = vmatprep.subr.bf16.mxu0 0
      %2680 = vmatpush1.bf16.msra.mxu0 %v2464
      %2681 = vmatprep.mubr.bf16.mxu0 %v2009
      %2682 = vmatmul.mubr.bf16.gmra.mrb[0].mxu0 %v2008
      %v2683 = vpop.f32.mrb[0].mxu0
      %v2684 = vadd.f32 %v2644, %v2683
      %v2685 = vpop.f32.mrb[0].mxu0
      %v2686 = vpop.f32.mrb[0].mxu0
      %v2687 = vpop.f32.mrb[0].mxu0
      %2688 = vdwg.mxu0
      %2689 = vst [vmem:[#allocation2] sm:$0x3] %v2684
      %vm2690 = vcmp.gt.f32.partialorder %v2684, 0.0
      %v2691 = vmul.f32 %v2684, 0.2
      %v2692 = vsel %vm2690, %v2684, %v2691
      %v2693 = vpack.c.bf16 %v2692, %v2692
      %v2694 = vld [vmem:[%s5] sm:$0xf]
      %v2695 = vld [vmem:[%s5 + $0x4] sm:$0xf]
      %v2696 = vld [vmem:[%s5 + $0x8] sm:$0xf]
      %v2697 = vld [vmem:[%s5 + $0xc] sm:$0xf]
      %v2698 = vld [vmem:[%s5 + $0x10] sm:$0xf]
      %v2699 = vld [vmem:[%s5 + $0x14] sm:$0xf]
      %v2700 = vld [vmem:[%s5 + $0x18] sm:$0xf]
      %v2701 = vld [vmem:[%s5 + $0x1c] sm:$0xf]
      %v2702 = vld [vmem:[%s5 + $0x20] sm:$0xf]
      %v2703 = vld [vmem:[%s5 + $0x24] sm:$0xf]
      %v2704 = vld [vmem:[%s5 + $0x28] sm:$0xf]
      %v2705 = vld [vmem:[%s5 + $0x2c] sm:$0xf]
      %v2706 = vld [vmem:[%s5 + $0x30] sm:$0xf]
      %v2707 = vld [vmem:[%s5 + $0x34] sm:$0xf]
      %v2708 = vld [vmem:[%s5 + $0x38] sm:$0xf]
      %v2709 = vld [vmem:[%s5 + $0x3c] sm:$0xf]
      %v2710 = vld [vmem:[%s6] sm:$0x1]
      %v2712 = vlaneseq
      %v2713 = vshrl.u32 %v2712, 7
      %v2714 = vsub.s32 0, %v2713
      %v2715 = vrot.slane %v2710, %v2714
      %v2733 = vunpack.c.l.b16 %v2694
      %v2734 = vunpack.c.l.b16 %v2695
      %v2735 = vunpack.c.l.b16 %v2696
      %v2736 = vunpack.c.l.b16 %v2697
      %v2737 = vunpack.c.l.b16 %v2698
      %v2738 = vunpack.c.l.b16 %v2699
      %v2739 = vunpack.c.l.b16 %v2700
      %v2740 = vunpack.c.l.b16 %v2701
      %v2741 = vunpack.c.l.b16 %v2702
      %v2742 = vunpack.c.l.b16 %v2703
      %v2743 = vunpack.c.l.b16 %v2704
      %v2744 = vunpack.c.l.b16 %v2705
      %v2745 = vunpack.c.l.b16 %v2706
      %v2746 = vunpack.c.l.b16 %v2707
      %v2747 = vunpack.c.l.b16 %v2708
      %v2748 = vunpack.c.l.b16 %v2709
      %v2749 = vpack.c.b16 %v2734, %v2733
      %v2750 = vpack.c.b16 %v2736, %v2735
      %v2751 = vpack.c.b16 %v2738, %v2737
      %v2752 = vpack.c.b16 %v2740, %v2739
      %v2753 = vpack.c.b16 %v2742, %v2741
      %v2754 = vpack.c.b16 %v2744, %v2743
      %v2755 = vpack.c.b16 %v2746, %v2745
      %v2756 = vpack.c.b16 %v2748, %v2747
      %2765 = vmatprep.subr.bf16.mxu0 0
      %2766 = vmatpush1.bf16.msra.mxu0 %v2749
      %2767 = vmatprep.subr.bf16.mxu0 0
      %2768 = vmatpush1.bf16.msra.mxu0 %v2750
      %2769 = vmatprep.subr.bf16.mxu0 0
      %2770 = vmatpush1.bf16.msra.mxu0 %v2751
      %2771 = vmatprep.subr.bf16.mxu0 0
      %2772 = vmatpush1.bf16.msra.mxu0 %v2752
      %2773 = vmatprep.subr.bf16.mxu0 0
      %2774 = vmatpush1.bf16.msra.mxu0 %v2753
      %2775 = vmatprep.subr.bf16.mxu0 0
      %2776 = vmatpush1.bf16.msra.mxu0 %v2754
      %2777 = vmatprep.subr.bf16.mxu0 0
      %2778 = vmatpush1.bf16.msra.mxu0 %v2755
      %2779 = vmatprep.subr.bf16.mxu0 0
      %2780 = vmatpush1.bf16.msra.mxu0 %v2756
      %2781 = vmatprep.subr.bf16.mxu0 0
      %2782 = vmatpush1.bf16.msra.mxu0 0
      %2783 = vmatprep.subr.bf16.mxu0 0
      %2784 = vmatpush1.bf16.msra.mxu0 0
      %2785 = vmatprep.subr.bf16.mxu0 0
      %2786 = vmatpush1.bf16.msra.mxu0 0
      %2787 = vmatprep.subr.bf16.mxu0 0
      %2788 = vmatpush1.bf16.msra.mxu0 0
      %2789 = vmatprep.subr.bf16.mxu0 0
      %2790 = vmatpush1.bf16.msra.mxu0 0
      %2791 = vmatprep.subr.bf16.mxu0 0
      %2792 = vmatpush1.bf16.msra.mxu0 0
      %2793 = vmatprep.subr.bf16.mxu0 0
      %2794 = vmatpush1.bf16.msra.mxu0 0
      %2795 = vmatprep.subr.bf16.mxu0 0
      %2796 = vmatpush1.bf16.msra.mxu0 0
      %2797 = vmatprep.mubr.bf16.mxu0 0
      %2798 = vmatmul.mubr.bf16.gmra.mrb[0].mxu0 %v2693
      %v2799 = vpop.f32.mrb[0].mxu0
      %v2800 = vadd.f32 %v2715, %v2799
      %v2801 = vpop.f32.mrb[0].mxu0
      %v2802 = vpop.f32.mrb[0].mxu0
      %v2803 = vpop.f32.mrb[0].mxu0
      %2804 = vdwg.mxu0
      %2805 = vst [vmem:[#allocation4] sm:$0x3] %v2800
      %vm2806 = vcmp.gt.f32.partialorder %v2800, 0.0
      %v2807 = vmul.f32 %v2800, 0.2
      %v2808 = vsel %vm2806, %v2800, %v2807
      %v2809 = vpack.c.bf16 %v2808, %v2808
      %v2810 = vld [vmem:[%s7] sm:$0xf]
      %v2811 = vld [vmem:[%s7 + $0x4] sm:$0xf]
      %v2812 = vld [vmem:[%s7 + $0x8] sm:$0xf]
      %v2813 = vld [vmem:[%s7 + $0xc] sm:$0xf]
      %v2814 = vld [vmem:[%s7 + $0x10] sm:$0xf]
      %v2815 = vld [vmem:[%s7 + $0x14] sm:$0xf]
      %v2816 = vld [vmem:[%s7 + $0x18] sm:$0xf]
      %v2817 = vld [vmem:[%s7 + $0x1c] sm:$0xf]
      %v2818 = vld [vmem:[%s7 + $0x20] sm:$0xf]
      %v2819 = vld [vmem:[%s7 + $0x24] sm:$0xf]
      %v2820 = vld [vmem:[%s7 + $0x28] sm:$0xf]
      %v2821 = vld [vmem:[%s7 + $0x2c] sm:$0xf]
      %v2822 = vld [vmem:[%s7 + $0x30] sm:$0xf]
      %v2823 = vld [vmem:[%s7 + $0x34] sm:$0xf]
      %v2824 = vld [vmem:[%s7 + $0x38] sm:$0xf]
      %v2825 = vld [vmem:[%s7 + $0x3c] sm:$0xf]
      %v2826 = vld [vmem:[%s8] sm:$0x1]
      %v2828 = vlaneseq
      %v2829 = vshrl.u32 %v2828, 7
      %v2830 = vsub.s32 0, %v2829
      %v2831 = vrot.slane %v2826, %v2830
      %v2849 = vunpack.c.l.b16 %v2810
      %v2850 = vunpack.c.l.b16 %v2811
      %v2851 = vunpack.c.l.b16 %v2812
      %v2852 = vunpack.c.l.b16 %v2813
      %v2853 = vunpack.c.l.b16 %v2814
      %v2854 = vunpack.c.l.b16 %v2815
      %v2855 = vunpack.c.l.b16 %v2816
      %v2856 = vunpack.c.l.b16 %v2817
      %v2857 = vunpack.c.l.b16 %v2818
      %v2858 = vunpack.c.l.b16 %v2819
      %v2859 = vunpack.c.l.b16 %v2820
      %v2860 = vunpack.c.l.b16 %v2821
      %v2861 = vunpack.c.l.b16 %v2822
      %v2862 = vunpack.c.l.b16 %v2823
      %v2863 = vunpack.c.l.b16 %v2824
      %v2864 = vunpack.c.l.b16 %v2825
      %v2865 = vpack.c.b16 %v2850, %v2849
      %v2866 = vpack.c.b16 %v2852, %v2851
      %v2867 = vpack.c.b16 %v2854, %v2853
      %v2868 = vpack.c.b16 %v2856, %v2855
      %v2869 = vpack.c.b16 %v2858, %v2857
      %v2870 = vpack.c.b16 %v2860, %v2859
      %v2871 = vpack.c.b16 %v2862, %v2861
      %v2872 = vpack.c.b16 %v2864, %v2863
      %2881 = vmatprep.subr.bf16.mxu0 0
      %2882 = vmatpush1.bf16.msra.mxu0 %v2865
      %2883 = vmatprep.subr.bf16.mxu0 0
      %2884 = vmatpush1.bf16.msra.mxu0 %v2866
      %2885 = vmatprep.subr.bf16.mxu0 0
      %2886 = vmatpush1.bf16.msra.mxu0 %v2867
      %2887 = vmatprep.subr.bf16.mxu0 0
      %2888 = vmatpush1.bf16.msra.mxu0 %v2868
      %2889 = vmatprep.subr.bf16.mxu0 0
      %2890 = vmatpush1.bf16.msra.mxu0 %v2869
      %2891 = vmatprep.subr.bf16.mxu0 0
      %2892 = vmatpush1.bf16.msra.mxu0 %v2870
      %2893 = vmatprep.subr.bf16.mxu0 0
      %2894 = vmatpush1.bf16.msra.mxu0 %v2871
      %2895 = vmatprep.subr.bf16.mxu0 0
      %2896 = vmatpush1.bf16.msra.mxu0 %v2872
      %2897 = vmatprep.subr.bf16.mxu0 0
      %2898 = vmatpush1.bf16.msra.mxu0 0
      %2899 = vmatprep.subr.bf16.mxu0 0
      %2900 = vmatpush1.bf16.msra.mxu0 0
      %2901 = vmatprep.subr.bf16.mxu0 0
      %2902 = vmatpush1.bf16.msra.mxu0 0
      %2903 = vmatprep.subr.bf16.mxu0 0
      %2904 = vmatpush1.bf16.msra.mxu0 0
      %2905 = vmatprep.subr.bf16.mxu0 0
      %2906 = vmatpush1.bf16.msra.mxu0 0
      %2907 = vmatprep.subr.bf16.mxu0 0
      %2908 = vmatpush1.bf16.msra.mxu0 0
      %2909 = vmatprep.subr.bf16.mxu0 0
      %2910 = vmatpush1.bf16.msra.mxu0 0
      %2911 = vmatprep.subr.bf16.mxu0 0
      %2912 = vmatpush1.bf16.msra.mxu0 0
      %2913 = vmatprep.mubr.bf16.mxu0 0
      %2914 = vmatmul.mubr.bf16.gmra.mrb[0].mxu0 %v2809
      %v2915 = vpop.f32.mrb[0].mxu0
      %v2916 = vadd.f32 %v2831, %v2915
      %v2917 = vpop.f32.mrb[0].mxu0
      %v2918 = vpop.f32.mrb[0].mxu0
      %v2919 = vpop.f32.mrb[0].mxu0
      %2920 = vdwg.mxu0
      %v2921 = vxor.u32 %v2916, 2147483648
      %v2922 = vmul.f32 %v2921, 1.442695
      %v2923 = vpow.pop %v2922
      %v2924 = vadd.f32 %v2923, 1.0
      %v2925 = vrcp.pop %v2924
      %v2926 = vmul.f32 1.0, %v2925
      %2927 = vst [vmem:[%s11] sm:$0x3] %v2926
    $region41: #{discriminator_forward.9} parent=1 // pred_fallthru
      _
    // Predicated region
    $region42: #{discriminator_forward.9} parent=1 // pred_check
      _
    $region43: #{discriminator_forward.9} parent=1 // pred_check_branch
      %2929 = sbr.rel (0) target = $region45
    $region44: #{discriminator_forward.9} parent=1 // pred_region
      %s2931 = ssub.s32 32, 32
      %2932 = vsyncadd [#allocation3], %s2931
      %s2934 = sshll.u32 [#allocation2], 4
      %s2935 = int_to_ptr.vmem [resolvable:$true] %s2934
      %2937 = dma.vmem_to_hbm [thread:$0]  %s2935, 32, %s9, [#allocation3]
    $region45: #{discriminator_forward.9} parent=1 // pred_fallthru
      _
    // Predicated region
    $region46: #{discriminator_forward.9} parent=1 // pred_check
      _
    $region47: #{discriminator_forward.9} parent=1 // pred_check_branch
      %2939 = sbr.rel (0) target = $region49
    $region48: #{discriminator_forward.9} parent=1 // pred_region
      %s2941 = ssub.s32 32, 32
      %2942 = vsyncadd [#allocation5], %s2941
      %s2944 = sshll.u32 [#allocation4], 4
      %s2945 = int_to_ptr.vmem [resolvable:$true] %s2944
      %2947 = dma.vmem_to_hbm [thread:$0]  %s2945, 32, %s10, [#allocation5]
    $region49: #{discriminator_forward.9} parent=1 // pred_fallthru
      _
    // Predicated region
    $region50: #{discriminator_forward.9} parent=1 // pred_check
      _
    $region51: #{discriminator_forward.9} parent=1 // pred_check_branch
      %2949 = sbr.rel (0) target = $region53
    $region52: #{discriminator_forward.9} parent=1 // pred_region
      _
    $region53: #{discriminator_forward.9} parent=1 // pred_fallthru
      _
    // Predicated region
    $region54: #{discriminator_forward.9} parent=1 // pred_check
      _
    $region55: #{discriminator_forward.9} parent=1 // pred_check_branch
      %2951 = sbr.rel (0) target = $region57
    $region56: #{discriminator_forward.9} parent=1 // pred_region
      %2952 = dma.done [#allocation3], 32
    $region57: #{discriminator_forward.9} parent=1 // pred_fallthru
      _
    // Predicated region
    $region58: #{discriminator_forward.9} parent=1 // pred_check
      _
    $region59: #{discriminator_forward.9} parent=1 // pred_check_branch
      %2954 = sbr.rel (0) target = $region61
    $region60: #{discriminator_forward.9} parent=1 // pred_region
      %2955 = dma.done [#allocation5], 32
    $region61: #{discriminator_forward.9} parent=1 // pred_fallthru
      _
    // Predicated region
    $region62: #{discriminator_forward.9} parent=1 // pred_check
      _
    $region63: #{discriminator_forward.9} parent=1 // pred_check_branch
      %2957 = sbr.rel (0) target = $region65
    $region64: #{discriminator_forward.9} parent=1 // pred_region
      _
    $region65: #{discriminator_forward.9} parent=1 // pred_fallthru
      _
    %2958 = vsyncpa [#allocation3], 1
    %2959 = vsyncpa [#allocation5], 1

</llo_original>
